<compile_context>
chip_gen: v5e
topology: v5e:2x2
jax: 0.10.0
libtpu: 0.0.40
codegen_flags: <defaults>
</compile_context>

<pallas_src>
import functools

import jax
import jax.numpy as jnp
from jax import lax
from jax.experimental import pallas as pl
from jax.experimental.pallas import tpu as pltpu


# ------------------------------- fused kernel ---------------------------------
def _se_bottleneck_kernel(x_ref, d_ref, sh1_ref, band_ref, sh2_ref,
                          pw1t_ref, wl2t_ref, o_ref, *, h, add):
    rows = x_ref.shape[0]          # Bt * H packed rows
    bt = rows // h
    ch = pw1t_ref.shape[0]
    mxu = d_ref.dtype              # bf16 MXU operands, f32 accumulation

    x = x_ref[...]                                        # (rows, W*c1) f32

    # cv1: 1x1 conv (BN scale folded into d columns) + shift + SiLU.
    y = jnp.dot(x.astype(mxu), d_ref[...], preferred_element_type=jnp.float32)
    y = y + sh1_ref[...]
    y = y * jax.nn.sigmoid(y)                             # (rows, W*c_)

    # cv2: 3x3 conv (pad=1).  Height taps = XLU sublane roll + per-image boundary
    # mask (no HxH shift matmuls); width taps + cin = banded MXU matmuls with the
    # BN scale folded into the band columns.
    row_h = lax.broadcasted_iota(jnp.int32, (rows, 1), 0) % h
    acc = jnp.dot(y.astype(mxu), band_ref[1],
                  preferred_element_type=jnp.float32)     # dy = 1 (no shift)
    y_dn = jnp.where(row_h != 0, pltpu.roll(y, shift=1, axis=0), 0.0)       # dy = 0
    acc = acc + jnp.dot(y_dn.astype(mxu), band_ref[0],
                        preferred_element_type=jnp.float32)
    y_up = jnp.where(row_h != h - 1, pltpu.roll(y, shift=rows - 1, axis=0), 0.0)  # dy = 2
    acc = acc + jnp.dot(y_up.astype(mxu), band_ref[2],
                        preferred_element_type=jnp.float32)
    y2 = acc + sh2_ref[...]
    x1 = y2 * jax.nn.sigmoid(y2)                          # (rows, W*c2), SiLU

    # SE gate entirely on VPU/XLU: per-image pooling (lane sums folded into pw1t),
    # ch = c1//ratio is tiny, so MXU matmuls here would be near-empty passes.
    pw1t = pw1t_ref[...]                                  # (ch, W*c2) f32
    wl2t = wl2t_ref[...]                                  # (ch, W*c2) f32
    for img in range(bt):                                 # static, small
        r0 = img * h
        x1b = x1[r0:r0 + h, :]                            # aligned static slice
        colsum = jnp.sum(x1b, axis=0, keepdims=True)      # (1, W*c2)
        gate_pre = None
        for j in range(ch):                               # static, ch == c1//ratio
            hid_j = jnp.maximum(
                jnp.sum(colsum * pw1t[j:j + 1, :], axis=1, keepdims=True), 0.0)
            term = hid_j * wl2t[j:j + 1, :]
            gate_pre = term if gate_pre is None else gate_pre + term
        gate = jax.nn.sigmoid(gate_pre)                   # (1, W*c2)
        out_b = x1b * gate
        if add:                                           # static: shortcut and c1==c2
            out_b = out_b + x[r0:r0 + h, :]
        o_ref[pl.ds(r0, h), :] = out_b.astype(o_ref.dtype)


# ----------------------------- raw parameter init -----------------------------
def init_params(key, c1, c2, e=0.5, ratio=16):
    c_ = int(c2 * e)
    ch = c1 // ratio
    ks = jax.random.split(key, 12)
    n = jax.random.normal
    return {
        # cv1: Conv2d(c1, c_, 1, bias=False) + BN(c_)
        "w_cv1": 0.1 * n(ks[0], (c_, c1, 1, 1), jnp.float32),
        "g_cv1": 1.0 + 0.1 * n(ks[1], (c_,), jnp.float32),
        "b_cv1": 0.1 * n(ks[2], (c_,), jnp.float32),
        "m_cv1": 0.1 * n(ks[3], (c_,), jnp.float32),
        "v_cv1": jnp.abs(1.0 + 0.1 * n(ks[4], (c_,), jnp.float32)),
        # cv2: Conv2d(c_, c2, 3, pad=1, bias=False) + BN(c2)
        "w_cv2": 0.1 * n(ks[5], (c2, c_, 3, 3), jnp.float32),
        "g_cv2": 1.0 + 0.1 * n(ks[6], (c2,), jnp.float32),
        "b_cv2": 0.1 * n(ks[7], (c2,), jnp.float32),
        "m_cv2": 0.1 * n(ks[8], (c2,), jnp.float32),
        "v_cv2": jnp.abs(1.0 + 0.1 * n(ks[9], (c2,), jnp.float32)),
        # l1: Linear(c1, c1//ratio, bias=False), l2: Linear(c1//ratio, c1, bias=False)
        "w_l1": 0.2 * n(ks[10], (ch, c1), jnp.float32),   # PyTorch (out, in)
        "w_l2": 0.2 * n(ks[11], (c1, ch), jnp.float32),
    }


# ------------- one-time weight preparation (hoisted off the fwd path) ----------
def prepare_params(p, h, w, eps=1e-5, mxu_dtype=jnp.bfloat16):
    """Fold BN, build lane-dense structured weights, pre-cast MXU operands."""
    c_, c1 = p["w_cv1"].shape[0], p["w_cv1"].shape[1]
    c2 = p["w_cv2"].shape[0]
    assert c1 == c2, "SE path of the reference module requires c1 == c2"

    s1 = p["g_cv1"] / jnp.sqrt(p["v_cv1"] + eps)
    sh1 = p["b_cv1"] - p["m_cv1"] * s1
    s2 = p["g_cv2"] / jnp.sqrt(p["v_cv2"] + eps)
    sh2 = p["b_cv2"] - p["m_cv2"] * s2

    # cv1 (1x1): block-diagonal over width; BN scale folded into the columns.
    w_pw = jnp.transpose(p["w_cv1"][:, :, 0, 0]) * s1[None, :]          # (c1, c_)
    d = jnp.kron(jnp.eye(w, dtype=jnp.float32), w_pw).astype(mxu_dtype)  # (W*c1, W*c_)

    # cv2 (3x3): one banded matrix per kernel row dy; width taps + cin folded in,
    # BN scale folded into the columns.  (Height taps handled by rolls in-kernel.)
    band = jnp.stack([
        sum(jnp.kron(jnp.eye(w, k=1 - dx, dtype=jnp.float32),
                     jnp.transpose(p["w_cv2"][:, :, dy, dx]) * s2[None, :])
            for dx in range(3))
        for dy in range(3)]).astype(mxu_dtype)                           # (3, W*c_, W*c2)

    return {
        "d": d,
        "sh1f": jnp.tile(sh1.reshape(1, c_), (1, w)),                    # (1, W*c_)
        "band": band,
        "sh2f": jnp.tile(sh2.reshape(1, c2), (1, w)),                    # (1, W*c2)
        # SE weights stay f32 (VPU path); avg-pool folded into pw1t, width
        # broadcast folded into wl2t.
        "pw1t": jnp.tile(p["w_l1"], (1, w)) / float(h * w),              # (ch, W*c2)
        "wl2t": jnp.tile(jnp.transpose(p["w_l2"]), (1, w)),              # (ch, W*c2)
    }


# -------------------------------- forward wrapper ------------------------------
def se_bottleneck_forward(x_nhwc, prep, shortcut=True, g=1, batch_tile=None):
    # TODO(synk): grouped 3x3 conv (g > 1) not implemented; module default g=1 only.
    assert g == 1
    b, h, w, c1 = x_nhwc.shape
    wc2 = prep["band"].shape[2]
    c2 = wc2 // w
    add = bool(shortcut and c1 == c2)

    # Pack several images per grid step (grow the MXU M dimension) while keeping
    # >= 2 grid slices when batch allows (v7x has 2 TensorCores per chip).
    if batch_tile is None:
        if b >= 2:
            batch_tile = max(1, b // 2)
            while b % batch_tile:
                batch_tile -= 1
        else:
            batch_tile = b
    assert b % batch_tile == 0
    nb = b // batch_tile
    rows = batch_tile * h
    assert h % 8 == 0 and (w * c1) % 128 == 0 and wc2 % 128 == 0, \
        "demo shapes must satisfy the (8,128) tiling constraint"

    # NHWC end-to-end: this reshape is a free view, no transpose anywhere.
    x_flat = x_nhwc.astype(jnp.float32).reshape(b * h, w * c1)

    # Explicit VMEM budget sized from the real buffers (2x for double buffering
    # plus headroom for in-kernel intermediates).
    wnames = ("d", "sh1f", "band", "sh2f", "pw1t", "wl2t")
    weight_bytes = sum(int(prep[k].size) * prep[k].dtype.itemsize for k in wnames)
    block_bytes = rows * (w * c1 + wc2) * 4
    vmem_limit = 2 * (weight_bytes + block_bytes) + (16 << 20)

    kern = functools.partial(_se_bottleneck_kernel, h=h, add=add)
    rep2 = lambda i: (0, 0)
    rep3 = lambda i: (0, 0, 0)
    out = pl.pallas_call(
        kern,
        out_shape=jax.ShapeDtypeStruct((b * h, wc2), jnp.float32),
        grid=(nb,),
        in_specs=[
            pl.BlockSpec((rows, w * c1), lambda i: (i, 0)),
            # Constant-index weight blocks (never re-fetched across the grid).
            pl.BlockSpec(prep["d"].shape, rep2),
            pl.BlockSpec(prep["sh1f"].shape, rep2),
            pl.BlockSpec(prep["band"].shape, rep3),
            pl.BlockSpec(prep["sh2f"].shape, rep2),
            pl.BlockSpec(prep["pw1t"].shape, rep2),
            pl.BlockSpec(prep["wl2t"].shape, rep2),
        ],
        out_specs=pl.BlockSpec((rows, wc2), lambda i: (i, 0)),
        compiler_params=pltpu.CompilerParams(
            dimension_semantics=("parallel",),
            vmem_limit_bytes=int(vmem_limit)),
    )(x_flat, prep["d"], prep["sh1f"], prep["band"], prep["sh2f"],
      prep["pw1t"], prep["wl2t"])

    return out.reshape(b, h, w, c2)                       # free view, still NHWC


# ------------------------------ pure-JAX reference -----------------------------
def reference_forward(x_nhwc, p, shortcut=True):
    """SEBottleneck forward (inference-mode BN), NHWC layout, f32 math."""
    eps = 1e-5

    def conv_bn_silu(xx, wc, g_, b_, m_, v_, pad):
        y = lax.conv_general_dilated(
            xx, wc, (1, 1), [(pad, pad), (pad, pad)],
            dimension_numbers=("NHWC", "OIHW", "NHWC"))
        scale = g_ / jnp.sqrt(v_ + eps)
        y = y * scale.reshape(1, 1, 1, -1) + (b_ - m_ * scale).reshape(1, 1, 1, -1)
        return y * jax.nn.sigmoid(y)

    y1 = conv_bn_silu(x_nhwc, p["w_cv1"], p["g_cv1"], p["b_cv1"],
                      p["m_cv1"], p["v_cv1"], 0)
    x1 = conv_bn_silu(y1, p["w_cv2"], p["g_cv2"], p["b_cv2"],
                      p["m_cv2"], p["v_cv2"], 1)
    y = jnp.mean(x1, axis=(1, 2))                         # (b, c2)
    y = jnp.maximum(y @ p["w_l1"].T, 0.0)
    y = jax.nn.sigmoid(y @ p["w_l2"].T)
    out = x1 * y[:, None, None, :]
    add = shortcut and x_nhwc.shape[-1] == x1.shape[-1]
    return x_nhwc + out if add else out


if __name__ == "__main__":
    # SEBottleneck(c1=32, c2=32, shortcut=True, g=1, e=0.5, ratio=16)
    c1 = c2 = 32
    B, H, W = 4, 16, 16

    key = jax.random.PRNGKey(0)
    kx, kp = jax.random.split(key)
    x = jax.random.normal(kx, (B, H, W, c1), jnp.float32)   # NHWC end-to-end
    params = init_params(kp, c1, c2, e=0.5, ratio=16)

    prep = prepare_params(params, H, W)                     # one-time weight prep
    fwd = jax.jit(functools.partial(se_bottleneck_forward, shortcut=True, g=1))

    out = jax.block_until_ready(fwd(x, prep))

    ref = reference_forward(x, params, shortcut=True)
    assert out.shape == ref.shape == (B, H, W, c2)
    # Tolerance loosened because the MXU operands are bf16 (f32 accumulation).
    max_err = float(jnp.max(jnp.abs(out - ref)))
    assert jnp.allclose(out, ref, rtol=5e-2, atol=5e-2), max_err

    print("KERNEL_OK")
</pallas_src>

<mosaic_0001>
module attributes {stable_mosaic.version = 11 : i64} {
  func.func @_se_bottleneck_kernel(%arg0: i32, %arg1: memref<32x512xf32, #tpu.memory_space<vmem>>, %arg2: memref<512x256xbf16, #tpu.memory_space<vmem>>, %arg3: memref<1x256xf32, #tpu.memory_space<vmem>>, %arg4: memref<3x256x512xbf16, #tpu.memory_space<vmem>>, %arg5: memref<1x512xf32, #tpu.memory_space<vmem>>, %arg6: memref<2x512xf32, #tpu.memory_space<vmem>>, %arg7: memref<2x512xf32, #tpu.memory_space<vmem>>, %arg8: memref<32x512xf32, #tpu.memory_space<vmem>>) attributes {dimension_semantics = [#tpu.dimension_semantics<parallel>], iteration_bounds = array<i64: 2>, scalar_prefetch = 0 : i64, scratch_operands = 0 : i64, tpu.core_type = #tpu.core_type<tc>, window_params = [{transform_indices = @transform_0, window_bounds = array<i64: 32, 512>}, {pipeline_mode = #tpu.pipeline_mode<synchronous>, transform_indices = @transform_1, window_bounds = array<i64: 512, 256>}, {pipeline_mode = #tpu.pipeline_mode<synchronous>, transform_indices = @transform_2, window_bounds = array<i64: 1, 256>}, {pipeline_mode = #tpu.pipeline_mode<synchronous>, transform_indices = @transform_3, window_bounds = array<i64: 3, 256, 512>}, {pipeline_mode = #tpu.pipeline_mode<synchronous>, transform_indices = @transform_4, window_bounds = array<i64: 1, 512>}, {pipeline_mode = #tpu.pipeline_mode<synchronous>, transform_indices = @transform_5, window_bounds = array<i64: 2, 512>}, {pipeline_mode = #tpu.pipeline_mode<synchronous>, transform_indices = @transform_6, window_bounds = array<i64: 2, 512>}, {transform_indices = @transform_7, window_bounds = array<i64: 32, 512>}]} {
    %c0 = arith.constant 0 : index
    %c0_0 = arith.constant 0 : index
    %0 = vector.load %arg1[%c0, %c0_0] : memref<32x512xf32, #tpu.memory_space<vmem>>, vector<32x512xf32>
    %1 = arith.truncf %0 : vector<32x512xf32> to vector<32x512xbf16>
    %c0_1 = arith.constant 0 : index
    %c0_2 = arith.constant 0 : index
    %2 = vector.load %arg2[%c0_1, %c0_2] : memref<512x256xbf16, #tpu.memory_space<vmem>>, vector<512x256xbf16>
    %cst = arith.constant dense<0.000000e+00> : vector<32x256xf32>
    %3 = tpu.matmul %1, %2, %cst {dimension_numbers = #tpu.dot_dimension_numbers<[1], [0], [0], [1], [0, 0, 1, 1], [], []>} : vector<32x512xbf16>, vector<512x256xbf16>, vector<32x256xf32> -> vector<32x256xf32>
    %c0_3 = arith.constant 0 : index
    %c0_4 = arith.constant 0 : index
    %4 = vector.load %arg3[%c0_3, %c0_4] : memref<1x256xf32, #tpu.memory_space<vmem>>, vector<1x256xf32>
    %5 = vector.broadcast %4 : vector<1x256xf32> to vector<32x256xf32>
    %6 = arith.addf %3, %5 : vector<32x256xf32>
    %7 = arith.negf %6 : vector<32x256xf32>
    %8 = math.exp %7 : vector<32x256xf32>
    %cst_5 = arith.constant 1.000000e+00 : f32
    %9 = vector.broadcast %cst_5 : f32 to vector<32x256xf32>
    %10 = arith.addf %9, %8 : vector<32x256xf32>
    %11 = arith.divf %9, %10 : vector<32x256xf32>
    %12 = arith.mulf %6, %11 : vector<32x256xf32>
    %13 = tpu.iota {dimensions = array<i32: 0>} : vector<32x1xi32>
    %c16_i32 = arith.constant 16 : i32
    %c0_i32 = arith.constant 0 : i32
    %14 = arith.cmpi eq, %c16_i32, %c0_i32 : i32
    %c1_i32 = arith.constant 1 : i32
    %15 = arith.select %14, %c1_i32, %c16_i32 : i32
    %16 = vector.broadcast %15 : i32 to vector<32x1xi32>
    %17 = arith.remsi %13, %16 : vector<32x1xi32>
    %c0_i32_6 = arith.constant 0 : i32
    %18 = vector.broadcast %c0_i32_6 : i32 to vector<32x1xi32>
    %19 = arith.cmpi ne, %17, %18 : vector<32x1xi32>
    %c0_i32_7 = arith.constant 0 : i32
    %20 = vector.broadcast %c0_i32_7 : i32 to vector<32x1xi32>
    %21 = arith.cmpi slt, %17, %20 : vector<32x1xi32>
    %c0_i32_8 = arith.constant 0 : i32
    %22 = arith.cmpi slt, %15, %c0_i32_8 : i32
    %23 = vector.broadcast %22 : i1 to vector<32x1xi1>
    %24 = vector.broadcast %23 : vector<32x1xi1> to vector<32x1xi1>
    %25 = arith.xori %21, %24 : vector<32x1xi1>
    %26 = arith.andi %25, %19 : vector<32x1xi1>
    %27 = vector.broadcast %15 : i32 to vector<32x1xi32>
    %28 = arith.addi %17, %27 : vector<32x1xi32>
    %29 = arith.select %26, %28, %17 : vector<32x1xi1>, vector<32x1xi32>
    %30 = arith.truncf %12 : vector<32x256xf32> to vector<32x256xbf16>
    %c1 = arith.constant 1 : index
    %c0_9 = arith.constant 0 : index
    %c0_10 = arith.constant 0 : index
    %31 = vector.load %arg4[%c1, %c0_9, %c0_10] : memref<3x256x512xbf16, #tpu.memory_space<vmem>>, vector<1x256x512xbf16>
    %32 = vector.shape_cast %31 : vector<1x256x512xbf16> to vector<256x512xbf16>
    %cst_11 = arith.constant dense<0.000000e+00> : vector<32x512xf32>
    %33 = tpu.matmul %30, %32, %cst_11 {dimension_numbers = #tpu.dot_dimension_numbers<[1], [0], [0], [1], [0, 0, 1, 1], [], []>} : vector<32x256xbf16>, vector<256x512xbf16>, vector<32x512xf32> -> vector<32x512xf32>
    %c0_i32_12 = arith.constant 0 : i32
    %34 = vector.broadcast %c0_i32_12 : i32 to vector<32x1xi32>
    %35 = arith.cmpi ne, %29, %34 : vector<32x1xi32>
    %c1_i32_13 = arith.constant 1 : i32
    %36 = tpu.dynamic_rotate %12 by %c1_i32_13 dim 0 : vector<32x256xf32>, i32 -> vector<32x256xf32>
    %cst_14 = arith.constant 0.000000e+00 : f32
    %37 = vector.shape_cast %35 : vector<32x1xi1> to vector<32x1xi1>
    %38 = vector.broadcast %37 : vector<32x1xi1> to vector<32x256xi1>
    %39 = vector.broadcast %cst_14 : f32 to vector<32x256xf32>
    %40 = arith.select %38, %36, %39 : vector<32x256xi1>, vector<32x256xf32>
    %41 = arith.truncf %40 : vector<32x256xf32> to vector<32x256xbf16>
    %c0_15 = arith.constant 0 : index
    %c0_16 = arith.constant 0 : index
    %c0_17 = arith.constant 0 : index
    %42 = vector.load %arg4[%c0_15, %c0_16, %c0_17] : memref<3x256x512xbf16, #tpu.memory_space<vmem>>, vector<1x256x512xbf16>
    %43 = vector.shape_cast %42 : vector<1x256x512xbf16> to vector<256x512xbf16>
    %cst_18 = arith.constant dense<0.000000e+00> : vector<32x512xf32>
    %44 = tpu.matmul %41, %43, %cst_18 {dimension_numbers = #tpu.dot_dimension_numbers<[1], [0], [0], [1], [0, 0, 1, 1], [], []>} : vector<32x256xbf16>, vector<256x512xbf16>, vector<32x512xf32> -> vector<32x512xf32>
    %45 = arith.addf %33, %44 : vector<32x512xf32>
    %c15_i32 = arith.constant 15 : i32
    %46 = vector.broadcast %c15_i32 : i32 to vector<32x1xi32>
    %47 = arith.cmpi ne, %29, %46 : vector<32x1xi32>
    %c31_i32 = arith.constant 31 : i32
    %48 = tpu.dynamic_rotate %12 by %c31_i32 dim 0 : vector<32x256xf32>, i32 -> vector<32x256xf32>
    %cst_19 = arith.constant 0.000000e+00 : f32
    %49 = vector.shape_cast %47 : vector<32x1xi1> to vector<32x1xi1>
    %50 = vector.broadcast %49 : vector<32x1xi1> to vector<32x256xi1>
    %51 = vector.broadcast %cst_19 : f32 to vector<32x256xf32>
    %52 = arith.select %50, %48, %51 : vector<32x256xi1>, vector<32x256xf32>
    %53 = arith.truncf %52 : vector<32x256xf32> to vector<32x256xbf16>
    %c2 = arith.constant 2 : index
    %c0_20 = arith.constant 0 : index
    %c0_21 = arith.constant 0 : index
    %54 = vector.load %arg4[%c2, %c0_20, %c0_21] : memref<3x256x512xbf16, #tpu.memory_space<vmem>>, vector<1x256x512xbf16>
    %55 = vector.shape_cast %54 : vector<1x256x512xbf16> to vector<256x512xbf16>
    %cst_22 = arith.constant dense<0.000000e+00> : vector<32x512xf32>
    %56 = tpu.matmul %53, %55, %cst_22 {dimension_numbers = #tpu.dot_dimension_numbers<[1], [0], [0], [1], [0, 0, 1, 1], [], []>} : vector<32x256xbf16>, vector<256x512xbf16>, vector<32x512xf32> -> vector<32x512xf32>
    %57 = arith.addf %45, %56 : vector<32x512xf32>
    %c0_23 = arith.constant 0 : index
    %c0_24 = arith.constant 0 : index
    %58 = vector.load %arg5[%c0_23, %c0_24] : memref<1x512xf32, #tpu.memory_space<vmem>>, vector<1x512xf32>
    %59 = vector.broadcast %58 : vector<1x512xf32> to vector<32x512xf32>
    %60 = arith.addf %57, %59 : vector<32x512xf32>
    %61 = arith.negf %60 : vector<32x512xf32>
    %62 = math.exp %61 : vector<32x512xf32>
    %cst_25 = arith.constant 1.000000e+00 : f32
    %63 = vector.broadcast %cst_25 : f32 to vector<32x512xf32>
    %64 = arith.addf %63, %62 : vector<32x512xf32>
    %65 = arith.divf %63, %64 : vector<32x512xf32>
    %66 = arith.mulf %60, %65 : vector<32x512xf32>
    %c0_26 = arith.constant 0 : index
    %c0_27 = arith.constant 0 : index
    %67 = vector.load %arg6[%c0_26, %c0_27] : memref<2x512xf32, #tpu.memory_space<vmem>>, vector<2x512xf32>
    %c0_28 = arith.constant 0 : index
    %c0_29 = arith.constant 0 : index
    %68 = vector.load %arg7[%c0_28, %c0_29] : memref<2x512xf32, #tpu.memory_space<vmem>>, vector<2x512xf32>
    %69 = vector.extract_strided_slice %66 {offsets = [0, 0], sizes = [16, 512], strides = [1, 1]} : vector<32x512xf32> to vector<16x512xf32>
    %cst_30 = arith.constant dense<0.000000e+00> : vector<512xf32>
    %70 = vector.multi_reduction <add>, %69, %cst_30 [0] : vector<16x512xf32> to vector<512xf32>
    %71 = vector.shape_cast %70 : vector<512xf32> to vector<1x512xf32>
    %72 = vector.extract_strided_slice %67 {offsets = [0, 0], sizes = [1, 512], strides = [1, 1]} : vector<2x512xf32> to vector<1x512xf32>
    %73 = arith.mulf %71, %72 : vector<1x512xf32>
    %cst_31 = arith.constant dense<0.000000e+00> : vector<1xf32>
    %74 = vector.multi_reduction <add>, %73, %cst_31 [1] : vector<1x512xf32> to vector<1xf32>
    %75 = vector.shape_cast %74 : vector<1xf32> to vector<1x1xf32>
    %cst_32 = arith.constant 0.000000e+00 : f32
    %76 = vector.broadcast %cst_32 : f32 to vector<1x1xf32>
    %77 = arith.maximumf %75, %76 : vector<1x1xf32>
    %78 = vector.extract_strided_slice %68 {offsets = [0, 0], sizes = [1, 512], strides = [1, 1]} : vector<2x512xf32> to vector<1x512xf32>
    %79 = vector.broadcast %77 : vector<1x1xf32> to vector<1x512xf32>
    %80 = arith.mulf %79, %78 : vector<1x512xf32>
    %81 = vector.extract_strided_slice %67 {offsets = [1, 0], sizes = [1, 512], strides = [1, 1]} : vector<2x512xf32> to vector<1x512xf32>
    %82 = arith.mulf %71, %81 : vector<1x512xf32>
    %cst_33 = arith.constant dense<0.000000e+00> : vector<1xf32>
    %83 = vector.multi_reduction <add>, %82, %cst_33 [1] : vector<1x512xf32> to vector<1xf32>
    %84 = vector.shape_cast %83 : vector<1xf32> to vector<1x1xf32>
    %cst_34 = arith.constant 0.000000e+00 : f32
    %85 = vector.broadcast %cst_34 : f32 to vector<1x1xf32>
    %86 = arith.maximumf %84, %85 : vector<1x1xf32>
    %87 = vector.extract_strided_slice %68 {offsets = [1, 0], sizes = [1, 512], strides = [1, 1]} : vector<2x512xf32> to vector<1x512xf32>
    %88 = vector.broadcast %86 : vector<1x1xf32> to vector<1x512xf32>
    %89 = arith.mulf %88, %87 : vector<1x512xf32>
    %90 = arith.addf %80, %89 : vector<1x512xf32>
    %91 = arith.negf %90 : vector<1x512xf32>
    %92 = math.exp %91 : vector<1x512xf32>
    %cst_35 = arith.constant 1.000000e+00 : f32
    %93 = vector.broadcast %cst_35 : f32 to vector<1x512xf32>
    %94 = arith.addf %93, %92 : vector<1x512xf32>
    %95 = arith.divf %93, %94 : vector<1x512xf32>
    %96 = vector.broadcast %95 : vector<1x512xf32> to vector<16x512xf32>
    %97 = arith.mulf %69, %96 : vector<16x512xf32>
    %98 = vector.extract_strided_slice %0 {offsets = [0, 0], sizes = [16, 512], strides = [1, 1]} : vector<32x512xf32> to vector<16x512xf32>
    %99 = arith.addf %97, %98 : vector<16x512xf32>
    %c0_36 = arith.constant 0 : index
    %c0_37 = arith.constant 0 : index
    %100 = vector.load %arg8[%c0_36, %c0_37] : memref<32x512xf32, #tpu.memory_space<vmem>>, vector<16x512xf32>
    tpu.vector_store %arg8[%c0_36, %c0_37], %99 {strides = array<i32>} : memref<32x512xf32, #tpu.memory_space<vmem>>, vector<16x512xf32>,
    %101 = vector.extract_strided_slice %66 {offsets = [16, 0], sizes = [16, 512], strides = [1, 1]} : vector<32x512xf32> to vector<16x512xf32>
    %cst_38 = arith.constant dense<0.000000e+00> : vector<512xf32>
    %102 = vector.multi_reduction <add>, %101, %cst_38 [0] : vector<16x512xf32> to vector<512xf32>
    %103 = vector.shape_cast %102 : vector<512xf32> to vector<1x512xf32>
    %104 = vector.extract_strided_slice %67 {offsets = [0, 0], sizes = [1, 512], strides = [1, 1]} : vector<2x512xf32> to vector<1x512xf32>
    %105 = arith.mulf %103, %104 : vector<1x512xf32>
    %cst_39 = arith.constant dense<0.000000e+00> : vector<1xf32>
    %106 = vector.multi_reduction <add>, %105, %cst_39 [1] : vector<1x512xf32> to vector<1xf32>
    %107 = vector.shape_cast %106 : vector<1xf32> to vector<1x1xf32>
    %cst_40 = arith.constant 0.000000e+00 : f32
    %108 = vector.broadcast %cst_40 : f32 to vector<1x1xf32>
    %109 = arith.maximumf %107, %108 : vector<1x1xf32>
    %110 = vector.extract_strided_slice %68 {offsets = [0, 0], sizes = [1, 512], strides = [1, 1]} : vector<2x512xf32> to vector<1x512xf32>
    %111 = vector.broadcast %109 : vector<1x1xf32> to vector<1x512xf32>
    %112 = arith.mulf %111, %110 : vector<1x512xf32>
    %113 = vector.extract_strided_slice %67 {offsets = [1, 0], sizes = [1, 512], strides = [1, 1]} : vector<2x512xf32> to vector<1x512xf32>
    %114 = arith.mulf %103, %113 : vector<1x512xf32>
    %cst_41 = arith.constant dense<0.000000e+00> : vector<1xf32>
    %115 = vector.multi_reduction <add>, %114, %cst_41 [1] : vector<1x512xf32> to vector<1xf32>
    %116 = vector.shape_cast %115 : vector<1xf32> to vector<1x1xf32>
    %cst_42 = arith.constant 0.000000e+00 : f32
    %117 = vector.broadcast %cst_42 : f32 to vector<1x1xf32>
    %118 = arith.maximumf %116, %117 : vector<1x1xf32>
    %119 = vector.extract_strided_slice %68 {offsets = [1, 0], sizes = [1, 512], strides = [1, 1]} : vector<2x512xf32> to vector<1x512xf32>
    %120 = vector.broadcast %118 : vector<1x1xf32> to vector<1x512xf32>
    %121 = arith.mulf %120, %119 : vector<1x512xf32>
    %122 = arith.addf %112, %121 : vector<1x512xf32>
    %123 = arith.negf %122 : vector<1x512xf32>
    %124 = math.exp %123 : vector<1x512xf32>
    %cst_43 = arith.constant 1.000000e+00 : f32
    %125 = vector.broadcast %cst_43 : f32 to vector<1x512xf32>
    %126 = arith.addf %125, %124 : vector<1x512xf32>
    %127 = arith.divf %125, %126 : vector<1x512xf32>
    %128 = vector.broadcast %127 : vector<1x512xf32> to vector<16x512xf32>
    %129 = arith.mulf %101, %128 : vector<16x512xf32>
    %130 = vector.extract_strided_slice %0 {offsets = [16, 0], sizes = [16, 512], strides = [1, 1]} : vector<32x512xf32> to vector<16x512xf32>
    %131 = arith.addf %129, %130 : vector<16x512xf32>
    %c16 = arith.constant 16 : index
    %c0_44 = arith.constant 0 : index
    %132 = vector.load %arg8[%c16, %c0_44] : memref<32x512xf32, #tpu.memory_space<vmem>>, vector<16x512xf32>
    tpu.vector_store %arg8[%c16, %c0_44], %131 {strides = array<i32>} : memref<32x512xf32, #tpu.memory_space<vmem>>, vector<16x512xf32>,
    return
  }
  func.func @transform_0(%arg0: i32) -> (i32, i32) {
    %c0_i32 = arith.constant 0 : i32
    %c0_i32_0 = arith.constant 0 : i32
    return %arg0, %c0_i32 : i32, i32
  }
  func.func @transform_1(%arg0: i32) -> (i32, i32) {
    %c0_i32 = arith.constant 0 : i32
    %c0_i32_0 = arith.constant 0 : i32
    %c0_i32_1 = arith.constant 0 : i32
    return %c0_i32, %c0_i32_0 : i32, i32
  }
  func.func @transform_2(%arg0: i32) -> (i32, i32) {
    %c0_i32 = arith.constant 0 : i32
    %c0_i32_0 = arith.constant 0 : i32
    %c0_i32_1 = arith.constant 0 : i32
    return %c0_i32, %c0_i32_0 : i32, i32
  }
  func.func @transform_3(%arg0: i32) -> (i32, i32, i32) {
    %c0_i32 = arith.constant 0 : i32
    %c0_i32_0 = arith.constant 0 : i32
    %c0_i32_1 = arith.constant 0 : i32
    %c0_i32_2 = arith.constant 0 : i32
    return %c0_i32, %c0_i32_0, %c0_i32_1 : i32, i32, i32
  }
  func.func @transform_4(%arg0: i32) -> (i32, i32) {
    %c0_i32 = arith.constant 0 : i32
    %c0_i32_0 = arith.constant 0 : i32
    %c0_i32_1 = arith.constant 0 : i32
    return %c0_i32, %c0_i32_0 : i32, i32
  }
  func.func @transform_5(%arg0: i32) -> (i32, i32) {
    %c0_i32 = arith.constant 0 : i32
    %c0_i32_0 = arith.constant 0 : i32
    %c0_i32_1 = arith.constant 0 : i32
    return %c0_i32, %c0_i32_0 : i32, i32
  }
  func.func @transform_6(%arg0: i32) -> (i32, i32) {
    %c0_i32 = arith.constant 0 : i32
    %c0_i32_0 = arith.constant 0 : i32
    %c0_i32_1 = arith.constant 0 : i32
    return %c0_i32, %c0_i32_0 : i32, i32
  }
  func.func @transform_7(%arg0: i32) -> (i32, i32) {
    %c0_i32 = arith.constant 0 : i32
    %c0_i32_0 = arith.constant 0 : i32
    return %arg0, %c0_i32 : i32, i32
  }
}

</mosaic_0001>

<llo_original>
// kernel: se_bottleneck_forward.1
$region0: #{se_bottleneck_forward.1}
  #allocation0 [shape = 'u32[]', space=smem, size = 0x4, offset = 0x4, fixed_abs, tag = 'smem constant byte address 0x4 - core index']
  #allocation1 [shape = 'u32[72,128]{1,0:T(1,128)}', space=vmem, size = 0x9000, scoped, tag = 'internal scratch']
  %s0 = inlined_call_operand.vmem [shape: f32[64,512], index: 0, kind: input, shape index: {}]
  %s1 = inlined_call_operand.vmem [shape: bf16[512,256], index: 1, kind: input, shape index: {}]
  %s2 = inlined_call_operand.vmem [shape: f32[1,256], index: 2, kind: input, shape index: {}]
  %s3 = inlined_call_operand.hbm [shape: bf16[3,256,512], index: 3, kind: input, shape index: {}]
  %s4 = inlined_call_operand.vmem [shape: f32[1,512], index: 4, kind: input, shape index: {}]
  %s5 = inlined_call_operand.vmem [shape: f32[2,512], index: 5, kind: input, shape index: {}]
  %s6 = inlined_call_operand.vmem [shape: f32[2,512], index: 6, kind: input, shape index: {}]
  %s7 = inlined_call_operand.vmem [shape: f32[64,512], index: 7, kind: output, shape index: {}]
  %s8 = sld [smem:[#allocation0]]
  $region65: #{se_bottleneck_forward.1} parent=0
    _
  %s10 = ssub.s32 1, %s8
  %s11 = scalar_select 0, %s10, %s8
  $region1: #{se_bottleneck_forward.1} parent=0
    #allocation2 [shape = 'u8[786432]{0}', space=vmem, size = 0xc0000, scoped, tag = 'input window, operand 3, single buffered']
    #allocation3 [shape = 's32[2]{0}', space=sflag, size = 0x8, scoped, tag = 'scoped memory for se_bottleneck_forward.1']
    %12 = vsyncpa [#allocation3], 0
    loop: start=0, step=1, limit=4
    $region2: #{se_bottleneck_forward.1} parent=1 // loop_pre_header
      _
    $region3: #{se_bottleneck_forward.1} parent=1 // loop_header
      %s14 = sphi 0, %s18
      %p15 = scmp.ge.s32.totalorder %s14, 4
      %s24 = sphi 0, %s26
      %s27 = sphi 0, %s24
      %s28 = sphi 0, %s27
      %s44 = sphi 0, %s28
      %s48 = sphi 0, %s48
      %s50 = sphi 0, %s48
      %s51 = sphi 0, %s50
      %s65 = sphi 0, %s51
      %s69 = sphi 0, %s69
      %s71 = sphi 0, %s69
      %s72 = sphi 0, %s71
      %s86 = sphi 0, %s72
      %s90 = sphi 0, %s90
      %s92 = sphi 0, %s90
      %s93 = sphi 0, %s92
      %s107 = sphi 0, %s93
      %s111 = sphi 0, %s111
      %s113 = sphi 0, %s111
      %s114 = sphi 0, %s113
      %s128 = sphi 0, %s114
      %s132 = sphi 0, %s132
      %s134 = sphi 0, %s132
      %s135 = sphi 0, %s134
      %s149 = sphi 0, %s135
      %s153 = sphi 0, %s153
      %s155 = sphi 0, %s153
      %s156 = sphi 0, %s155
      %s170 = sphi 0, %s156
      %s176 = sphi 0, %s178
      %s179 = sphi 0, %s176
      %s180 = sphi 0, %s179
      %s196 = sphi 0, %s180
    $region4: #{se_bottleneck_forward.1} parent=1 // loop_header_branch
      %17 = sbr.rel (%p15) target = $region8
    $region5: #{se_bottleneck_forward.1} parent=1 // loop_body
      %s19 = ssub.s32 %s14, 1
      %s20 = ssub.s32 %s14, 2
      %s21 = sadd.s32 %s14, 1
      %s22 = ssub.s32 %s14, %s21
      %p23 = scmp.eq.s32.totalorder %s22, 0
      %s25 = sadd.s32 %s24, 1
      %s26 = scalar_select %p23, %s24, %s25
      %p29 = pneg %p23
      %p30 = scmp.eq.s32.totalorder %s14, 1
      %p31 = por %p29, %p30
      %p32 = scmp.ne.s32.totalorder %s24, %s27
      %p33 = scmp.eq.s32.totalorder %s14, 0
      %p34 = por %p32, %p33
      %p35 = scmp.ne.s32.totalorder %s24, %s27
      %p36 = scmp.eq.s32.totalorder %s19, 1
      %p37 = por %p35, %p36
      %p38 = scmp.ne.s32.totalorder %s27, %s28
      %p39 = scmp.eq.s32.totalorder %s19, 0
      %p40 = por %p38, %p39
      %p41 = scmp.ne.s32.totalorder %s27, %s28
      %p42 = scmp.eq.s32.totalorder %s20, 1
      %p43 = por %p41, %p42
      %p45 = scmp.ne.s32.totalorder %s28, %s44
      %p46 = scmp.eq.s32.totalorder %s20, 0
      %p47 = por %p45, %p46
      %s49 = sadd.s32 %s48, 1
      %p52 = scmp.eq.s32.totalorder %s14, 1
      %p53 = scmp.ne.s32.totalorder %s48, %s50
      %p54 = scmp.eq.s32.totalorder %s14, 0
      %p55 = por %p53, %p54
      %p56 = scmp.ne.s32.totalorder %s48, %s50
      %p57 = scmp.eq.s32.totalorder %s19, 1
      %p58 = por %p56, %p57
      %p59 = scmp.ne.s32.totalorder %s50, %s51
      %p60 = scmp.eq.s32.totalorder %s19, 0
      %p61 = por %p59, %p60
      %p62 = scmp.ne.s32.totalorder %s50, %s51
      %p63 = scmp.eq.s32.totalorder %s20, 1
      %p64 = por %p62, %p63
      %p66 = scmp.ne.s32.totalorder %s51, %s65
      %p67 = scmp.eq.s32.totalorder %s20, 0
      %p68 = por %p66, %p67
      %s70 = sadd.s32 %s69, 1
      %p73 = scmp.eq.s32.totalorder %s14, 1
      %p74 = scmp.ne.s32.totalorder %s69, %s71
      %p75 = scmp.eq.s32.totalorder %s14, 0
      %p76 = por %p74, %p75
      %p77 = scmp.ne.s32.totalorder %s69, %s71
      %p78 = scmp.eq.s32.totalorder %s19, 1
      %p79 = por %p77, %p78
      %p80 = scmp.ne.s32.totalorder %s71, %s72
      %p81 = scmp.eq.s32.totalorder %s19, 0
      %p82 = por %p80, %p81
      %p83 = scmp.ne.s32.totalorder %s71, %s72
      %p84 = scmp.eq.s32.totalorder %s20, 1
      %p85 = por %p83, %p84
      %p87 = scmp.ne.s32.totalorder %s72, %s86
      %p88 = scmp.eq.s32.totalorder %s20, 0
      %p89 = por %p87, %p88
      %s91 = sadd.s32 %s90, 1
      %p94 = scmp.eq.s32.totalorder %s14, 1
      %p95 = scmp.ne.s32.totalorder %s90, %s92
      %p96 = scmp.eq.s32.totalorder %s14, 0
      %p97 = por %p95, %p96
      %p98 = scmp.ne.s32.totalorder %s90, %s92
      %p99 = scmp.eq.s32.totalorder %s19, 1
      %p100 = por %p98, %p99
      %p101 = scmp.ne.s32.totalorder %s92, %s93
      %p102 = scmp.eq.s32.totalorder %s19, 0
      %p103 = por %p101, %p102
      %p104 = scmp.ne.s32.totalorder %s92, %s93
      %p105 = scmp.eq.s32.totalorder %s20, 1
      %p106 = por %p104, %p105
      %p108 = scmp.ne.s32.totalorder %s93, %s107
      %p109 = scmp.eq.s32.totalorder %s20, 0
      %p110 = por %p108, %p109
      %s112 = sadd.s32 %s111, 1
      %p115 = scmp.eq.s32.totalorder %s14, 1
      %p116 = scmp.ne.s32.totalorder %s111, %s113
      %p117 = scmp.eq.s32.totalorder %s14, 0
      %p118 = por %p116, %p117
      %p119 = scmp.ne.s32.totalorder %s111, %s113
      %p120 = scmp.eq.s32.totalorder %s19, 1
      %p121 = por %p119, %p120
      %p122 = scmp.ne.s32.totalorder %s113, %s114
      %p123 = scmp.eq.s32.totalorder %s19, 0
      %p124 = por %p122, %p123
      %p125 = scmp.ne.s32.totalorder %s113, %s114
      %p126 = scmp.eq.s32.totalorder %s20, 1
      %p127 = por %p125, %p126
      %p129 = scmp.ne.s32.totalorder %s114, %s128
      %p130 = scmp.eq.s32.totalorder %s20, 0
      %p131 = por %p129, %p130
      %s133 = sadd.s32 %s132, 1
      %p136 = scmp.eq.s32.totalorder %s14, 1
      %p137 = scmp.ne.s32.totalorder %s132, %s134
      %p138 = scmp.eq.s32.totalorder %s14, 0
      %p139 = por %p137, %p138
      %p140 = scmp.ne.s32.totalorder %s132, %s134
      %p141 = scmp.eq.s32.totalorder %s19, 1
      %p142 = por %p140, %p141
      %p143 = scmp.ne.s32.totalorder %s134, %s135
      %p144 = scmp.eq.s32.totalorder %s19, 0
      %p145 = por %p143, %p144
      %p146 = scmp.ne.s32.totalorder %s134, %s135
      %p147 = scmp.eq.s32.totalorder %s20, 1
      %p148 = por %p146, %p147
      %p150 = scmp.ne.s32.totalorder %s135, %s149
      %p151 = scmp.eq.s32.totalorder %s20, 0
      %p152 = por %p150, %p151
      %s154 = sadd.s32 %s153, 1
      %p157 = scmp.eq.s32.totalorder %s14, 1
      %p158 = scmp.ne.s32.totalorder %s153, %s155
      %p159 = scmp.eq.s32.totalorder %s14, 0
      %p160 = por %p158, %p159
      %p161 = scmp.ne.s32.totalorder %s153, %s155
      %p162 = scmp.eq.s32.totalorder %s19, 1
      %p163 = por %p161, %p162
      %p164 = scmp.ne.s32.totalorder %s155, %s156
      %p165 = scmp.eq.s32.totalorder %s19, 0
      %p166 = por %p164, %p165
      %p167 = scmp.ne.s32.totalorder %s155, %s156
      %p168 = scmp.eq.s32.totalorder %s20, 1
      %p169 = por %p167, %p168
      %p171 = scmp.ne.s32.totalorder %s156, %s170
      %p172 = scmp.eq.s32.totalorder %s20, 0
      %p173 = por %p171, %p172
      %s174 = ssub.s32 %s14, %s21
      %p175 = scmp.eq.s32.totalorder %s174, 0
      %s177 = sadd.s32 %s176, 1
      %s178 = scalar_select %p175, %s176, %s177
      %p181 = pneg %p175
      %p182 = scmp.eq.s32.totalorder %s14, 1
      %p183 = por %p181, %p182
      %p184 = scmp.ne.s32.totalorder %s176, %s179
      %p185 = scmp.eq.s32.totalorder %s14, 0
      %p186 = por %p184, %p185
      %p187 = scmp.ne.s32.totalorder %s176, %s179
      %p188 = scmp.eq.s32.totalorder %s19, 1
      %p189 = por %p187, %p188
      %p190 = scmp.ne.s32.totalorder %s179, %s180
      %p191 = scmp.eq.s32.totalorder %s19, 0
      %p192 = por %p190, %p191
      %p193 = scmp.ne.s32.totalorder %s179, %s180
      %p194 = scmp.eq.s32.totalorder %s20, 1
      %p195 = por %p193, %p194
      %p197 = scmp.ne.s32.totalorder %s180, %s196
      %p198 = scmp.eq.s32.totalorder %s20, 0
      %p199 = por %p197, %p198
      %p200 = scmp.le.s32.totalorder 1, %s14
      %p201 = scmp.lt.s32.totalorder %s14, 3
      %p202 = pnand %p200, %p201
      %p203 = pneg %p202
      // Predicated region
      $region9: #{se_bottleneck_forward.1} parent=5 // pred_check
        _
      $region10: #{se_bottleneck_forward.1} parent=5 // pred_check_branch
        %205 = sbr.rel (%p202) target = $region12
      $region11: #{se_bottleneck_forward.1} parent=5 // pred_region
        %s206 = ssub.s32 %s14, 1
        // Predicated region
        $region13: #{se_bottleneck_forward.1} parent=11 // pred_check
          %p207 = pneg %p61
        $region14: #{se_bottleneck_forward.1} parent=11 // pred_check_branch
          %209 = sbr.rel (%p207) target = $region16
        $region15: #{se_bottleneck_forward.1} parent=11 // pred_region
          _
        $region16: #{se_bottleneck_forward.1} parent=11 // pred_fallthru
          _
        // Predicated region
        $region17: #{se_bottleneck_forward.1} parent=11 // pred_check
          %p210 = pneg %p82
        $region18: #{se_bottleneck_forward.1} parent=11 // pred_check_branch
          %212 = sbr.rel (%p210) target = $region20
        $region19: #{se_bottleneck_forward.1} parent=11 // pred_region
          _
        $region20: #{se_bottleneck_forward.1} parent=11 // pred_fallthru
          _
        // Predicated region
        $region21: #{se_bottleneck_forward.1} parent=11 // pred_check
          %p213 = pneg %p103
        $region22: #{se_bottleneck_forward.1} parent=11 // pred_check_branch
          %215 = sbr.rel (%p213) target = $region24
        $region23: #{se_bottleneck_forward.1} parent=11 // pred_region
          %217 = vsyncadd [#allocation3], 0
          %s218 = sshll.u32 %s3, 4
          %s219 = int_to_ptr.hbm [resolvable:$true] %s218
          %s220 = sshll.u32 [#allocation2], 4
          %s221 = int_to_ptr.vmem [resolvable:$true] %s220
          %226 = dma.hbm_to_vmem [thread:$0]  %s219, 24576, %s221, [#allocation3], 256, 256, 16
        $region24: #{se_bottleneck_forward.1} parent=11 // pred_fallthru
          _
        // Predicated region
        $region25: #{se_bottleneck_forward.1} parent=11 // pred_check
          %p227 = pneg %p124
        $region26: #{se_bottleneck_forward.1} parent=11 // pred_check_branch
          %229 = sbr.rel (%p227) target = $region28
        $region27: #{se_bottleneck_forward.1} parent=11 // pred_region
          _
        $region28: #{se_bottleneck_forward.1} parent=11 // pred_fallthru
          _
        // Predicated region
        $region29: #{se_bottleneck_forward.1} parent=11 // pred_check
          %p230 = pneg %p145
        $region30: #{se_bottleneck_forward.1} parent=11 // pred_check_branch
          %232 = sbr.rel (%p230) target = $region32
        $region31: #{se_bottleneck_forward.1} parent=11 // pred_region
          _
        $region32: #{se_bottleneck_forward.1} parent=11 // pred_fallthru
          _
        // Predicated region
        $region33: #{se_bottleneck_forward.1} parent=11 // pred_check
          %p233 = pneg %p166
        $region34: #{se_bottleneck_forward.1} parent=11 // pred_check_branch
          %235 = sbr.rel (%p233) target = $region36
        $region35: #{se_bottleneck_forward.1} parent=11 // pred_region
          _
        $region36: #{se_bottleneck_forward.1} parent=11 // pred_fallthru
          _
      $region12: #{se_bottleneck_forward.1} parent=5 // pred_fallthru
        _
      %p236 = scmp.lt.s32.totalorder %s14, 2
      // Predicated region
      $region37: #{se_bottleneck_forward.1} parent=5 // pred_check
        %p237 = pneg %p236
      $region38: #{se_bottleneck_forward.1} parent=5 // pred_check_branch
        %239 = sbr.rel (%p237) target = $region40
      $region39: #{se_bottleneck_forward.1} parent=5 // pred_region
        // Predicated region
        $region41: #{se_bottleneck_forward.1} parent=39 // pred_check
          %p240 = pneg %p34
        $region42: #{se_bottleneck_forward.1} parent=39 // pred_check_branch
          %242 = sbr.rel (%p240) target = $region44
        $region43: #{se_bottleneck_forward.1} parent=39 // pred_region
          %s243 = smul.u32 4, %s14
          %p244 = scmp.lt.s32.totalorder %s243, 7
          %s245 = scalar_select %p244, %s243, 7
          %s246 = smul.addr %s245, 4
          %s247 = smul.addr %s246, 8
          %s248 = scalar_lea.vmem %s0, %s247
          %s249 = smul.u32 4, %s14
        $region44: #{se_bottleneck_forward.1} parent=39 // pred_fallthru
          _
      $region40: #{se_bottleneck_forward.1} parent=5 // pred_fallthru
        _
      %p250 = scmp.le.s32.totalorder 1, %s14
      %p251 = scmp.lt.s32.totalorder %s14, 3
      %p252 = pnand %p250, %p251
      %p253 = pneg %p252
      // Predicated region
      $region45: #{se_bottleneck_forward.1} parent=5 // pred_check
        _
      $region46: #{se_bottleneck_forward.1} parent=5 // pred_check_branch
        %255 = sbr.rel (%p252) target = $region48
      $region47: #{se_bottleneck_forward.1} parent=5 // pred_region
        %s256 = ssub.s32 %s14, 1
        // Predicated region
        $region49: #{se_bottleneck_forward.1} parent=47 // pred_check
          %p257 = pneg %p103
        $region50: #{se_bottleneck_forward.1} parent=47 // pred_check_branch
          %259 = sbr.rel (%p257) target = $region52
        $region51: #{se_bottleneck_forward.1} parent=47 // pred_region
          %261 = dma.done [#allocation3], 24576
        $region52: #{se_bottleneck_forward.1} parent=47 // pred_fallthru
          _
        %s262 = smul.u32 4, %s19
        %p263 = scmp.lt.s32.totalorder %s262, 7
        %s264 = scalar_select %p263, %s262, 7
        %s265 = smul.addr %s264, 4
        %s266 = smul.addr %s265, 8
        %s267 = scalar_lea.vmem %s0, %s266
        %p268 = pneg %p40
        %p269 = pneg %p37
        %p270 = pneg %p61
        %p271 = pneg %p58
        %p272 = pneg %p82
        %p273 = pneg %p79
        %p274 = pneg %p103
        %p275 = pneg %p100
        %p276 = pneg %p124
        %p277 = pneg %p121
        %p278 = pneg %p145
        %p279 = pneg %p142
        %p280 = pneg %p166
        %p281 = pneg %p163
        %p282 = pneg %p192
        %p283 = pneg %p189
        %s284 = smul.u32 4, %s19
        %p285 = scmp.lt.s32.totalorder %s284, 7
        %s286 = scalar_select %p285, %s284, 7
        %s287 = smul.addr %s286, 4
        %s288 = smul.addr %s287, 8
        %s289 = scalar_lea.vmem %s7, %s288
        %s290 = smul.u32 4, %s19
        %p291 = scmp.lt.s32.totalorder %s290, 7
        %s292 = scalar_select %p291, %s290, 7
        %s293 = smul.addr %s292, 4
        %s294 = smul.addr %s293, 8
        %s295 = scalar_lea.vmem %s0, %s294
        %s296 = smul.u32 4, %s19
        %s297 = smul.u32 4, %s19
        %p298 = scmp.lt.s32.totalorder %s297, 7
        %s299 = scalar_select %p298, %s297, 7
        %s300 = smul.addr %s299, 4
        %s301 = smul.addr %s300, 8
        %s302 = scalar_lea.vmem %s7, %s301
        %s303 = smul.u32 4, %s19
        %v304 = vld [vmem:[%s295] sm:$0xff]
        %v305 = vld [vmem:[%s295 + $0x8] sm:$0xff]
        %v306 = vld [vmem:[%s295 + $0x10] sm:$0xff]
        %v307 = vld [vmem:[%s295 + $0x18] sm:$0xff]
        %v308 = vld [vmem:[%s295 + $0x20] sm:$0xff]
        %v309 = vld [vmem:[%s295 + $0x28] sm:$0xff]
        %v310 = vld [vmem:[%s295 + $0x30] sm:$0xff]
        %v311 = vld [vmem:[%s295 + $0x38] sm:$0xff]
        %v312 = vld [vmem:[%s295 + $0x40] sm:$0xff]
        %v313 = vld [vmem:[%s295 + $0x48] sm:$0xff]
        %v314 = vld [vmem:[%s295 + $0x50] sm:$0xff]
        %v315 = vld [vmem:[%s295 + $0x58] sm:$0xff]
        %v316 = vld [vmem:[%s295 + $0x60] sm:$0xff]
        %v317 = vld [vmem:[%s295 + $0x68] sm:$0xff]
        %v318 = vld [vmem:[%s295 + $0x70] sm:$0xff]
        %v319 = vld [vmem:[%s295 + $0x78] sm:$0xff]
        %v320 = vpack.c.bf16 %v308, %v304
        %v321 = vpack.c.bf16 %v309, %v305
        %v322 = vpack.c.bf16 %v310, %v306
        %v323 = vpack.c.bf16 %v311, %v307
        %v324 = vpack.c.bf16 %v316, %v312
        %v325 = vpack.c.bf16 %v317, %v313
        %v326 = vpack.c.bf16 %v318, %v314
        %v327 = vpack.c.bf16 %v319, %v315
        %v328 = vld [vmem:[%s1] sm:$0xff]
        %v329 = vld [vmem:[%s1 + $0x8] sm:$0xff]
        %v330 = vld [vmem:[%s1 + $0x10] sm:$0xff]
        %v331 = vld [vmem:[%s1 + $0x18] sm:$0xff]
        %v332 = vld [vmem:[%s1 + $0x20] sm:$0xff]
        %v333 = vld [vmem:[%s1 + $0x28] sm:$0xff]
        %v334 = vld [vmem:[%s1 + $0x30] sm:$0xff]
        %v335 = vld [vmem:[%s1 + $0x38] sm:$0xff]
        %v336 = vld [vmem:[%s1 + $0x40] sm:$0xff]
        %v337 = vld [vmem:[%s1 + $0x48] sm:$0xff]
        %v338 = vld [vmem:[%s1 + $0x50] sm:$0xff]
        %v339 = vld [vmem:[%s1 + $0x58] sm:$0xff]
        %v340 = vld [vmem:[%s1 + $0x60] sm:$0xff]
        %v341 = vld [vmem:[%s1 + $0x68] sm:$0xff]
        %v342 = vld [vmem:[%s1 + $0x70] sm:$0xff]
        %v343 = vld [vmem:[%s1 + $0x78] sm:$0xff]
        %v344 = vld [vmem:[%s1 + $0x80] sm:$0xff]
        %v345 = vld [vmem:[%s1 + $0x88] sm:$0xff]
        %v346 = vld [vmem:[%s1 + $0x90] sm:$0xff]
        %v347 = vld [vmem:[%s1 + $0x98] sm:$0xff]
        %v348 = vld [vmem:[%s1 + $0xa0] sm:$0xff]
        %v349 = vld [vmem:[%s1 + $0xa8] sm:$0xff]
        %v350 = vld [vmem:[%s1 + $0xb0] sm:$0xff]
        %v351 = vld [vmem:[%s1 + $0xb8] sm:$0xff]
        %v352 = vld [vmem:[%s1 + $0xc0] sm:$0xff]
        %v353 = vld [vmem:[%s1 + $0xc8] sm:$0xff]
        %v354 = vld [vmem:[%s1 + $0xd0] sm:$0xff]
        %v355 = vld [vmem:[%s1 + $0xd8] sm:$0xff]
        %v356 = vld [vmem:[%s1 + $0xe0] sm:$0xff]
        %v357 = vld [vmem:[%s1 + $0xe8] sm:$0xff]
        %v358 = vld [vmem:[%s1 + $0xf0] sm:$0xff]
        %v359 = vld [vmem:[%s1 + $0xf8] sm:$0xff]
        %v360 = vld [vmem:[%s1 + $0x100] sm:$0xff]
        %v361 = vld [vmem:[%s1 + $0x108] sm:$0xff]
        %v362 = vld [vmem:[%s1 + $0x110] sm:$0xff]
        %v363 = vld [vmem:[%s1 + $0x118] sm:$0xff]
        %v364 = vld [vmem:[%s1 + $0x120] sm:$0xff]
        %v365 = vld [vmem:[%s1 + $0x128] sm:$0xff]
        %v366 = vld [vmem:[%s1 + $0x130] sm:$0xff]
        %v367 = vld [vmem:[%s1 + $0x138] sm:$0xff]
        %v368 = vld [vmem:[%s1 + $0x140] sm:$0xff]
        %v369 = vld [vmem:[%s1 + $0x148] sm:$0xff]
        %v370 = vld [vmem:[%s1 + $0x150] sm:$0xff]
        %v371 = vld [vmem:[%s1 + $0x158] sm:$0xff]
        %v372 = vld [vmem:[%s1 + $0x160] sm:$0xff]
        %v373 = vld [vmem:[%s1 + $0x168] sm:$0xff]
        %v374 = vld [vmem:[%s1 + $0x170] sm:$0xff]
        %v375 = vld [vmem:[%s1 + $0x178] sm:$0xff]
        %v376 = vld [vmem:[%s1 + $0x180] sm:$0xff]
        %v377 = vld [vmem:[%s1 + $0x188] sm:$0xff]
        %v378 = vld [vmem:[%s1 + $0x190] sm:$0xff]
        %v379 = vld [vmem:[%s1 + $0x198] sm:$0xff]
        %v380 = vld [vmem:[%s1 + $0x1a0] sm:$0xff]
        %v381 = vld [vmem:[%s1 + $0x1a8] sm:$0xff]
        %v382 = vld [vmem:[%s1 + $0x1b0] sm:$0xff]
        %v383 = vld [vmem:[%s1 + $0x1b8] sm:$0xff]
        %v384 = vld [vmem:[%s1 + $0x1c0] sm:$0xff]
        %v385 = vld [vmem:[%s1 + $0x1c8] sm:$0xff]
        %v386 = vld [vmem:[%s1 + $0x1d0] sm:$0xff]
        %v387 = vld [vmem:[%s1 + $0x1d8] sm:$0xff]
        %v388 = vld [vmem:[%s1 + $0x1e0] sm:$0xff]
        %v389 = vld [vmem:[%s1 + $0x1e8] sm:$0xff]
        %v390 = vld [vmem:[%s1 + $0x1f0] sm:$0xff]
        %v391 = vld [vmem:[%s1 + $0x1f8] sm:$0xff]
        %v392 = vld [vmem:[%s2] sm:$0x3]
        %v394 = vperm.slane %v392, 0
        %v395 = vperm.slane %v392, 1
        %v462 = vunpack.c.l.b16 %v328
        %v463 = vunpack.c.h.b16 %v328
        %v464 = vunpack.c.l.b16 %v329
        %v465 = vunpack.c.h.b16 %v329
        %v466 = vunpack.c.l.b16 %v330
        %v467 = vunpack.c.h.b16 %v330
        %v468 = vunpack.c.l.b16 %v331
        %v469 = vunpack.c.h.b16 %v331
        %v470 = vunpack.c.l.b16 %v332
        %v471 = vunpack.c.h.b16 %v332
        %v472 = vunpack.c.l.b16 %v333
        %v473 = vunpack.c.h.b16 %v333
        %v474 = vunpack.c.l.b16 %v334
        %v475 = vunpack.c.h.b16 %v334
        %v476 = vunpack.c.l.b16 %v335
        %v477 = vunpack.c.h.b16 %v335
        %v478 = vunpack.c.l.b16 %v336
        %v479 = vunpack.c.h.b16 %v336
        %v480 = vunpack.c.l.b16 %v337
        %v481 = vunpack.c.h.b16 %v337
        %v482 = vunpack.c.l.b16 %v338
        %v483 = vunpack.c.h.b16 %v338
        %v484 = vunpack.c.l.b16 %v339
        %v485 = vunpack.c.h.b16 %v339
        %v486 = vunpack.c.l.b16 %v340
        %v487 = vunpack.c.h.b16 %v340
        %v488 = vunpack.c.l.b16 %v341
        %v489 = vunpack.c.h.b16 %v341
        %v490 = vunpack.c.l.b16 %v342
        %v491 = vunpack.c.h.b16 %v342
        %v492 = vunpack.c.l.b16 %v343
        %v493 = vunpack.c.h.b16 %v343
        %v494 = vunpack.c.l.b16 %v344
        %v495 = vunpack.c.h.b16 %v344
        %v496 = vunpack.c.l.b16 %v345
        %v497 = vunpack.c.h.b16 %v345
        %v498 = vunpack.c.l.b16 %v346
        %v499 = vunpack.c.h.b16 %v346
        %v500 = vunpack.c.l.b16 %v347
        %v501 = vunpack.c.h.b16 %v347
        %v502 = vunpack.c.l.b16 %v348
        %v503 = vunpack.c.h.b16 %v348
        %v504 = vunpack.c.l.b16 %v349
        %v505 = vunpack.c.h.b16 %v349
        %v506 = vunpack.c.l.b16 %v350
        %v507 = vunpack.c.h.b16 %v350
        %v508 = vunpack.c.l.b16 %v351
        %v509 = vunpack.c.h.b16 %v351
        %v510 = vunpack.c.l.b16 %v352
        %v511 = vunpack.c.h.b16 %v352
        %v512 = vunpack.c.l.b16 %v353
        %v513 = vunpack.c.h.b16 %v353
        %v514 = vunpack.c.l.b16 %v354
        %v515 = vunpack.c.h.b16 %v354
        %v516 = vunpack.c.l.b16 %v355
        %v517 = vunpack.c.h.b16 %v355
        %v518 = vunpack.c.l.b16 %v356
        %v519 = vunpack.c.h.b16 %v356
        %v520 = vunpack.c.l.b16 %v357
        %v521 = vunpack.c.h.b16 %v357
        %v522 = vunpack.c.l.b16 %v358
        %v523 = vunpack.c.h.b16 %v358
        %v524 = vunpack.c.l.b16 %v359
        %v525 = vunpack.c.h.b16 %v359
        %v526 = vunpack.c.l.b16 %v360
        %v527 = vunpack.c.h.b16 %v360
        %v528 = vunpack.c.l.b16 %v361
        %v529 = vunpack.c.h.b16 %v361
        %v530 = vunpack.c.l.b16 %v362
        %v531 = vunpack.c.h.b16 %v362
        %v532 = vunpack.c.l.b16 %v363
        %v533 = vunpack.c.h.b16 %v363
        %v534 = vunpack.c.l.b16 %v364
        %v535 = vunpack.c.h.b16 %v364
        %v536 = vunpack.c.l.b16 %v365
        %v537 = vunpack.c.h.b16 %v365
        %v538 = vunpack.c.l.b16 %v366
        %v539 = vunpack.c.h.b16 %v366
        %v540 = vunpack.c.l.b16 %v367
        %v541 = vunpack.c.h.b16 %v367
        %v542 = vunpack.c.l.b16 %v368
        %v543 = vunpack.c.h.b16 %v368
        %v544 = vunpack.c.l.b16 %v369
        %v545 = vunpack.c.h.b16 %v369
        %v546 = vunpack.c.l.b16 %v370
        %v547 = vunpack.c.h.b16 %v370
        %v548 = vunpack.c.l.b16 %v371
        %v549 = vunpack.c.h.b16 %v371
        %v550 = vunpack.c.l.b16 %v372
        %v551 = vunpack.c.h.b16 %v372
        %v552 = vunpack.c.l.b16 %v373
        %v553 = vunpack.c.h.b16 %v373
        %v554 = vunpack.c.l.b16 %v374
        %v555 = vunpack.c.h.b16 %v374
        %v556 = vunpack.c.l.b16 %v375
        %v557 = vunpack.c.h.b16 %v375
        %v558 = vunpack.c.l.b16 %v376
        %v559 = vunpack.c.h.b16 %v376
        %v560 = vunpack.c.l.b16 %v377
        %v561 = vunpack.c.h.b16 %v377
        %v562 = vunpack.c.l.b16 %v378
        %v563 = vunpack.c.h.b16 %v378
        %v564 = vunpack.c.l.b16 %v379
        %v565 = vunpack.c.h.b16 %v379
        %v566 = vunpack.c.l.b16 %v380
        %v567 = vunpack.c.h.b16 %v380
        %v568 = vunpack.c.l.b16 %v381
        %v569 = vunpack.c.h.b16 %v381
        %v570 = vunpack.c.l.b16 %v382
        %v571 = vunpack.c.h.b16 %v382
        %v572 = vunpack.c.l.b16 %v383
        %v573 = vunpack.c.h.b16 %v383
        %v574 = vunpack.c.l.b16 %v384
        %v575 = vunpack.c.h.b16 %v384
        %v576 = vunpack.c.l.b16 %v385
        %v577 = vunpack.c.h.b16 %v385
        %v578 = vunpack.c.l.b16 %v386
        %v579 = vunpack.c.h.b16 %v386
        %v580 = vunpack.c.l.b16 %v387
        %v581 = vunpack.c.h.b16 %v387
        %v582 = vunpack.c.l.b16 %v388
        %v583 = vunpack.c.h.b16 %v388
        %v584 = vunpack.c.l.b16 %v389
        %v585 = vunpack.c.h.b16 %v389
        %v586 = vunpack.c.l.b16 %v390
        %v587 = vunpack.c.h.b16 %v390
        %v588 = vunpack.c.l.b16 %v391
        %v589 = vunpack.c.h.b16 %v391
        %v590 = vpack.c.b16 %v464, %v462
        %v591 = vpack.c.b16 %v465, %v463
        %v592 = vpack.c.b16 %v468, %v466
        %v593 = vpack.c.b16 %v469, %v467
        %v594 = vpack.c.b16 %v472, %v470
        %v595 = vpack.c.b16 %v473, %v471
        %v596 = vpack.c.b16 %v476, %v474
        %v597 = vpack.c.b16 %v477, %v475
        %v598 = vpack.c.b16 %v480, %v478
        %v599 = vpack.c.b16 %v481, %v479
        %v600 = vpack.c.b16 %v484, %v482
        %v601 = vpack.c.b16 %v485, %v483
        %v602 = vpack.c.b16 %v488, %v486
        %v603 = vpack.c.b16 %v489, %v487
        %v604 = vpack.c.b16 %v492, %v490
        %v605 = vpack.c.b16 %v493, %v491
        %v606 = vpack.c.b16 %v496, %v494
        %v607 = vpack.c.b16 %v497, %v495
        %v608 = vpack.c.b16 %v500, %v498
        %v609 = vpack.c.b16 %v501, %v499
        %v610 = vpack.c.b16 %v504, %v502
        %v611 = vpack.c.b16 %v505, %v503
        %v612 = vpack.c.b16 %v508, %v506
        %v613 = vpack.c.b16 %v509, %v507
        %v614 = vpack.c.b16 %v512, %v510
        %v615 = vpack.c.b16 %v513, %v511
        %v616 = vpack.c.b16 %v516, %v514
        %v617 = vpack.c.b16 %v517, %v515
        %v618 = vpack.c.b16 %v520, %v518
        %v619 = vpack.c.b16 %v521, %v519
        %v620 = vpack.c.b16 %v524, %v522
        %v621 = vpack.c.b16 %v525, %v523
        %v622 = vpack.c.b16 %v528, %v526
        %v623 = vpack.c.b16 %v529, %v527
        %v624 = vpack.c.b16 %v532, %v530
        %v625 = vpack.c.b16 %v533, %v531
        %v626 = vpack.c.b16 %v536, %v534
        %v627 = vpack.c.b16 %v537, %v535
        %v628 = vpack.c.b16 %v540, %v538
        %v629 = vpack.c.b16 %v541, %v539
        %v630 = vpack.c.b16 %v544, %v542
        %v631 = vpack.c.b16 %v545, %v543
        %v632 = vpack.c.b16 %v548, %v546
        %v633 = vpack.c.b16 %v549, %v547
        %v634 = vpack.c.b16 %v552, %v550
        %v635 = vpack.c.b16 %v553, %v551
        %v636 = vpack.c.b16 %v556, %v554
        %v637 = vpack.c.b16 %v557, %v555
        %v638 = vpack.c.b16 %v560, %v558
        %v639 = vpack.c.b16 %v561, %v559
        %v640 = vpack.c.b16 %v564, %v562
        %v641 = vpack.c.b16 %v565, %v563
        %v642 = vpack.c.b16 %v568, %v566
        %v643 = vpack.c.b16 %v569, %v567
        %v644 = vpack.c.b16 %v572, %v570
        %v645 = vpack.c.b16 %v573, %v571
        %v646 = vpack.c.b16 %v576, %v574
        %v647 = vpack.c.b16 %v577, %v575
        %v648 = vpack.c.b16 %v580, %v578
        %v649 = vpack.c.b16 %v581, %v579
        %v650 = vpack.c.b16 %v584, %v582
        %v651 = vpack.c.b16 %v585, %v583
        %v652 = vpack.c.b16 %v588, %v586
        %v653 = vpack.c.b16 %v589, %v587
        %718 = vmatpush.bf16.msra.mxu0 %v604
        %719 = vmatpush.bf16.msra.mxu0 %v602
        %720 = vmatpush.bf16.msra.mxu0 %v600
        %721 = vmatpush.bf16.msra.mxu0 %v598
        %722 = vmatpush.bf16.msra.mxu0 %v596
        %723 = vmatpush.bf16.msra.mxu0 %v594
        %724 = vmatpush.bf16.msra.mxu0 %v592
        %725 = vmatpush.bf16.msra.mxu0 %v590
        %726 = vmatmul.bf16.gmra.mxu0 %v320
        %v727 = vpop.f32.mrf.mxu0
        %v728 = vadd.f32 %v394, %v727
        %v729 = vpop.f32.mrf.mxu0
        %v730 = vadd.f32 %v394, %v729
        %731 = vmatmul.bf16.gmra.mxu0 %v324
        %v732 = vpop.f32.mrf.mxu0
        %v733 = vadd.f32 %v394, %v732
        %v734 = vpop.f32.mrf.mxu0
        %v735 = vadd.f32 %v394, %v734
        %736 = vdwg.mxu0
        %737 = vmatpush.bf16.msra.mxu0 %v620
        %738 = vmatpush.bf16.msra.mxu0 %v618
        %739 = vmatpush.bf16.msra.mxu0 %v616
        %740 = vmatpush.bf16.msra.mxu0 %v614
        %741 = vmatpush.bf16.msra.mxu0 %v612
        %742 = vmatpush.bf16.msra.mxu0 %v610
        %743 = vmatpush.bf16.msra.mxu0 %v608
        %744 = vmatpush.bf16.msra.mxu0 %v606
        %745 = vmatmul.bf16.gmra.mxu0 %v321
        %v746 = vpop.f32.mrf.mxu0
        %v747 = vadd.f32 %v728, %v746
        %v748 = vpop.f32.mrf.mxu0
        %v749 = vadd.f32 %v730, %v748
        %750 = vmatmul.bf16.gmra.mxu0 %v325
        %v751 = vpop.f32.mrf.mxu0
        %v752 = vadd.f32 %v733, %v751
        %v753 = vpop.f32.mrf.mxu0
        %v754 = vadd.f32 %v735, %v753
        %755 = vdwg.mxu0
        %756 = vmatpush.bf16.msra.mxu0 %v636
        %757 = vmatpush.bf16.msra.mxu0 %v634
        %758 = vmatpush.bf16.msra.mxu0 %v632
        %759 = vmatpush.bf16.msra.mxu0 %v630
        %760 = vmatpush.bf16.msra.mxu0 %v628
        %761 = vmatpush.bf16.msra.mxu0 %v626
        %762 = vmatpush.bf16.msra.mxu0 %v624
        %763 = vmatpush.bf16.msra.mxu0 %v622
        %764 = vmatmul.bf16.gmra.mxu0 %v322
        %v765 = vpop.f32.mrf.mxu0
        %v766 = vadd.f32 %v747, %v765
        %v767 = vpop.f32.mrf.mxu0
        %v768 = vadd.f32 %v749, %v767
        %769 = vmatmul.bf16.gmra.mxu0 %v326
        %v770 = vpop.f32.mrf.mxu0
        %v771 = vadd.f32 %v752, %v770
        %v772 = vpop.f32.mrf.mxu0
        %v773 = vadd.f32 %v754, %v772
        %774 = vdwg.mxu0
        %775 = vmatpush.bf16.msra.mxu0 %v652
        %776 = vmatpush.bf16.msra.mxu0 %v650
        %777 = vmatpush.bf16.msra.mxu0 %v648
        %778 = vmatpush.bf16.msra.mxu0 %v646
        %779 = vmatpush.bf16.msra.mxu0 %v644
        %780 = vmatpush.bf16.msra.mxu0 %v642
        %781 = vmatpush.bf16.msra.mxu0 %v640
        %782 = vmatpush.bf16.msra.mxu0 %v638
        %783 = vmatmul.bf16.gmra.mxu0 %v323
        %v784 = vpop.f32.mrf.mxu0
        %v785 = vadd.f32 %v766, %v784
        %v786 = vpop.f32.mrf.mxu0
        %v787 = vadd.f32 %v768, %v786
        %788 = vmatmul.bf16.gmra.mxu0 %v327
        %v789 = vpop.f32.mrf.mxu0
        %v790 = vadd.f32 %v771, %v789
        %v791 = vpop.f32.mrf.mxu0
        %v792 = vadd.f32 %v773, %v791
        %793 = vdwg.mxu0
        %794 = vmatpush.bf16.msra.mxu0 %v605
        %795 = vmatpush.bf16.msra.mxu0 %v603
        %796 = vmatpush.bf16.msra.mxu0 %v601
        %797 = vmatpush.bf16.msra.mxu0 %v599
        %798 = vmatpush.bf16.msra.mxu0 %v597
        %799 = vmatpush.bf16.msra.mxu0 %v595
        %800 = vmatpush.bf16.msra.mxu0 %v593
        %801 = vmatpush.bf16.msra.mxu0 %v591
        %802 = vmatmul.bf16.gmra.mxu0 %v320
        %v803 = vpop.f32.mrf.mxu0
        %v804 = vadd.f32 %v395, %v803
        %v805 = vpop.f32.mrf.mxu0
        %v806 = vadd.f32 %v395, %v805
        %807 = vmatmul.bf16.gmra.mxu0 %v324
        %v808 = vpop.f32.mrf.mxu0
        %v809 = vadd.f32 %v395, %v808
        %v810 = vpop.f32.mrf.mxu0
        %v811 = vadd.f32 %v395, %v810
        %812 = vdwg.mxu0
        %813 = vmatpush.bf16.msra.mxu0 %v621
        %814 = vmatpush.bf16.msra.mxu0 %v619
        %815 = vmatpush.bf16.msra.mxu0 %v617
        %816 = vmatpush.bf16.msra.mxu0 %v615
        %817 = vmatpush.bf16.msra.mxu0 %v613
        %818 = vmatpush.bf16.msra.mxu0 %v611
        %819 = vmatpush.bf16.msra.mxu0 %v609
        %820 = vmatpush.bf16.msra.mxu0 %v607
        %821 = vmatmul.bf16.gmra.mxu0 %v321
        %v822 = vpop.f32.mrf.mxu0
        %v823 = vadd.f32 %v804, %v822
        %v824 = vpop.f32.mrf.mxu0
        %v825 = vadd.f32 %v806, %v824
        %826 = vmatmul.bf16.gmra.mxu0 %v325
        %v827 = vpop.f32.mrf.mxu0
        %v828 = vadd.f32 %v809, %v827
        %v829 = vpop.f32.mrf.mxu0
        %v830 = vadd.f32 %v811, %v829
        %831 = vdwg.mxu0
        %832 = vmatpush.bf16.msra.mxu0 %v637
        %833 = vmatpush.bf16.msra.mxu0 %v635
        %834 = vmatpush.bf16.msra.mxu0 %v633
        %835 = vmatpush.bf16.msra.mxu0 %v631
        %836 = vmatpush.bf16.msra.mxu0 %v629
        %837 = vmatpush.bf16.msra.mxu0 %v627
        %838 = vmatpush.bf16.msra.mxu0 %v625
        %839 = vmatpush.bf16.msra.mxu0 %v623
        %840 = vmatmul.bf16.gmra.mxu0 %v322
        %v841 = vpop.f32.mrf.mxu0
        %v842 = vadd.f32 %v823, %v841
        %v843 = vpop.f32.mrf.mxu0
        %v844 = vadd.f32 %v825, %v843
        %845 = vmatmul.bf16.gmra.mxu0 %v326
        %v846 = vpop.f32.mrf.mxu0
        %v847 = vadd.f32 %v828, %v846
        %v848 = vpop.f32.mrf.mxu0
        %v849 = vadd.f32 %v830, %v848
        %850 = vdwg.mxu0
        %851 = vmatpush.bf16.msra.mxu0 %v653
        %852 = vmatpush.bf16.msra.mxu0 %v651
        %853 = vmatpush.bf16.msra.mxu0 %v649
        %854 = vmatpush.bf16.msra.mxu0 %v647
        %855 = vmatpush.bf16.msra.mxu0 %v645
        %856 = vmatpush.bf16.msra.mxu0 %v643
        %857 = vmatpush.bf16.msra.mxu0 %v641
        %858 = vmatpush.bf16.msra.mxu0 %v639
        %859 = vmatmul.bf16.gmra.mxu0 %v323
        %v860 = vpop.f32.mrf.mxu0
        %v861 = vadd.f32 %v842, %v860
        %v862 = vpop.f32.mrf.mxu0
        %v863 = vadd.f32 %v844, %v862
        %864 = vmatmul.bf16.gmra.mxu0 %v327
        %v865 = vpop.f32.mrf.mxu0
        %v866 = vadd.f32 %v847, %v865
        %v867 = vpop.f32.mrf.mxu0
        %v868 = vadd.f32 %v849, %v867
        %869 = vdwg.mxu0
        %v870 = vxor.u32 %v785, 2147483648
        %v871 = vxor.u32 %v861, 2147483648
        %v872 = vxor.u32 %v787, 2147483648
        %v873 = vxor.u32 %v863, 2147483648
        %v874 = vxor.u32 %v790, 2147483648
        %v875 = vxor.u32 %v866, 2147483648
        %v876 = vxor.u32 %v792, 2147483648
        %v877 = vxor.u32 %v868, 2147483648
        %v878 = vmul.f32 %v870, 1.442695
        %v879 = vpow.pop %v878
        %v880 = vmul.f32 %v871, 1.442695
        %v881 = vpow.pop %v880
        %v882 = vmul.f32 %v872, 1.442695
        %v883 = vpow.pop %v882
        %v884 = vmul.f32 %v873, 1.442695
        %v885 = vpow.pop %v884
        %v886 = vmul.f32 %v874, 1.442695
        %v887 = vpow.pop %v886
        %v888 = vmul.f32 %v875, 1.442695
        %v889 = vpow.pop %v888
        %v890 = vmul.f32 %v876, 1.442695
        %v891 = vpow.pop %v890
        %v892 = vmul.f32 %v877, 1.442695
        %v893 = vpow.pop %v892
        %v894 = vadd.f32 %v879, 1.0
        %v895 = vadd.f32 %v881, 1.0
        %v896 = vadd.f32 %v883, 1.0
        %v897 = vadd.f32 %v885, 1.0
        %v898 = vadd.f32 %v887, 1.0
        %v899 = vadd.f32 %v889, 1.0
        %v900 = vadd.f32 %v891, 1.0
        %v901 = vadd.f32 %v893, 1.0
        %v902 = vrcp.pop %v894
        %v903 = vmul.f32 %v894, %v902
        %v904 = vsub.f32 1.0, %v903
        %v905 = vmul.f32 %v902, %v904
        %v906 = vadd.f32 %v902, %v905
        %vm907 = vweird.f32 %v894
        %vm908 = vweird.f32 %v902
        %vm909 = vmor %vm907, %vm908
        %v910 = vsel %vm909, %v902, %v906
        %v911 = vand.u32 2147483647, %v894
        %vm912 = vcmp.eq.f32.partialorder %v911, 8.507059e+37
        %v913 = vand.u32 %v894, 2147483648
        %v914 = vor.u32 1.1754944e-38, %v913
        %v915 = vsel %vm912, %v914, %v910
        %v916 = vmul.f32 1.0, %v915
        %v917 = vrcp.pop %v895
        %v918 = vmul.f32 %v895, %v917
        %v919 = vsub.f32 1.0, %v918
        %v920 = vmul.f32 %v917, %v919
        %v921 = vadd.f32 %v917, %v920
        %vm922 = vweird.f32 %v895
        %vm923 = vweird.f32 %v917
        %vm924 = vmor %vm922, %vm923
        %v925 = vsel %vm924, %v917, %v921
        %v926 = vand.u32 2147483647, %v895
        %vm927 = vcmp.eq.f32.partialorder %v926, 8.507059e+37
        %v928 = vand.u32 %v895, 2147483648
        %v929 = vor.u32 1.1754944e-38, %v928
        %v930 = vsel %vm927, %v929, %v925
        %v931 = vmul.f32 1.0, %v930
        %v932 = vrcp.pop %v896
        %v933 = vmul.f32 %v896, %v932
        %v934 = vsub.f32 1.0, %v933
        %v935 = vmul.f32 %v932, %v934
        %v936 = vadd.f32 %v932, %v935
        %vm937 = vweird.f32 %v896
        %vm938 = vweird.f32 %v932
        %vm939 = vmor %vm937, %vm938
        %v940 = vsel %vm939, %v932, %v936
        %v941 = vand.u32 2147483647, %v896
        %vm942 = vcmp.eq.f32.partialorder %v941, 8.507059e+37
        %v943 = vand.u32 %v896, 2147483648
        %v944 = vor.u32 1.1754944e-38, %v943
        %v945 = vsel %vm942, %v944, %v940
        %v946 = vmul.f32 1.0, %v945
        %v947 = vrcp.pop %v897
        %v948 = vmul.f32 %v897, %v947
        %v949 = vsub.f32 1.0, %v948
        %v950 = vmul.f32 %v947, %v949
        %v951 = vadd.f32 %v947, %v950
        %vm952 = vweird.f32 %v897
        %vm953 = vweird.f32 %v947
        %vm954 = vmor %vm952, %vm953
        %v955 = vsel %vm954, %v947, %v951
        %v956 = vand.u32 2147483647, %v897
        %vm957 = vcmp.eq.f32.partialorder %v956, 8.507059e+37
        %v958 = vand.u32 %v897, 2147483648
        %v959 = vor.u32 1.1754944e-38, %v958
        %v960 = vsel %vm957, %v959, %v955
        %v961 = vmul.f32 1.0, %v960
        %v962 = vrcp.pop %v898
        %v963 = vmul.f32 %v898, %v962
        %v964 = vsub.f32 1.0, %v963
        %v965 = vmul.f32 %v962, %v964
        %v966 = vadd.f32 %v962, %v965
        %vm967 = vweird.f32 %v898
        %vm968 = vweird.f32 %v962
        %vm969 = vmor %vm967, %vm968
        %v970 = vsel %vm969, %v962, %v966
        %v971 = vand.u32 2147483647, %v898
        %vm972 = vcmp.eq.f32.partialorder %v971, 8.507059e+37
        %v973 = vand.u32 %v898, 2147483648
        %v974 = vor.u32 1.1754944e-38, %v973
        %v975 = vsel %vm972, %v974, %v970
        %v976 = vmul.f32 1.0, %v975
        %v977 = vrcp.pop %v899
        %v978 = vmul.f32 %v899, %v977
        %v979 = vsub.f32 1.0, %v978
        %v980 = vmul.f32 %v977, %v979
        %v981 = vadd.f32 %v977, %v980
        %vm982 = vweird.f32 %v899
        %vm983 = vweird.f32 %v977
        %vm984 = vmor %vm982, %vm983
        %v985 = vsel %vm984, %v977, %v981
        %v986 = vand.u32 2147483647, %v899
        %vm987 = vcmp.eq.f32.partialorder %v986, 8.507059e+37
        %v988 = vand.u32 %v899, 2147483648
        %v989 = vor.u32 1.1754944e-38, %v988
        %v990 = vsel %vm987, %v989, %v985
        %v991 = vmul.f32 1.0, %v990
        %v992 = vrcp.pop %v900
        %v993 = vmul.f32 %v900, %v992
        %v994 = vsub.f32 1.0, %v993
        %v995 = vmul.f32 %v992, %v994
        %v996 = vadd.f32 %v992, %v995
        %vm997 = vweird.f32 %v900
        %vm998 = vweird.f32 %v992
        %vm999 = vmor %vm997, %vm998
        %v1000 = vsel %vm999, %v992, %v996
        %v1001 = vand.u32 2147483647, %v900
        %vm1002 = vcmp.eq.f32.partialorder %v1001, 8.507059e+37
        %v1003 = vand.u32 %v900, 2147483648
        %v1004 = vor.u32 1.1754944e-38, %v1003
        %v1005 = vsel %vm1002, %v1004, %v1000
        %v1006 = vmul.f32 1.0, %v1005
        %v1007 = vrcp.pop %v901
        %v1008 = vmul.f32 %v901, %v1007
        %v1009 = vsub.f32 1.0, %v1008
        %v1010 = vmul.f32 %v1007, %v1009
        %v1011 = vadd.f32 %v1007, %v1010
        %vm1012 = vweird.f32 %v901
        %vm1013 = vweird.f32 %v1007
        %vm1014 = vmor %vm1012, %vm1013
        %v1015 = vsel %vm1014, %v1007, %v1011
        %v1016 = vand.u32 2147483647, %v901
        %vm1017 = vcmp.eq.f32.partialorder %v1016, 8.507059e+37
        %v1018 = vand.u32 %v901, 2147483648
        %v1019 = vor.u32 1.1754944e-38, %v1018
        %v1020 = vsel %vm1017, %v1019, %v1015
        %v1021 = vmul.f32 1.0, %v1020
        %v1022 = vmul.f32 %v785, %v916
        %v1023 = vmul.f32 %v861, %v931
        %v1024 = vmul.f32 %v787, %v946
        %v1025 = vmul.f32 %v863, %v961
        %v1026 = vmul.f32 %v790, %v976
        %v1027 = vmul.f32 %v866, %v991
        %v1028 = vmul.f32 %v792, %v1006
        %v1029 = vmul.f32 %v868, %v1021
        %v1030 = vlaneseq
        %v1031 = vshrl.u32 %v1030, 7
        %v1032 = vadd.s32 %v1031, 8
        %v1033 = vadd.s32 %v1031, 16
        %v1034 = vadd.s32 %v1031, 24
        %vm1035 = vcmp.lt.s32.totalorder %v1031, 0
        %v1036 = vsub.s32 0, %v1031
        %v1037 = vsel %vm1035, %v1036, %v1031
        %v1038 = vshrl.u32 %v1037, 4
        %v1039 = vand.u32 %v1037, 15
        %v1040 = vsub.s32 0, %v1039
        %v1041 = vsel %vm1035, %v1040, %v1039
        %vm1042 = vcmp.lt.s32.totalorder %v1032, 0
        %v1043 = vsub.s32 0, %v1032
        %v1044 = vsel %vm1042, %v1043, %v1032
        %v1045 = vshrl.u32 %v1044, 4
        %v1046 = vand.u32 %v1044, 15
        %v1047 = vsub.s32 0, %v1046
        %v1048 = vsel %vm1042, %v1047, %v1046
        %vm1049 = vcmp.lt.s32.totalorder %v1033, 0
        %v1050 = vsub.s32 0, %v1033
        %v1051 = vsel %vm1049, %v1050, %v1033
        %v1052 = vshrl.u32 %v1051, 4
        %v1053 = vand.u32 %v1051, 15
        %v1054 = vsub.s32 0, %v1053
        %v1055 = vsel %vm1049, %v1054, %v1053
        %vm1056 = vcmp.lt.s32.totalorder %v1034, 0
        %v1057 = vsub.s32 0, %v1034
        %v1058 = vsel %vm1056, %v1057, %v1034
        %v1059 = vshrl.u32 %v1058, 4
        %v1060 = vand.u32 %v1058, 15
        %v1061 = vsub.s32 0, %v1060
        %v1062 = vsel %vm1056, %v1061, %v1060
        %vm1063 = vcmp.ne.s32.totalorder %v1041, 0
        %vm1064 = vcmp.ne.s32.totalorder %v1048, 0
        %vm1065 = vcmp.ne.s32.totalorder %v1055, 0
        %vm1066 = vcmp.ne.s32.totalorder %v1062, 0
        %vm1067 = vcmp.lt.s32.totalorder %v1041, 0
        %vm1068 = vcmp.lt.s32.totalorder %v1048, 0
        %vm1069 = vcmp.lt.s32.totalorder %v1055, 0
        %vm1070 = vcmp.lt.s32.totalorder %v1062, 0
        %vm1071 = vmand %vm1067, %vm1063
        %vm1072 = vmand %vm1068, %vm1064
        %vm1073 = vmand %vm1069, %vm1065
        %vm1074 = vmand %vm1070, %vm1066
        %v1075 = vadd.s32 %v1041, 16
        %v1076 = vadd.s32 %v1048, 16
        %v1077 = vadd.s32 %v1055, 16
        %v1078 = vadd.s32 %v1062, 16
        %v1079 = vsel %vm1071, %v1075, %v1041
        %v1080 = vsel %vm1072, %v1076, %v1048
        %v1081 = vsel %vm1073, %v1077, %v1055
        %v1082 = vsel %vm1074, %v1078, %v1062
        %v1083 = vpack.c.bf16 %v1024, %v1022
        %v1084 = vpack.c.bf16 %v1025, %v1023
        %v1085 = vpack.c.bf16 %v1028, %v1026
        %v1086 = vpack.c.bf16 %v1029, %v1027
        %s1087 = scalar_lea.vmem [#allocation2], 512
        %v1088 = vld [vmem:[%s1087] sm:$0xff]
        %v1089 = vld [vmem:[%s1087 + $0x8] sm:$0xff]
        %v1090 = vld [vmem:[%s1087 + $0x10] sm:$0xff]
        %v1091 = vld [vmem:[%s1087 + $0x18] sm:$0xff]
        %v1092 = vld [vmem:[%s1087 + $0x20] sm:$0xff]
        %v1093 = vld [vmem:[%s1087 + $0x28] sm:$0xff]
        %v1094 = vld [vmem:[%s1087 + $0x30] sm:$0xff]
        %v1095 = vld [vmem:[%s1087 + $0x38] sm:$0xff]
        %v1096 = vld [vmem:[%s1087 + $0x40] sm:$0xff]
        %v1097 = vld [vmem:[%s1087 + $0x48] sm:$0xff]
        %v1098 = vld [vmem:[%s1087 + $0x50] sm:$0xff]
        %v1099 = vld [vmem:[%s1087 + $0x58] sm:$0xff]
        %v1100 = vld [vmem:[%s1087 + $0x60] sm:$0xff]
        %v1101 = vld [vmem:[%s1087 + $0x68] sm:$0xff]
        %v1102 = vld [vmem:[%s1087 + $0x70] sm:$0xff]
        %v1103 = vld [vmem:[%s1087 + $0x78] sm:$0xff]
        %v1104 = vld [vmem:[%s1087 + $0x80] sm:$0xff]
        %v1105 = vld [vmem:[%s1087 + $0x88] sm:$0xff]
        %v1106 = vld [vmem:[%s1087 + $0x90] sm:$0xff]
        %v1107 = vld [vmem:[%s1087 + $0x98] sm:$0xff]
        %v1108 = vld [vmem:[%s1087 + $0xa0] sm:$0xff]
        %v1109 = vld [vmem:[%s1087 + $0xa8] sm:$0xff]
        %v1110 = vld [vmem:[%s1087 + $0xb0] sm:$0xff]
        %v1111 = vld [vmem:[%s1087 + $0xb8] sm:$0xff]
        %v1112 = vld [vmem:[%s1087 + $0xc0] sm:$0xff]
        %v1113 = vld [vmem:[%s1087 + $0xc8] sm:$0xff]
        %v1114 = vld [vmem:[%s1087 + $0xd0] sm:$0xff]
        %v1115 = vld [vmem:[%s1087 + $0xd8] sm:$0xff]
        %v1116 = vld [vmem:[%s1087 + $0xe0] sm:$0xff]
        %v1117 = vld [vmem:[%s1087 + $0xe8] sm:$0xff]
        %v1118 = vld [vmem:[%s1087 + $0xf0] sm:$0xff]
        %v1119 = vld [vmem:[%s1087 + $0xf8] sm:$0xff]
        %v1120 = vld [vmem:[%s1087 + $0x100] sm:$0xff]
        %v1121 = vld [vmem:[%s1087 + $0x108] sm:$0xff]
        %v1122 = vld [vmem:[%s1087 + $0x110] sm:$0xff]
        %v1123 = vld [vmem:[%s1087 + $0x118] sm:$0xff]
        %v1124 = vld [vmem:[%s1087 + $0x120] sm:$0xff]
        %v1125 = vld [vmem:[%s1087 + $0x128] sm:$0xff]
        %v1126 = vld [vmem:[%s1087 + $0x130] sm:$0xff]
        %v1127 = vld [vmem:[%s1087 + $0x138] sm:$0xff]
        %v1128 = vld [vmem:[%s1087 + $0x140] sm:$0xff]
        %v1129 = vld [vmem:[%s1087 + $0x148] sm:$0xff]
        %v1130 = vld [vmem:[%s1087 + $0x150] sm:$0xff]
        %v1131 = vld [vmem:[%s1087 + $0x158] sm:$0xff]
        %v1132 = vld [vmem:[%s1087 + $0x160] sm:$0xff]
        %v1133 = vld [vmem:[%s1087 + $0x168] sm:$0xff]
        %v1134 = vld [vmem:[%s1087 + $0x170] sm:$0xff]
        %v1135 = vld [vmem:[%s1087 + $0x178] sm:$0xff]
        %v1136 = vld [vmem:[%s1087 + $0x180] sm:$0xff]
        %v1137 = vld [vmem:[%s1087 + $0x188] sm:$0xff]
        %v1138 = vld [vmem:[%s1087 + $0x190] sm:$0xff]
        %v1139 = vld [vmem:[%s1087 + $0x198] sm:$0xff]
        %v1140 = vld [vmem:[%s1087 + $0x1a0] sm:$0xff]
        %v1141 = vld [vmem:[%s1087 + $0x1a8] sm:$0xff]
        %v1142 = vld [vmem:[%s1087 + $0x1b0] sm:$0xff]
        %v1143 = vld [vmem:[%s1087 + $0x1b8] sm:$0xff]
        %v1144 = vld [vmem:[%s1087 + $0x1c0] sm:$0xff]
        %v1145 = vld [vmem:[%s1087 + $0x1c8] sm:$0xff]
        %v1146 = vld [vmem:[%s1087 + $0x1d0] sm:$0xff]
        %v1147 = vld [vmem:[%s1087 + $0x1d8] sm:$0xff]
        %v1148 = vld [vmem:[%s1087 + $0x1e0] sm:$0xff]
        %v1149 = vld [vmem:[%s1087 + $0x1e8] sm:$0xff]
        %v1150 = vld [vmem:[%s1087 + $0x1f0] sm:$0xff]
        %v1151 = vld [vmem:[%s1087 + $0x1f8] sm:$0xff]
        %vm1152 = vcmp.ne.s32.totalorder %v1079, 0
        %vm1153 = vcmp.ne.s32.totalorder %v1080, 0
        %vm1154 = vcmp.ne.s32.totalorder %v1081, 0
        %vm1155 = vcmp.ne.s32.totalorder %v1082, 0
        %v1156 = vrot.slane %v1022, 7
        %v1157 = vrot.slane %v1023, 7
        %v1158 = vrot.slane %v1024, 7
        %v1159 = vrot.slane %v1025, 7
        %v1160 = vrot.slane %v1026, 7
        %v1161 = vrot.slane %v1027, 7
        %v1162 = vrot.slane %v1028, 7
        %v1163 = vrot.slane %v1029, 7
        %vm1164 = vcmp.lt.s32.totalorder %v1031, 1
        %v1165 = vsel %vm1164, %v1160, %v1162
        %v1166 = vsel %vm1164, %v1161, %v1163
        %v1167 = vsel %vm1164, %v1158, %v1160
        %v1168 = vsel %vm1164, %v1159, %v1161
        %v1169 = vsel %vm1164, %v1156, %v1158
        %v1170 = vsel %vm1164, %v1157, %v1159
        %v1171 = vsel %vm1164, %v1162, %v1156
        %v1172 = vsel %vm1164, %v1163, %v1157
        %v1173 = vsel %vm1152, 1, 0
        %v1174 = vsel %vm1153, 1, 0
        %v1175 = vsel %vm1154, 1, 0
        %v1176 = vsel %vm1155, 1, 0
        %vm1177 = vcmp.eq.s32.totalorder %v1173, 1
        %vm1178 = vcmp.eq.s32.totalorder %v1174, 1
        %vm1179 = vcmp.eq.s32.totalorder %v1175, 1
        %vm1180 = vcmp.eq.s32.totalorder %v1176, 1
        %v1181 = vsel %vm1177, %v1171, 0.0
        %v1182 = vsel %vm1177, %v1172, 0.0
        %v1183 = vsel %vm1178, %v1169, 0.0
        %v1184 = vsel %vm1178, %v1170, 0.0
        %v1185 = vsel %vm1179, %v1167, 0.0
        %v1186 = vsel %vm1179, %v1168, 0.0
        %v1187 = vsel %vm1180, %v1165, 0.0
        %v1188 = vsel %vm1180, %v1166, 0.0
        %v1189 = vpack.c.bf16 %v1183, %v1181
        %v1190 = vpack.c.bf16 %v1184, %v1182
        %v1191 = vpack.c.bf16 %v1187, %v1185
        %v1192 = vpack.c.bf16 %v1188, %v1186
        %v1193 = vld [vmem:[#allocation2] sm:$0xff]
        %v1194 = vld [vmem:[#allocation2 + $0x8] sm:$0xff]
        %v1195 = vld [vmem:[#allocation2 + $0x10] sm:$0xff]
        %v1196 = vld [vmem:[#allocation2 + $0x18] sm:$0xff]
        %v1197 = vld [vmem:[#allocation2 + $0x20] sm:$0xff]
        %v1198 = vld [vmem:[#allocation2 + $0x28] sm:$0xff]
        %v1199 = vld [vmem:[#allocation2 + $0x30] sm:$0xff]
        %v1200 = vld [vmem:[#allocation2 + $0x38] sm:$0xff]
        %v1201 = vld [vmem:[#allocation2 + $0x40] sm:$0xff]
        %v1202 = vld [vmem:[#allocation2 + $0x48] sm:$0xff]
        %v1203 = vld [vmem:[#allocation2 + $0x50] sm:$0xff]
        %v1204 = vld [vmem:[#allocation2 + $0x58] sm:$0xff]
        %v1205 = vld [vmem:[#allocation2 + $0x60] sm:$0xff]
        %v1206 = vld [vmem:[#allocation2 + $0x68] sm:$0xff]
        %v1207 = vld [vmem:[#allocation2 + $0x70] sm:$0xff]
        %v1208 = vld [vmem:[#allocation2 + $0x78] sm:$0xff]
        %v1209 = vld [vmem:[#allocation2 + $0x80] sm:$0xff]
        %v1210 = vld [vmem:[#allocation2 + $0x88] sm:$0xff]
        %v1211 = vld [vmem:[#allocation2 + $0x90] sm:$0xff]
        %v1212 = vld [vmem:[#allocation2 + $0x98] sm:$0xff]
        %v1213 = vld [vmem:[#allocation2 + $0xa0] sm:$0xff]
        %v1214 = vld [vmem:[#allocation2 + $0xa8] sm:$0xff]
        %v1215 = vld [vmem:[#allocation2 + $0xb0] sm:$0xff]
        %v1216 = vld [vmem:[#allocation2 + $0xb8] sm:$0xff]
        %v1217 = vld [vmem:[#allocation2 + $0xc0] sm:$0xff]
        %v1218 = vld [vmem:[#allocation2 + $0xc8] sm:$0xff]
        %v1219 = vld [vmem:[#allocation2 + $0xd0] sm:$0xff]
        %v1220 = vld [vmem:[#allocation2 + $0xd8] sm:$0xff]
        %v1221 = vld [vmem:[#allocation2 + $0xe0] sm:$0xff]
        %v1222 = vld [vmem:[#allocation2 + $0xe8] sm:$0xff]
        %v1223 = vld [vmem:[#allocation2 + $0xf0] sm:$0xff]
        %v1224 = vld [vmem:[#allocation2 + $0xf8] sm:$0xff]
        %v1225 = vld [vmem:[#allocation2 + $0x100] sm:$0xff]
        %v1226 = vld [vmem:[#allocation2 + $0x108] sm:$0xff]
        %v1227 = vld [vmem:[#allocation2 + $0x110] sm:$0xff]
        %v1228 = vld [vmem:[#allocation2 + $0x118] sm:$0xff]
        %v1229 = vld [vmem:[#allocation2 + $0x120] sm:$0xff]
        %v1230 = vld [vmem:[#allocation2 + $0x128] sm:$0xff]
        %v1231 = vld [vmem:[#allocation2 + $0x130] sm:$0xff]
        %v1232 = vld [vmem:[#allocation2 + $0x138] sm:$0xff]
        %v1233 = vld [vmem:[#allocation2 + $0x140] sm:$0xff]
        %v1234 = vld [vmem:[#allocation2 + $0x148] sm:$0xff]
        %v1235 = vld [vmem:[#allocation2 + $0x150] sm:$0xff]
        %v1236 = vld [vmem:[#allocation2 + $0x158] sm:$0xff]
        %v1237 = vld [vmem:[#allocation2 + $0x160] sm:$0xff]
        %v1238 = vld [vmem:[#allocation2 + $0x168] sm:$0xff]
        %v1239 = vld [vmem:[#allocation2 + $0x170] sm:$0xff]
        %v1240 = vld [vmem:[#allocation2 + $0x178] sm:$0xff]
        %v1241 = vld [vmem:[#allocation2 + $0x180] sm:$0xff]
        %v1242 = vld [vmem:[#allocation2 + $0x188] sm:$0xff]
        %v1243 = vld [vmem:[#allocation2 + $0x190] sm:$0xff]
        %v1244 = vld [vmem:[#allocation2 + $0x198] sm:$0xff]
        %v1245 = vld [vmem:[#allocation2 + $0x1a0] sm:$0xff]
        %v1246 = vld [vmem:[#allocation2 + $0x1a8] sm:$0xff]
        %v1247 = vld [vmem:[#allocation2 + $0x1b0] sm:$0xff]
        %v1248 = vld [vmem:[#allocation2 + $0x1b8] sm:$0xff]
        %v1249 = vld [vmem:[#allocation2 + $0x1c0] sm:$0xff]
        %v1250 = vld [vmem:[#allocation2 + $0x1c8] sm:$0xff]
        %v1251 = vld [vmem:[#allocation2 + $0x1d0] sm:$0xff]
        %v1252 = vld [vmem:[#allocation2 + $0x1d8] sm:$0xff]
        %v1253 = vld [vmem:[#allocation2 + $0x1e0] sm:$0xff]
        %v1254 = vld [vmem:[#allocation2 + $0x1e8] sm:$0xff]
        %v1255 = vld [vmem:[#allocation2 + $0x1f0] sm:$0xff]
        %v1256 = vld [vmem:[#allocation2 + $0x1f8] sm:$0xff]
        %v1321 = vunpack.c.l.b16 %v1193
        %v1322 = vunpack.c.h.b16 %v1193
        %v1323 = vunpack.c.l.b16 %v1194
        %v1324 = vunpack.c.h.b16 %v1194
        %v1325 = vunpack.c.l.b16 %v1195
        %v1326 = vunpack.c.h.b16 %v1195
        %v1327 = vunpack.c.l.b16 %v1196
        %v1328 = vunpack.c.h.b16 %v1196
        %v1329 = vunpack.c.l.b16 %v1197
        %v1330 = vunpack.c.h.b16 %v1197
        %v1331 = vunpack.c.l.b16 %v1198
        %v1332 = vunpack.c.h.b16 %v1198
        %v1333 = vunpack.c.l.b16 %v1199
        %v1334 = vunpack.c.h.b16 %v1199
        %v1335 = vunpack.c.l.b16 %v1200
        %v1336 = vunpack.c.h.b16 %v1200
        %v1337 = vunpack.c.l.b16 %v1201
        %v1338 = vunpack.c.h.b16 %v1201
        %v1339 = vunpack.c.l.b16 %v1202
        %v1340 = vunpack.c.h.b16 %v1202
        %v1341 = vunpack.c.l.b16 %v1203
        %v1342 = vunpack.c.h.b16 %v1203
        %v1343 = vunpack.c.l.b16 %v1204
        %v1344 = vunpack.c.h.b16 %v1204
        %v1345 = vunpack.c.l.b16 %v1205
        %v1346 = vunpack.c.h.b16 %v1205
        %v1347 = vunpack.c.l.b16 %v1206
        %v1348 = vunpack.c.h.b16 %v1206
        %v1349 = vunpack.c.l.b16 %v1207
        %v1350 = vunpack.c.h.b16 %v1207
        %v1351 = vunpack.c.l.b16 %v1208
        %v1352 = vunpack.c.h.b16 %v1208
        %v1353 = vunpack.c.l.b16 %v1209
        %v1354 = vunpack.c.h.b16 %v1209
        %v1355 = vunpack.c.l.b16 %v1210
        %v1356 = vunpack.c.h.b16 %v1210
        %v1357 = vunpack.c.l.b16 %v1211
        %v1358 = vunpack.c.h.b16 %v1211
        %v1359 = vunpack.c.l.b16 %v1212
        %v1360 = vunpack.c.h.b16 %v1212
        %v1361 = vunpack.c.l.b16 %v1213
        %v1362 = vunpack.c.h.b16 %v1213
        %v1363 = vunpack.c.l.b16 %v1214
        %v1364 = vunpack.c.h.b16 %v1214
        %v1365 = vunpack.c.l.b16 %v1215
        %v1366 = vunpack.c.h.b16 %v1215
        %v1367 = vunpack.c.l.b16 %v1216
        %v1368 = vunpack.c.h.b16 %v1216
        %v1369 = vunpack.c.l.b16 %v1217
        %v1370 = vunpack.c.h.b16 %v1217
        %v1371 = vunpack.c.l.b16 %v1218
        %v1372 = vunpack.c.h.b16 %v1218
        %v1373 = vunpack.c.l.b16 %v1219
        %v1374 = vunpack.c.h.b16 %v1219
        %v1375 = vunpack.c.l.b16 %v1220
        %v1376 = vunpack.c.h.b16 %v1220
        %v1377 = vunpack.c.l.b16 %v1221
        %v1378 = vunpack.c.h.b16 %v1221
        %v1379 = vunpack.c.l.b16 %v1222
        %v1380 = vunpack.c.h.b16 %v1222
        %v1381 = vunpack.c.l.b16 %v1223
        %v1382 = vunpack.c.h.b16 %v1223
        %v1383 = vunpack.c.l.b16 %v1224
        %v1384 = vunpack.c.h.b16 %v1224
        %v1385 = vunpack.c.l.b16 %v1225
        %v1386 = vunpack.c.h.b16 %v1225
        %v1387 = vunpack.c.l.b16 %v1226
        %v1388 = vunpack.c.h.b16 %v1226
        %v1389 = vunpack.c.l.b16 %v1227
        %v1390 = vunpack.c.h.b16 %v1227
        %v1391 = vunpack.c.l.b16 %v1228
        %v1392 = vunpack.c.h.b16 %v1228
        %v1393 = vunpack.c.l.b16 %v1229
        %v1394 = vunpack.c.h.b16 %v1229
        %v1395 = vunpack.c.l.b16 %v1230
        %v1396 = vunpack.c.h.b16 %v1230
        %v1397 = vunpack.c.l.b16 %v1231
        %v1398 = vunpack.c.h.b16 %v1231
        %v1399 = vunpack.c.l.b16 %v1232
        %v1400 = vunpack.c.h.b16 %v1232
        %v1401 = vunpack.c.l.b16 %v1233
        %v1402 = vunpack.c.h.b16 %v1233
        %v1403 = vunpack.c.l.b16 %v1234
        %v1404 = vunpack.c.h.b16 %v1234
        %v1405 = vunpack.c.l.b16 %v1235
        %v1406 = vunpack.c.h.b16 %v1235
        %v1407 = vunpack.c.l.b16 %v1236
        %v1408 = vunpack.c.h.b16 %v1236
        %v1409 = vunpack.c.l.b16 %v1237
        %v1410 = vunpack.c.h.b16 %v1237
        %v1411 = vunpack.c.l.b16 %v1238
        %v1412 = vunpack.c.h.b16 %v1238
        %v1413 = vunpack.c.l.b16 %v1239
        %v1414 = vunpack.c.h.b16 %v1239
        %v1415 = vunpack.c.l.b16 %v1240
        %v1416 = vunpack.c.h.b16 %v1240
        %v1417 = vunpack.c.l.b16 %v1241
        %v1418 = vunpack.c.h.b16 %v1241
        %v1419 = vunpack.c.l.b16 %v1242
        %v1420 = vunpack.c.h.b16 %v1242
        %v1421 = vunpack.c.l.b16 %v1243
        %v1422 = vunpack.c.h.b16 %v1243
        %v1423 = vunpack.c.l.b16 %v1244
        %v1424 = vunpack.c.h.b16 %v1244
        %v1425 = vunpack.c.l.b16 %v1245
        %v1426 = vunpack.c.h.b16 %v1245
        %v1427 = vunpack.c.l.b16 %v1246
        %v1428 = vunpack.c.h.b16 %v1246
        %v1429 = vunpack.c.l.b16 %v1247
        %v1430 = vunpack.c.h.b16 %v1247
        %v1431 = vunpack.c.l.b16 %v1248
        %v1432 = vunpack.c.h.b16 %v1248
        %v1433 = vunpack.c.l.b16 %v1249
        %v1434 = vunpack.c.h.b16 %v1249
        %v1435 = vunpack.c.l.b16 %v1250
        %v1436 = vunpack.c.h.b16 %v1250
        %v1437 = vunpack.c.l.b16 %v1251
        %v1438 = vunpack.c.h.b16 %v1251
        %v1439 = vunpack.c.l.b16 %v1252
        %v1440 = vunpack.c.h.b16 %v1252
        %v1441 = vunpack.c.l.b16 %v1253
        %v1442 = vunpack.c.h.b16 %v1253
        %v1443 = vunpack.c.l.b16 %v1254
        %v1444 = vunpack.c.h.b16 %v1254
        %v1445 = vunpack.c.l.b16 %v1255
        %v1446 = vunpack.c.h.b16 %v1255
        %v1447 = vunpack.c.l.b16 %v1256
        %v1448 = vunpack.c.h.b16 %v1256
        %v1449 = vpack.c.b16 %v1325, %v1321
        %v1450 = vpack.c.b16 %v1326, %v1322
        %v1451 = vpack.c.b16 %v1327, %v1323
        %v1452 = vpack.c.b16 %v1328, %v1324
        %v1453 = vpack.c.b16 %v1333, %v1329
        %v1454 = vpack.c.b16 %v1334, %v1330
        %v1455 = vpack.c.b16 %v1335, %v1331
        %v1456 = vpack.c.b16 %v1336, %v1332
        %v1457 = vpack.c.b16 %v1341, %v1337
        %v1458 = vpack.c.b16 %v1342, %v1338
        %v1459 = vpack.c.b16 %v1343, %v1339
        %v1460 = vpack.c.b16 %v1344, %v1340
        %v1461 = vpack.c.b16 %v1349, %v1345
        %v1462 = vpack.c.b16 %v1350, %v1346
        %v1463 = vpack.c.b16 %v1351, %v1347
        %v1464 = vpack.c.b16 %v1352, %v1348
        %v1465 = vpack.c.b16 %v1357, %v1353
        %v1466 = vpack.c.b16 %v1358, %v1354
        %v1467 = vpack.c.b16 %v1359, %v1355
        %v1468 = vpack.c.b16 %v1360, %v1356
        %v1469 = vpack.c.b16 %v1365, %v1361
        %v1470 = vpack.c.b16 %v1366, %v1362
        %v1471 = vpack.c.b16 %v1367, %v1363
        %v1472 = vpack.c.b16 %v1368, %v1364
        %v1473 = vpack.c.b16 %v1373, %v1369
        %v1474 = vpack.c.b16 %v1374, %v1370
        %v1475 = vpack.c.b16 %v1375, %v1371
        %v1476 = vpack.c.b16 %v1376, %v1372
        %v1477 = vpack.c.b16 %v1381, %v1377
        %v1478 = vpack.c.b16 %v1382, %v1378
        %v1479 = vpack.c.b16 %v1383, %v1379
        %v1480 = vpack.c.b16 %v1384, %v1380
        %v1481 = vpack.c.b16 %v1389, %v1385
        %v1482 = vpack.c.b16 %v1390, %v1386
        %v1483 = vpack.c.b16 %v1391, %v1387
        %v1484 = vpack.c.b16 %v1392, %v1388
        %v1485 = vpack.c.b16 %v1397, %v1393
        %v1486 = vpack.c.b16 %v1398, %v1394
        %v1487 = vpack.c.b16 %v1399, %v1395
        %v1488 = vpack.c.b16 %v1400, %v1396
        %v1489 = vpack.c.b16 %v1405, %v1401
        %v1490 = vpack.c.b16 %v1406, %v1402
        %v1491 = vpack.c.b16 %v1407, %v1403
        %v1492 = vpack.c.b16 %v1408, %v1404
        %v1493 = vpack.c.b16 %v1413, %v1409
        %v1494 = vpack.c.b16 %v1414, %v1410
        %v1495 = vpack.c.b16 %v1415, %v1411
        %v1496 = vpack.c.b16 %v1416, %v1412
        %v1497 = vpack.c.b16 %v1421, %v1417
        %v1498 = vpack.c.b16 %v1422, %v1418
        %v1499 = vpack.c.b16 %v1423, %v1419
        %v1500 = vpack.c.b16 %v1424, %v1420
        %v1501 = vpack.c.b16 %v1429, %v1425
        %v1502 = vpack.c.b16 %v1430, %v1426
        %v1503 = vpack.c.b16 %v1431, %v1427
        %v1504 = vpack.c.b16 %v1432, %v1428
        %v1505 = vpack.c.b16 %v1437, %v1433
        %v1506 = vpack.c.b16 %v1438, %v1434
        %v1507 = vpack.c.b16 %v1439, %v1435
        %v1508 = vpack.c.b16 %v1440, %v1436
        %v1509 = vpack.c.b16 %v1445, %v1441
        %v1510 = vpack.c.b16 %v1446, %v1442
        %v1511 = vpack.c.b16 %v1447, %v1443
        %v1512 = vpack.c.b16 %v1448, %v1444
        %1577 = vmatpush.bf16.msra.mxu0 %v1477
        %1578 = vmatpush.bf16.msra.mxu0 %v1473
        %1579 = vmatpush.bf16.msra.mxu0 %v1469
        %1580 = vmatpush.bf16.msra.mxu0 %v1465
        %1581 = vmatpush.bf16.msra.mxu0 %v1461
        %1582 = vmatpush.bf16.msra.mxu0 %v1457
        %1583 = vmatpush.bf16.msra.mxu0 %v1453
        %1584 = vmatpush.bf16.msra.mxu0 %v1449
        %1585 = vmatmul.bf16.gmra.mxu0 %v1189
        %v1586 = vpop.f32.mrf.mxu0
        %v1587 = vadd.f32 0.0, %v1586
        %v1588 = vpop.f32.mrf.mxu0
        %v1589 = vadd.f32 0.0, %v1588
        %1590 = vmatmul.bf16.gmra.mxu0 %v1191
        %v1591 = vpop.f32.mrf.mxu0
        %v1592 = vadd.f32 0.0, %v1591
        %v1593 = vpop.f32.mrf.mxu0
        %v1594 = vadd.f32 0.0, %v1593
        %1595 = vdwg.mxu0
        %1596 = vmatpush.bf16.msra.mxu0 %v1509
        %1597 = vmatpush.bf16.msra.mxu0 %v1505
        %1598 = vmatpush.bf16.msra.mxu0 %v1501
        %1599 = vmatpush.bf16.msra.mxu0 %v1497
        %1600 = vmatpush.bf16.msra.mxu0 %v1493
        %1601 = vmatpush.bf16.msra.mxu0 %v1489
        %1602 = vmatpush.bf16.msra.mxu0 %v1485
        %1603 = vmatpush.bf16.msra.mxu0 %v1481
        %1604 = vmatmul.bf16.gmra.mxu0 %v1190
        %v1605 = vpop.f32.mrf.mxu0
        %v1606 = vadd.f32 %v1587, %v1605
        %v1607 = vpop.f32.mrf.mxu0
        %v1608 = vadd.f32 %v1589, %v1607
        %1609 = vmatmul.bf16.gmra.mxu0 %v1192
        %v1610 = vpop.f32.mrf.mxu0
        %v1611 = vadd.f32 %v1592, %v1610
        %v1612 = vpop.f32.mrf.mxu0
        %v1613 = vadd.f32 %v1594, %v1612
        %1614 = vdwg.mxu0
        %1615 = vmatpush.bf16.msra.mxu0 %v1478
        %1616 = vmatpush.bf16.msra.mxu0 %v1474
        %1617 = vmatpush.bf16.msra.mxu0 %v1470
        %1618 = vmatpush.bf16.msra.mxu0 %v1466
        %1619 = vmatpush.bf16.msra.mxu0 %v1462
        %1620 = vmatpush.bf16.msra.mxu0 %v1458
        %1621 = vmatpush.bf16.msra.mxu0 %v1454
        %1622 = vmatpush.bf16.msra.mxu0 %v1450
        %1623 = vmatmul.bf16.gmra.mxu0 %v1189
        %v1624 = vpop.f32.mrf.mxu0
        %v1625 = vadd.f32 0.0, %v1624
        %v1626 = vpop.f32.mrf.mxu0
        %v1627 = vadd.f32 0.0, %v1626
        %1628 = vmatmul.bf16.gmra.mxu0 %v1191
        %v1629 = vpop.f32.mrf.mxu0
        %v1630 = vadd.f32 0.0, %v1629
        %v1631 = vpop.f32.mrf.mxu0
        %v1632 = vadd.f32 0.0, %v1631
        %1633 = vdwg.mxu0
        %1634 = vmatpush.bf16.msra.mxu0 %v1510
        %1635 = vmatpush.bf16.msra.mxu0 %v1506
        %1636 = vmatpush.bf16.msra.mxu0 %v1502
        %1637 = vmatpush.bf16.msra.mxu0 %v1498
        %1638 = vmatpush.bf16.msra.mxu0 %v1494
        %1639 = vmatpush.bf16.msra.mxu0 %v1490
        %1640 = vmatpush.bf16.msra.mxu0 %v1486
        %1641 = vmatpush.bf16.msra.mxu0 %v1482
        %1642 = vmatmul.bf16.gmra.mxu0 %v1190
        %v1643 = vpop.f32.mrf.mxu0
        %v1644 = vadd.f32 %v1625, %v1643
        %v1645 = vpop.f32.mrf.mxu0
        %v1646 = vadd.f32 %v1627, %v1645
        %1647 = vmatmul.bf16.gmra.mxu0 %v1192
        %v1648 = vpop.f32.mrf.mxu0
        %v1649 = vadd.f32 %v1630, %v1648
        %v1650 = vpop.f32.mrf.mxu0
        %v1651 = vadd.f32 %v1632, %v1650
        %1652 = vdwg.mxu0
        %1653 = vmatpush.bf16.msra.mxu0 %v1479
        %1654 = vmatpush.bf16.msra.mxu0 %v1475
        %1655 = vmatpush.bf16.msra.mxu0 %v1471
        %1656 = vmatpush.bf16.msra.mxu0 %v1467
        %1657 = vmatpush.bf16.msra.mxu0 %v1463
        %1658 = vmatpush.bf16.msra.mxu0 %v1459
        %1659 = vmatpush.bf16.msra.mxu0 %v1455
        %1660 = vmatpush.bf16.msra.mxu0 %v1451
        %1661 = vmatmul.bf16.gmra.mxu0 %v1189
        %v1662 = vpop.f32.mrf.mxu0
        %v1663 = vadd.f32 0.0, %v1662
        %v1664 = vpop.f32.mrf.mxu0
        %v1665 = vadd.f32 0.0, %v1664
        %1666 = vmatmul.bf16.gmra.mxu0 %v1191
        %v1667 = vpop.f32.mrf.mxu0
        %v1668 = vadd.f32 0.0, %v1667
        %v1669 = vpop.f32.mrf.mxu0
        %v1670 = vadd.f32 0.0, %v1669
        %1671 = vdwg.mxu0
        %1672 = vmatpush.bf16.msra.mxu0 %v1511
        %1673 = vmatpush.bf16.msra.mxu0 %v1507
        %1674 = vmatpush.bf16.msra.mxu0 %v1503
        %1675 = vmatpush.bf16.msra.mxu0 %v1499
        %1676 = vmatpush.bf16.msra.mxu0 %v1495
        %1677 = vmatpush.bf16.msra.mxu0 %v1491
        %1678 = vmatpush.bf16.msra.mxu0 %v1487
        %1679 = vmatpush.bf16.msra.mxu0 %v1483
        %1680 = vmatmul.bf16.gmra.mxu0 %v1190
        %v1681 = vpop.f32.mrf.mxu0
        %v1682 = vadd.f32 %v1663, %v1681
        %v1683 = vpop.f32.mrf.mxu0
        %v1684 = vadd.f32 %v1665, %v1683
        %1685 = vmatmul.bf16.gmra.mxu0 %v1192
        %v1686 = vpop.f32.mrf.mxu0
        %v1687 = vadd.f32 %v1668, %v1686
        %v1688 = vpop.f32.mrf.mxu0
        %v1689 = vadd.f32 %v1670, %v1688
        %1690 = vdwg.mxu0
        %1691 = vmatpush.bf16.msra.mxu0 %v1480
        %1692 = vmatpush.bf16.msra.mxu0 %v1476
        %1693 = vmatpush.bf16.msra.mxu0 %v1472
        %1694 = vmatpush.bf16.msra.mxu0 %v1468
        %1695 = vmatpush.bf16.msra.mxu0 %v1464
        %1696 = vmatpush.bf16.msra.mxu0 %v1460
        %1697 = vmatpush.bf16.msra.mxu0 %v1456
        %1698 = vmatpush.bf16.msra.mxu0 %v1452
        %1699 = vmatmul.bf16.gmra.mxu0 %v1189
        %v1700 = vpop.f32.mrf.mxu0
        %v1701 = vadd.f32 0.0, %v1700
        %v1702 = vpop.f32.mrf.mxu0
        %v1703 = vadd.f32 0.0, %v1702
        %1704 = vmatmul.bf16.gmra.mxu0 %v1191
        %v1705 = vpop.f32.mrf.mxu0
        %v1706 = vadd.f32 0.0, %v1705
        %v1707 = vpop.f32.mrf.mxu0
        %v1708 = vadd.f32 0.0, %v1707
        %1709 = vdwg.mxu0
        %1710 = vmatpush.bf16.msra.mxu0 %v1512
        %1711 = vmatpush.bf16.msra.mxu0 %v1508
        %1712 = vmatpush.bf16.msra.mxu0 %v1504
        %1713 = vmatpush.bf16.msra.mxu0 %v1500
        %1714 = vmatpush.bf16.msra.mxu0 %v1496
        %1715 = vmatpush.bf16.msra.mxu0 %v1492
        %1716 = vmatpush.bf16.msra.mxu0 %v1488
        %1717 = vmatpush.bf16.msra.mxu0 %v1484
        %1718 = vmatmul.bf16.gmra.mxu0 %v1190
        %v1719 = vpop.f32.mrf.mxu0
        %v1720 = vadd.f32 %v1701, %v1719
        %v1721 = vpop.f32.mrf.mxu0
        %v1722 = vadd.f32 %v1703, %v1721
        %1723 = vmatmul.bf16.gmra.mxu0 %v1192
        %v1724 = vpop.f32.mrf.mxu0
        %v1725 = vadd.f32 %v1706, %v1724
        %v1726 = vpop.f32.mrf.mxu0
        %v1727 = vadd.f32 %v1708, %v1726
        %1728 = vdwg.mxu0
        %v1793 = vunpack.c.l.b16 %v1088
        %v1794 = vunpack.c.h.b16 %v1088
        %v1795 = vunpack.c.l.b16 %v1089
        %v1796 = vunpack.c.h.b16 %v1089
        %v1797 = vunpack.c.l.b16 %v1090
        %v1798 = vunpack.c.h.b16 %v1090
        %v1799 = vunpack.c.l.b16 %v1091
        %v1800 = vunpack.c.h.b16 %v1091
        %v1801 = vunpack.c.l.b16 %v1092
        %v1802 = vunpack.c.h.b16 %v1092
        %v1803 = vunpack.c.l.b16 %v1093
        %v1804 = vunpack.c.h.b16 %v1093
        %v1805 = vunpack.c.l.b16 %v1094
        %v1806 = vunpack.c.h.b16 %v1094
        %v1807 = vunpack.c.l.b16 %v1095
        %v1808 = vunpack.c.h.b16 %v1095
        %v1809 = vunpack.c.l.b16 %v1096
        %v1810 = vunpack.c.h.b16 %v1096
        %v1811 = vunpack.c.l.b16 %v1097
        %v1812 = vunpack.c.h.b16 %v1097
        %v1813 = vunpack.c.l.b16 %v1098
        %v1814 = vunpack.c.h.b16 %v1098
        %v1815 = vunpack.c.l.b16 %v1099
        %v1816 = vunpack.c.h.b16 %v1099
        %v1817 = vunpack.c.l.b16 %v1100
        %v1818 = vunpack.c.h.b16 %v1100
        %v1819 = vunpack.c.l.b16 %v1101
        %v1820 = vunpack.c.h.b16 %v1101
        %v1821 = vunpack.c.l.b16 %v1102
        %v1822 = vunpack.c.h.b16 %v1102
        %v1823 = vunpack.c.l.b16 %v1103
        %v1824 = vunpack.c.h.b16 %v1103
        %v1825 = vunpack.c.l.b16 %v1104
        %v1826 = vunpack.c.h.b16 %v1104
        %v1827 = vunpack.c.l.b16 %v1105
        %v1828 = vunpack.c.h.b16 %v1105
        %v1829 = vunpack.c.l.b16 %v1106
        %v1830 = vunpack.c.h.b16 %v1106
        %v1831 = vunpack.c.l.b16 %v1107
        %v1832 = vunpack.c.h.b16 %v1107
        %v1833 = vunpack.c.l.b16 %v1108
        %v1834 = vunpack.c.h.b16 %v1108
        %v1835 = vunpack.c.l.b16 %v1109
        %v1836 = vunpack.c.h.b16 %v1109
        %v1837 = vunpack.c.l.b16 %v1110
        %v1838 = vunpack.c.h.b16 %v1110
        %v1839 = vunpack.c.l.b16 %v1111
        %v1840 = vunpack.c.h.b16 %v1111
        %v1841 = vunpack.c.l.b16 %v1112
        %v1842 = vunpack.c.h.b16 %v1112
        %v1843 = vunpack.c.l.b16 %v1113
        %v1844 = vunpack.c.h.b16 %v1113
        %v1845 = vunpack.c.l.b16 %v1114
        %v1846 = vunpack.c.h.b16 %v1114
        %v1847 = vunpack.c.l.b16 %v1115
        %v1848 = vunpack.c.h.b16 %v1115
        %v1849 = vunpack.c.l.b16 %v1116
        %v1850 = vunpack.c.h.b16 %v1116
        %v1851 = vunpack.c.l.b16 %v1117
        %v1852 = vunpack.c.h.b16 %v1117
        %v1853 = vunpack.c.l.b16 %v1118
        %v1854 = vunpack.c.h.b16 %v1118
        %v1855 = vunpack.c.l.b16 %v1119
        %v1856 = vunpack.c.h.b16 %v1119
        %v1857 = vunpack.c.l.b16 %v1120
        %v1858 = vunpack.c.h.b16 %v1120
        %v1859 = vunpack.c.l.b16 %v1121
        %v1860 = vunpack.c.h.b16 %v1121
        %v1861 = vunpack.c.l.b16 %v1122
        %v1862 = vunpack.c.h.b16 %v1122
        %v1863 = vunpack.c.l.b16 %v1123
        %v1864 = vunpack.c.h.b16 %v1123
        %v1865 = vunpack.c.l.b16 %v1124
        %v1866 = vunpack.c.h.b16 %v1124
        %v1867 = vunpack.c.l.b16 %v1125
        %v1868 = vunpack.c.h.b16 %v1125
        %v1869 = vunpack.c.l.b16 %v1126
        %v1870 = vunpack.c.h.b16 %v1126
        %v1871 = vunpack.c.l.b16 %v1127
        %v1872 = vunpack.c.h.b16 %v1127
        %v1873 = vunpack.c.l.b16 %v1128
        %v1874 = vunpack.c.h.b16 %v1128
        %v1875 = vunpack.c.l.b16 %v1129
        %v1876 = vunpack.c.h.b16 %v1129
        %v1877 = vunpack.c.l.b16 %v1130
        %v1878 = vunpack.c.h.b16 %v1130
        %v1879 = vunpack.c.l.b16 %v1131
        %v1880 = vunpack.c.h.b16 %v1131
        %v1881 = vunpack.c.l.b16 %v1132
        %v1882 = vunpack.c.h.b16 %v1132
        %v1883 = vunpack.c.l.b16 %v1133
        %v1884 = vunpack.c.h.b16 %v1133
        %v1885 = vunpack.c.l.b16 %v1134
        %v1886 = vunpack.c.h.b16 %v1134
        %v1887 = vunpack.c.l.b16 %v1135
        %v1888 = vunpack.c.h.b16 %v1135
        %v1889 = vunpack.c.l.b16 %v1136
        %v1890 = vunpack.c.h.b16 %v1136
        %v1891 = vunpack.c.l.b16 %v1137
        %v1892 = vunpack.c.h.b16 %v1137
        %v1893 = vunpack.c.l.b16 %v1138
        %v1894 = vunpack.c.h.b16 %v1138
        %v1895 = vunpack.c.l.b16 %v1139
        %v1896 = vunpack.c.h.b16 %v1139
        %v1897 = vunpack.c.l.b16 %v1140
        %v1898 = vunpack.c.h.b16 %v1140
        %v1899 = vunpack.c.l.b16 %v1141
        %v1900 = vunpack.c.h.b16 %v1141
        %v1901 = vunpack.c.l.b16 %v1142
        %v1902 = vunpack.c.h.b16 %v1142
        %v1903 = vunpack.c.l.b16 %v1143
        %v1904 = vunpack.c.h.b16 %v1143
        %v1905 = vunpack.c.l.b16 %v1144
        %v1906 = vunpack.c.h.b16 %v1144
        %v1907 = vunpack.c.l.b16 %v1145
        %v1908 = vunpack.c.h.b16 %v1145
        %v1909 = vunpack.c.l.b16 %v1146
        %v1910 = vunpack.c.h.b16 %v1146
        %v1911 = vunpack.c.l.b16 %v1147
        %v1912 = vunpack.c.h.b16 %v1147
        %v1913 = vunpack.c.l.b16 %v1148
        %v1914 = vunpack.c.h.b16 %v1148
        %v1915 = vunpack.c.l.b16 %v1149
        %v1916 = vunpack.c.h.b16 %v1149
        %v1917 = vunpack.c.l.b16 %v1150
        %v1918 = vunpack.c.h.b16 %v1150
        %v1919 = vunpack.c.l.b16 %v1151
        %v1920 = vunpack.c.h.b16 %v1151
        %v1921 = vpack.c.b16 %v1797, %v1793
        %v1922 = vpack.c.b16 %v1798, %v1794
        %v1923 = vpack.c.b16 %v1799, %v1795
        %v1924 = vpack.c.b16 %v1800, %v1796
        %v1925 = vpack.c.b16 %v1805, %v1801
        %v1926 = vpack.c.b16 %v1806, %v1802
        %v1927 = vpack.c.b16 %v1807, %v1803
        %v1928 = vpack.c.b16 %v1808, %v1804
        %v1929 = vpack.c.b16 %v1813, %v1809
        %v1930 = vpack.c.b16 %v1814, %v1810
        %v1931 = vpack.c.b16 %v1815, %v1811
        %v1932 = vpack.c.b16 %v1816, %v1812
        %v1933 = vpack.c.b16 %v1821, %v1817
        %v1934 = vpack.c.b16 %v1822, %v1818
        %v1935 = vpack.c.b16 %v1823, %v1819
        %v1936 = vpack.c.b16 %v1824, %v1820
        %v1937 = vpack.c.b16 %v1829, %v1825
        %v1938 = vpack.c.b16 %v1830, %v1826
        %v1939 = vpack.c.b16 %v1831, %v1827
        %v1940 = vpack.c.b16 %v1832, %v1828
        %v1941 = vpack.c.b16 %v1837, %v1833
        %v1942 = vpack.c.b16 %v1838, %v1834
        %v1943 = vpack.c.b16 %v1839, %v1835
        %v1944 = vpack.c.b16 %v1840, %v1836
        %v1945 = vpack.c.b16 %v1845, %v1841
        %v1946 = vpack.c.b16 %v1846, %v1842
        %v1947 = vpack.c.b16 %v1847, %v1843
        %v1948 = vpack.c.b16 %v1848, %v1844
        %v1949 = vpack.c.b16 %v1853, %v1849
        %v1950 = vpack.c.b16 %v1854, %v1850
        %v1951 = vpack.c.b16 %v1855, %v1851
        %v1952 = vpack.c.b16 %v1856, %v1852
        %v1953 = vpack.c.b16 %v1861, %v1857
        %v1954 = vpack.c.b16 %v1862, %v1858
        %v1955 = vpack.c.b16 %v1863, %v1859
        %v1956 = vpack.c.b16 %v1864, %v1860
        %v1957 = vpack.c.b16 %v1869, %v1865
        %v1958 = vpack.c.b16 %v1870, %v1866
        %v1959 = vpack.c.b16 %v1871, %v1867
        %v1960 = vpack.c.b16 %v1872, %v1868
        %v1961 = vpack.c.b16 %v1877, %v1873
        %v1962 = vpack.c.b16 %v1878, %v1874
        %v1963 = vpack.c.b16 %v1879, %v1875
        %v1964 = vpack.c.b16 %v1880, %v1876
        %v1965 = vpack.c.b16 %v1885, %v1881
        %v1966 = vpack.c.b16 %v1886, %v1882
        %v1967 = vpack.c.b16 %v1887, %v1883
        %v1968 = vpack.c.b16 %v1888, %v1884
        %v1969 = vpack.c.b16 %v1893, %v1889
        %v1970 = vpack.c.b16 %v1894, %v1890
        %v1971 = vpack.c.b16 %v1895, %v1891
        %v1972 = vpack.c.b16 %v1896, %v1892
        %v1973 = vpack.c.b16 %v1901, %v1897
        %v1974 = vpack.c.b16 %v1902, %v1898
        %v1975 = vpack.c.b16 %v1903, %v1899
        %v1976 = vpack.c.b16 %v1904, %v1900
        %v1977 = vpack.c.b16 %v1909, %v1905
        %v1978 = vpack.c.b16 %v1910, %v1906
        %v1979 = vpack.c.b16 %v1911, %v1907
        %v1980 = vpack.c.b16 %v1912, %v1908
        %v1981 = vpack.c.b16 %v1917, %v1913
        %v1982 = vpack.c.b16 %v1918, %v1914
        %v1983 = vpack.c.b16 %v1919, %v1915
        %v1984 = vpack.c.b16 %v1920, %v1916
        %2049 = vmatpush.bf16.msra.mxu0 %v1949
        %2050 = vmatpush.bf16.msra.mxu0 %v1945
        %2051 = vmatpush.bf16.msra.mxu0 %v1941
        %2052 = vmatpush.bf16.msra.mxu0 %v1937
        %2053 = vmatpush.bf16.msra.mxu0 %v1933
        %2054 = vmatpush.bf16.msra.mxu0 %v1929
        %2055 = vmatpush.bf16.msra.mxu0 %v1925
        %2056 = vmatpush.bf16.msra.mxu0 %v1921
        %2057 = vmatmul.bf16.gmra.mxu0 %v1083
        %v2058 = vpop.f32.mrf.mxu0
        %v2059 = vadd.f32 %v1606, %v2058
        %v2060 = vpop.f32.mrf.mxu0
        %v2061 = vadd.f32 %v1608, %v2060
        %2062 = vmatmul.bf16.gmra.mxu0 %v1085
        %v2063 = vpop.f32.mrf.mxu0
        %v2064 = vadd.f32 %v1611, %v2063
        %v2065 = vpop.f32.mrf.mxu0
        %v2066 = vadd.f32 %v1613, %v2065
        %2067 = vdwg.mxu0
        %2068 = vmatpush.bf16.msra.mxu0 %v1981
        %2069 = vmatpush.bf16.msra.mxu0 %v1977
        %2070 = vmatpush.bf16.msra.mxu0 %v1973
        %2071 = vmatpush.bf16.msra.mxu0 %v1969
        %2072 = vmatpush.bf16.msra.mxu0 %v1965
        %2073 = vmatpush.bf16.msra.mxu0 %v1961
        %2074 = vmatpush.bf16.msra.mxu0 %v1957
        %2075 = vmatpush.bf16.msra.mxu0 %v1953
        %2076 = vmatmul.bf16.gmra.mxu0 %v1084
        %v2077 = vpop.f32.mrf.mxu0
        %v2078 = vadd.f32 %v2059, %v2077
        %v2079 = vpop.f32.mrf.mxu0
        %v2080 = vadd.f32 %v2061, %v2079
        %2081 = vmatmul.bf16.gmra.mxu0 %v1086
        %v2082 = vpop.f32.mrf.mxu0
        %v2083 = vadd.f32 %v2064, %v2082
        %v2084 = vpop.f32.mrf.mxu0
        %v2085 = vadd.f32 %v2066, %v2084
        %2086 = vdwg.mxu0
        %2087 = vmatpush.bf16.msra.mxu0 %v1950
        %2088 = vmatpush.bf16.msra.mxu0 %v1946
        %2089 = vmatpush.bf16.msra.mxu0 %v1942
        %2090 = vmatpush.bf16.msra.mxu0 %v1938
        %2091 = vmatpush.bf16.msra.mxu0 %v1934
        %2092 = vmatpush.bf16.msra.mxu0 %v1930
        %2093 = vmatpush.bf16.msra.mxu0 %v1926
        %2094 = vmatpush.bf16.msra.mxu0 %v1922
        %2095 = vmatmul.bf16.gmra.mxu0 %v1083
        %v2096 = vpop.f32.mrf.mxu0
        %v2097 = vadd.f32 %v1644, %v2096
        %v2098 = vpop.f32.mrf.mxu0
        %v2099 = vadd.f32 %v1646, %v2098
        %2100 = vmatmul.bf16.gmra.mxu0 %v1085
        %v2101 = vpop.f32.mrf.mxu0
        %v2102 = vadd.f32 %v1649, %v2101
        %v2103 = vpop.f32.mrf.mxu0
        %v2104 = vadd.f32 %v1651, %v2103
        %2105 = vdwg.mxu0
        %2106 = vmatpush.bf16.msra.mxu0 %v1982
        %2107 = vmatpush.bf16.msra.mxu0 %v1978
        %2108 = vmatpush.bf16.msra.mxu0 %v1974
        %2109 = vmatpush.bf16.msra.mxu0 %v1970
        %2110 = vmatpush.bf16.msra.mxu0 %v1966
        %2111 = vmatpush.bf16.msra.mxu0 %v1962
        %2112 = vmatpush.bf16.msra.mxu0 %v1958
        %2113 = vmatpush.bf16.msra.mxu0 %v1954
        %2114 = vmatmul.bf16.gmra.mxu0 %v1084
        %v2115 = vpop.f32.mrf.mxu0
        %v2116 = vadd.f32 %v2097, %v2115
        %v2117 = vpop.f32.mrf.mxu0
        %v2118 = vadd.f32 %v2099, %v2117
        %2119 = vmatmul.bf16.gmra.mxu0 %v1086
        %v2120 = vpop.f32.mrf.mxu0
        %v2121 = vadd.f32 %v2102, %v2120
        %v2122 = vpop.f32.mrf.mxu0
        %v2123 = vadd.f32 %v2104, %v2122
        %2124 = vdwg.mxu0
        %2125 = vmatpush.bf16.msra.mxu0 %v1951
        %2126 = vmatpush.bf16.msra.mxu0 %v1947
        %2127 = vmatpush.bf16.msra.mxu0 %v1943
        %2128 = vmatpush.bf16.msra.mxu0 %v1939
        %2129 = vmatpush.bf16.msra.mxu0 %v1935
        %2130 = vmatpush.bf16.msra.mxu0 %v1931
        %2131 = vmatpush.bf16.msra.mxu0 %v1927
        %2132 = vmatpush.bf16.msra.mxu0 %v1923
        %2133 = vmatmul.bf16.gmra.mxu0 %v1083
        %v2134 = vpop.f32.mrf.mxu0
        %v2135 = vadd.f32 %v1682, %v2134
        %v2136 = vpop.f32.mrf.mxu0
        %v2137 = vadd.f32 %v1684, %v2136
        %2138 = vmatmul.bf16.gmra.mxu0 %v1085
        %v2139 = vpop.f32.mrf.mxu0
        %v2140 = vadd.f32 %v1687, %v2139
        %v2141 = vpop.f32.mrf.mxu0
        %v2142 = vadd.f32 %v1689, %v2141
        %2143 = vdwg.mxu0
        %2144 = vmatpush.bf16.msra.mxu0 %v1983
        %2145 = vmatpush.bf16.msra.mxu0 %v1979
        %2146 = vmatpush.bf16.msra.mxu0 %v1975
        %2147 = vmatpush.bf16.msra.mxu0 %v1971
        %2148 = vmatpush.bf16.msra.mxu0 %v1967
        %2149 = vmatpush.bf16.msra.mxu0 %v1963
        %2150 = vmatpush.bf16.msra.mxu0 %v1959
        %2151 = vmatpush.bf16.msra.mxu0 %v1955
        %2152 = vmatmul.bf16.gmra.mxu0 %v1084
        %v2153 = vpop.f32.mrf.mxu0
        %v2154 = vadd.f32 %v2135, %v2153
        %v2155 = vpop.f32.mrf.mxu0
        %v2156 = vadd.f32 %v2137, %v2155
        %2157 = vmatmul.bf16.gmra.mxu0 %v1086
        %v2158 = vpop.f32.mrf.mxu0
        %v2159 = vadd.f32 %v2140, %v2158
        %v2160 = vpop.f32.mrf.mxu0
        %v2161 = vadd.f32 %v2142, %v2160
        %2162 = vdwg.mxu0
        %2163 = vmatpush.bf16.msra.mxu0 %v1952
        %2164 = vmatpush.bf16.msra.mxu0 %v1948
        %2165 = vmatpush.bf16.msra.mxu0 %v1944
        %2166 = vmatpush.bf16.msra.mxu0 %v1940
        %2167 = vmatpush.bf16.msra.mxu0 %v1936
        %2168 = vmatpush.bf16.msra.mxu0 %v1932
        %2169 = vmatpush.bf16.msra.mxu0 %v1928
        %2170 = vmatpush.bf16.msra.mxu0 %v1924
        %2171 = vmatmul.bf16.gmra.mxu0 %v1083
        %v2172 = vpop.f32.mrf.mxu0
        %v2173 = vadd.f32 %v1720, %v2172
        %v2174 = vpop.f32.mrf.mxu0
        %v2175 = vadd.f32 %v1722, %v2174
        %2176 = vmatmul.bf16.gmra.mxu0 %v1085
        %v2177 = vpop.f32.mrf.mxu0
        %v2178 = vadd.f32 %v1725, %v2177
        %v2179 = vpop.f32.mrf.mxu0
        %v2180 = vadd.f32 %v1727, %v2179
        %2181 = vdwg.mxu0
        %2182 = vmatpush.bf16.msra.mxu0 %v1984
        %2183 = vmatpush.bf16.msra.mxu0 %v1980
        %2184 = vmatpush.bf16.msra.mxu0 %v1976
        %2185 = vmatpush.bf16.msra.mxu0 %v1972
        %2186 = vmatpush.bf16.msra.mxu0 %v1968
        %2187 = vmatpush.bf16.msra.mxu0 %v1964
        %2188 = vmatpush.bf16.msra.mxu0 %v1960
        %2189 = vmatpush.bf16.msra.mxu0 %v1956
        %2190 = vmatmul.bf16.gmra.mxu0 %v1084
        %v2191 = vpop.f32.mrf.mxu0
        %v2192 = vadd.f32 %v2173, %v2191
        %v2193 = vpop.f32.mrf.mxu0
        %v2194 = vadd.f32 %v2175, %v2193
        %2195 = vmatmul.bf16.gmra.mxu0 %v1086
        %v2196 = vpop.f32.mrf.mxu0
        %v2197 = vadd.f32 %v2178, %v2196
        %v2198 = vpop.f32.mrf.mxu0
        %v2199 = vadd.f32 %v2180, %v2198
        %2200 = vdwg.mxu0
        %vm2201 = vcmp.ne.s32.totalorder %v1079, 15
        %vm2202 = vcmp.ne.s32.totalorder %v1080, 15
        %vm2203 = vcmp.ne.s32.totalorder %v1081, 15
        %vm2204 = vcmp.ne.s32.totalorder %v1082, 15
        %v2205 = vrot.slane %v1022, 1
        %v2206 = vrot.slane %v1023, 1
        %v2207 = vrot.slane %v1024, 1
        %v2208 = vrot.slane %v1025, 1
        %v2209 = vrot.slane %v1026, 1
        %v2210 = vrot.slane %v1027, 1
        %v2211 = vrot.slane %v1028, 1
        %v2212 = vrot.slane %v1029, 1
        %vm2213 = vcmp.lt.s32.totalorder %v1031, 7
        %v2214 = vsel %vm2213, %v2209, %v2211
        %v2215 = vsel %vm2213, %v2210, %v2212
        %v2216 = vsel %vm2213, %v2207, %v2209
        %v2217 = vsel %vm2213, %v2208, %v2210
        %v2218 = vsel %vm2213, %v2205, %v2207
        %v2219 = vsel %vm2213, %v2206, %v2208
        %v2220 = vsel %vm2213, %v2211, %v2205
        %v2221 = vsel %vm2213, %v2212, %v2206
        %v2222 = vsel %vm2201, 1, 0
        %v2223 = vsel %vm2202, 1, 0
        %v2224 = vsel %vm2203, 1, 0
        %v2225 = vsel %vm2204, 1, 0
        %vm2226 = vcmp.eq.s32.totalorder %v2222, 1
        %vm2227 = vcmp.eq.s32.totalorder %v2223, 1
        %vm2228 = vcmp.eq.s32.totalorder %v2224, 1
        %vm2229 = vcmp.eq.s32.totalorder %v2225, 1
        %v2230 = vsel %vm2226, %v2218, 0.0
        %v2231 = vsel %vm2226, %v2219, 0.0
        %v2232 = vsel %vm2227, %v2216, 0.0
        %v2233 = vsel %vm2227, %v2217, 0.0
        %v2234 = vsel %vm2228, %v2214, 0.0
        %v2235 = vsel %vm2228, %v2215, 0.0
        %v2236 = vsel %vm2229, %v2220, 0.0
        %v2237 = vsel %vm2229, %v2221, 0.0
        %v2238 = vpack.c.bf16 %v2232, %v2230
        %v2239 = vpack.c.bf16 %v2233, %v2231
        %v2240 = vpack.c.bf16 %v2236, %v2234
        %v2241 = vpack.c.bf16 %v2237, %v2235
        %s2242 = scalar_lea.vmem [#allocation2], 1024
        %v2243 = vld [vmem:[%s2242] sm:$0xff]
        %v2244 = vld [vmem:[%s2242 + $0x8] sm:$0xff]
        %v2245 = vld [vmem:[%s2242 + $0x10] sm:$0xff]
        %v2246 = vld [vmem:[%s2242 + $0x18] sm:$0xff]
        %v2247 = vld [vmem:[%s2242 + $0x20] sm:$0xff]
        %v2248 = vld [vmem:[%s2242 + $0x28] sm:$0xff]
        %v2249 = vld [vmem:[%s2242 + $0x30] sm:$0xff]
        %v2250 = vld [vmem:[%s2242 + $0x38] sm:$0xff]
        %v2251 = vld [vmem:[%s2242 + $0x40] sm:$0xff]
        %v2252 = vld [vmem:[%s2242 + $0x48] sm:$0xff]
        %v2253 = vld [vmem:[%s2242 + $0x50] sm:$0xff]
        %v2254 = vld [vmem:[%s2242 + $0x58] sm:$0xff]
        %v2255 = vld [vmem:[%s2242 + $0x60] sm:$0xff]
        %v2256 = vld [vmem:[%s2242 + $0x68] sm:$0xff]
        %v2257 = vld [vmem:[%s2242 + $0x70] sm:$0xff]
        %v2258 = vld [vmem:[%s2242 + $0x78] sm:$0xff]
        %v2259 = vld [vmem:[%s2242 + $0x80] sm:$0xff]
        %v2260 = vld [vmem:[%s2242 + $0x88] sm:$0xff]
        %v2261 = vld [vmem:[%s2242 + $0x90] sm:$0xff]
        %v2262 = vld [vmem:[%s2242 + $0x98] sm:$0xff]
        %v2263 = vld [vmem:[%s2242 + $0xa0] sm:$0xff]
        %v2264 = vld [vmem:[%s2242 + $0xa8] sm:$0xff]
        %v2265 = vld [vmem:[%s2242 + $0xb0] sm:$0xff]
        %v2266 = vld [vmem:[%s2242 + $0xb8] sm:$0xff]
        %v2267 = vld [vmem:[%s2242 + $0xc0] sm:$0xff]
        %v2268 = vld [vmem:[%s2242 + $0xc8] sm:$0xff]
        %v2269 = vld [vmem:[%s2242 + $0xd0] sm:$0xff]
        %v2270 = vld [vmem:[%s2242 + $0xd8] sm:$0xff]
        %v2271 = vld [vmem:[%s2242 + $0xe0] sm:$0xff]
        %v2272 = vld [vmem:[%s2242 + $0xe8] sm:$0xff]
        %v2273 = vld [vmem:[%s2242 + $0xf0] sm:$0xff]
        %v2274 = vld [vmem:[%s2242 + $0xf8] sm:$0xff]
        %v2275 = vld [vmem:[%s2242 + $0x100] sm:$0xff]
        %v2276 = vld [vmem:[%s2242 + $0x108] sm:$0xff]
        %v2277 = vld [vmem:[%s2242 + $0x110] sm:$0xff]
        %v2278 = vld [vmem:[%s2242 + $0x118] sm:$0xff]
        %v2279 = vld [vmem:[%s2242 + $0x120] sm:$0xff]
        %v2280 = vld [vmem:[%s2242 + $0x128] sm:$0xff]
        %v2281 = vld [vmem:[%s2242 + $0x130] sm:$0xff]
        %v2282 = vld [vmem:[%s2242 + $0x138] sm:$0xff]
        %v2283 = vld [vmem:[%s2242 + $0x140] sm:$0xff]
        %v2284 = vld [vmem:[%s2242 + $0x148] sm:$0xff]
        %v2285 = vld [vmem:[%s2242 + $0x150] sm:$0xff]
        %v2286 = vld [vmem:[%s2242 + $0x158] sm:$0xff]
        %v2287 = vld [vmem:[%s2242 + $0x160] sm:$0xff]
        %v2288 = vld [vmem:[%s2242 + $0x168] sm:$0xff]
        %v2289 = vld [vmem:[%s2242 + $0x170] sm:$0xff]
        %v2290 = vld [vmem:[%s2242 + $0x178] sm:$0xff]
        %v2291 = vld [vmem:[%s2242 + $0x180] sm:$0xff]
        %v2292 = vld [vmem:[%s2242 + $0x188] sm:$0xff]
        %v2293 = vld [vmem:[%s2242 + $0x190] sm:$0xff]
        %v2294 = vld [vmem:[%s2242 + $0x198] sm:$0xff]
        %v2295 = vld [vmem:[%s2242 + $0x1a0] sm:$0xff]
        %v2296 = vld [vmem:[%s2242 + $0x1a8] sm:$0xff]
        %v2297 = vld [vmem:[%s2242 + $0x1b0] sm:$0xff]
        %v2298 = vld [vmem:[%s2242 + $0x1b8] sm:$0xff]
        %v2299 = vld [vmem:[%s2242 + $0x1c0] sm:$0xff]
        %v2300 = vld [vmem:[%s2242 + $0x1c8] sm:$0xff]
        %v2301 = vld [vmem:[%s2242 + $0x1d0] sm:$0xff]
        %v2302 = vld [vmem:[%s2242 + $0x1d8] sm:$0xff]
        %v2303 = vld [vmem:[%s2242 + $0x1e0] sm:$0xff]
        %v2304 = vld [vmem:[%s2242 + $0x1e8] sm:$0xff]
        %v2305 = vld [vmem:[%s2242 + $0x1f0] sm:$0xff]
        %v2306 = vld [vmem:[%s2242 + $0x1f8] sm:$0xff]
        %v2371 = vunpack.c.l.b16 %v2243
        %v2372 = vunpack.c.h.b16 %v2243
        %v2373 = vunpack.c.l.b16 %v2244
        %v2374 = vunpack.c.h.b16 %v2244
        %v2375 = vunpack.c.l.b16 %v2245
        %v2376 = vunpack.c.h.b16 %v2245
        %v2377 = vunpack.c.l.b16 %v2246
        %v2378 = vunpack.c.h.b16 %v2246
        %v2379 = vunpack.c.l.b16 %v2247
        %v2380 = vunpack.c.h.b16 %v2247
        %v2381 = vunpack.c.l.b16 %v2248
        %v2382 = vunpack.c.h.b16 %v2248
        %v2383 = vunpack.c.l.b16 %v2249
        %v2384 = vunpack.c.h.b16 %v2249
        %v2385 = vunpack.c.l.b16 %v2250
        %v2386 = vunpack.c.h.b16 %v2250
        %v2387 = vunpack.c.l.b16 %v2251
        %v2388 = vunpack.c.h.b16 %v2251
        %v2389 = vunpack.c.l.b16 %v2252
        %v2390 = vunpack.c.h.b16 %v2252
        %v2391 = vunpack.c.l.b16 %v2253
        %v2392 = vunpack.c.h.b16 %v2253
        %v2393 = vunpack.c.l.b16 %v2254
        %v2394 = vunpack.c.h.b16 %v2254
        %v2395 = vunpack.c.l.b16 %v2255
        %v2396 = vunpack.c.h.b16 %v2255
        %v2397 = vunpack.c.l.b16 %v2256
        %v2398 = vunpack.c.h.b16 %v2256
        %v2399 = vunpack.c.l.b16 %v2257
        %v2400 = vunpack.c.h.b16 %v2257
        %v2401 = vunpack.c.l.b16 %v2258
        %v2402 = vunpack.c.h.b16 %v2258
        %v2403 = vunpack.c.l.b16 %v2259
        %v2404 = vunpack.c.h.b16 %v2259
        %v2405 = vunpack.c.l.b16 %v2260
        %v2406 = vunpack.c.h.b16 %v2260
        %v2407 = vunpack.c.l.b16 %v2261
        %v2408 = vunpack.c.h.b16 %v2261
        %v2409 = vunpack.c.l.b16 %v2262
        %v2410 = vunpack.c.h.b16 %v2262
        %v2411 = vunpack.c.l.b16 %v2263
        %v2412 = vunpack.c.h.b16 %v2263
        %v2413 = vunpack.c.l.b16 %v2264
        %v2414 = vunpack.c.h.b16 %v2264
        %v2415 = vunpack.c.l.b16 %v2265
        %v2416 = vunpack.c.h.b16 %v2265
        %v2417 = vunpack.c.l.b16 %v2266
        %v2418 = vunpack.c.h.b16 %v2266
        %v2419 = vunpack.c.l.b16 %v2267
        %v2420 = vunpack.c.h.b16 %v2267
        %v2421 = vunpack.c.l.b16 %v2268
        %v2422 = vunpack.c.h.b16 %v2268
        %v2423 = vunpack.c.l.b16 %v2269
        %v2424 = vunpack.c.h.b16 %v2269
        %v2425 = vunpack.c.l.b16 %v2270
        %v2426 = vunpack.c.h.b16 %v2270
        %v2427 = vunpack.c.l.b16 %v2271
        %v2428 = vunpack.c.h.b16 %v2271
        %v2429 = vunpack.c.l.b16 %v2272
        %v2430 = vunpack.c.h.b16 %v2272
        %v2431 = vunpack.c.l.b16 %v2273
        %v2432 = vunpack.c.h.b16 %v2273
        %v2433 = vunpack.c.l.b16 %v2274
        %v2434 = vunpack.c.h.b16 %v2274
        %v2435 = vunpack.c.l.b16 %v2275
        %v2436 = vunpack.c.h.b16 %v2275
        %v2437 = vunpack.c.l.b16 %v2276
        %v2438 = vunpack.c.h.b16 %v2276
        %v2439 = vunpack.c.l.b16 %v2277
        %v2440 = vunpack.c.h.b16 %v2277
        %v2441 = vunpack.c.l.b16 %v2278
        %v2442 = vunpack.c.h.b16 %v2278
        %v2443 = vunpack.c.l.b16 %v2279
        %v2444 = vunpack.c.h.b16 %v2279
        %v2445 = vunpack.c.l.b16 %v2280
        %v2446 = vunpack.c.h.b16 %v2280
        %v2447 = vunpack.c.l.b16 %v2281
        %v2448 = vunpack.c.h.b16 %v2281
        %v2449 = vunpack.c.l.b16 %v2282
        %v2450 = vunpack.c.h.b16 %v2282
        %v2451 = vunpack.c.l.b16 %v2283
        %v2452 = vunpack.c.h.b16 %v2283
        %v2453 = vunpack.c.l.b16 %v2284
        %v2454 = vunpack.c.h.b16 %v2284
        %v2455 = vunpack.c.l.b16 %v2285
        %v2456 = vunpack.c.h.b16 %v2285
        %v2457 = vunpack.c.l.b16 %v2286
        %v2458 = vunpack.c.h.b16 %v2286
        %v2459 = vunpack.c.l.b16 %v2287
        %v2460 = vunpack.c.h.b16 %v2287
        %v2461 = vunpack.c.l.b16 %v2288
        %v2462 = vunpack.c.h.b16 %v2288
        %v2463 = vunpack.c.l.b16 %v2289
        %v2464 = vunpack.c.h.b16 %v2289
        %v2465 = vunpack.c.l.b16 %v2290
        %v2466 = vunpack.c.h.b16 %v2290
        %v2467 = vunpack.c.l.b16 %v2291
        %v2468 = vunpack.c.h.b16 %v2291
        %v2469 = vunpack.c.l.b16 %v2292
        %v2470 = vunpack.c.h.b16 %v2292
        %v2471 = vunpack.c.l.b16 %v2293
        %v2472 = vunpack.c.h.b16 %v2293
        %v2473 = vunpack.c.l.b16 %v2294
        %v2474 = vunpack.c.h.b16 %v2294
        %v2475 = vunpack.c.l.b16 %v2295
        %v2476 = vunpack.c.h.b16 %v2295
        %v2477 = vunpack.c.l.b16 %v2296
        %v2478 = vunpack.c.h.b16 %v2296
        %v2479 = vunpack.c.l.b16 %v2297
        %v2480 = vunpack.c.h.b16 %v2297
        %v2481 = vunpack.c.l.b16 %v2298
        %v2482 = vunpack.c.h.b16 %v2298
        %v2483 = vunpack.c.l.b16 %v2299
        %v2484 = vunpack.c.h.b16 %v2299
        %v2485 = vunpack.c.l.b16 %v2300
        %v2486 = vunpack.c.h.b16 %v2300
        %v2487 = vunpack.c.l.b16 %v2301
        %v2488 = vunpack.c.h.b16 %v2301
        %v2489 = vunpack.c.l.b16 %v2302
        %v2490 = vunpack.c.h.b16 %v2302
        %v2491 = vunpack.c.l.b16 %v2303
        %v2492 = vunpack.c.h.b16 %v2303
        %v2493 = vunpack.c.l.b16 %v2304
        %v2494 = vunpack.c.h.b16 %v2304
        %v2495 = vunpack.c.l.b16 %v2305
        %v2496 = vunpack.c.h.b16 %v2305
        %v2497 = vunpack.c.l.b16 %v2306
        %v2498 = vunpack.c.h.b16 %v2306
        %v2499 = vpack.c.b16 %v2375, %v2371
        %v2500 = vpack.c.b16 %v2376, %v2372
        %v2501 = vpack.c.b16 %v2377, %v2373
        %v2502 = vpack.c.b16 %v2378, %v2374
        %v2503 = vpack.c.b16 %v2383, %v2379
        %v2504 = vpack.c.b16 %v2384, %v2380
        %v2505 = vpack.c.b16 %v2385, %v2381
        %v2506 = vpack.c.b16 %v2386, %v2382
        %v2507 = vpack.c.b16 %v2391, %v2387
        %v2508 = vpack.c.b16 %v2392, %v2388
        %v2509 = vpack.c.b16 %v2393, %v2389
        %v2510 = vpack.c.b16 %v2394, %v2390
        %v2511 = vpack.c.b16 %v2399, %v2395
        %v2512 = vpack.c.b16 %v2400, %v2396
        %v2513 = vpack.c.b16 %v2401, %v2397
        %v2514 = vpack.c.b16 %v2402, %v2398
        %v2515 = vpack.c.b16 %v2407, %v2403
        %v2516 = vpack.c.b16 %v2408, %v2404
        %v2517 = vpack.c.b16 %v2409, %v2405
        %v2518 = vpack.c.b16 %v2410, %v2406
        %v2519 = vpack.c.b16 %v2415, %v2411
        %v2520 = vpack.c.b16 %v2416, %v2412
        %v2521 = vpack.c.b16 %v2417, %v2413
        %v2522 = vpack.c.b16 %v2418, %v2414
        %v2523 = vpack.c.b16 %v2423, %v2419
        %v2524 = vpack.c.b16 %v2424, %v2420
        %v2525 = vpack.c.b16 %v2425, %v2421
        %v2526 = vpack.c.b16 %v2426, %v2422
        %v2527 = vpack.c.b16 %v2431, %v2427
        %v2528 = vpack.c.b16 %v2432, %v2428
        %v2529 = vpack.c.b16 %v2433, %v2429
        %v2530 = vpack.c.b16 %v2434, %v2430
        %v2531 = vpack.c.b16 %v2439, %v2435
        %v2532 = vpack.c.b16 %v2440, %v2436
        %v2533 = vpack.c.b16 %v2441, %v2437
        %v2534 = vpack.c.b16 %v2442, %v2438
        %v2535 = vpack.c.b16 %v2447, %v2443
        %v2536 = vpack.c.b16 %v2448, %v2444
        %v2537 = vpack.c.b16 %v2449, %v2445
        %v2538 = vpack.c.b16 %v2450, %v2446
        %v2539 = vpack.c.b16 %v2455, %v2451
        %v2540 = vpack.c.b16 %v2456, %v2452
        %v2541 = vpack.c.b16 %v2457, %v2453
        %v2542 = vpack.c.b16 %v2458, %v2454
        %v2543 = vpack.c.b16 %v2463, %v2459
        %v2544 = vpack.c.b16 %v2464, %v2460
        %v2545 = vpack.c.b16 %v2465, %v2461
        %v2546 = vpack.c.b16 %v2466, %v2462
        %v2547 = vpack.c.b16 %v2471, %v2467
        %v2548 = vpack.c.b16 %v2472, %v2468
        %v2549 = vpack.c.b16 %v2473, %v2469
        %v2550 = vpack.c.b16 %v2474, %v2470
        %v2551 = vpack.c.b16 %v2479, %v2475
        %v2552 = vpack.c.b16 %v2480, %v2476
        %v2553 = vpack.c.b16 %v2481, %v2477
        %v2554 = vpack.c.b16 %v2482, %v2478
        %v2555 = vpack.c.b16 %v2487, %v2483
        %v2556 = vpack.c.b16 %v2488, %v2484
        %v2557 = vpack.c.b16 %v2489, %v2485
        %v2558 = vpack.c.b16 %v2490, %v2486
        %v2559 = vpack.c.b16 %v2495, %v2491
        %v2560 = vpack.c.b16 %v2496, %v2492
        %v2561 = vpack.c.b16 %v2497, %v2493
        %v2562 = vpack.c.b16 %v2498, %v2494
        %2627 = vmatpush.bf16.msra.mxu0 %v2527
        %2628 = vmatpush.bf16.msra.mxu0 %v2523
        %2629 = vmatpush.bf16.msra.mxu0 %v2519
        %2630 = vmatpush.bf16.msra.mxu0 %v2515
        %2631 = vmatpush.bf16.msra.mxu0 %v2511
        %2632 = vmatpush.bf16.msra.mxu0 %v2507
        %2633 = vmatpush.bf16.msra.mxu0 %v2503
        %2634 = vmatpush.bf16.msra.mxu0 %v2499
        %2635 = vmatmul.bf16.gmra.mxu0 %v2238
        %v2636 = vpop.f32.mrf.mxu0
        %v2637 = vadd.f32 0.0, %v2636
        %v2638 = vpop.f32.mrf.mxu0
        %v2639 = vadd.f32 0.0, %v2638
        %2640 = vmatmul.bf16.gmra.mxu0 %v2240
        %v2641 = vpop.f32.mrf.mxu0
        %v2642 = vadd.f32 0.0, %v2641
        %v2643 = vpop.f32.mrf.mxu0
        %v2644 = vadd.f32 0.0, %v2643
        %2645 = vdwg.mxu0
        %2646 = vmatpush.bf16.msra.mxu0 %v2559
        %2647 = vmatpush.bf16.msra.mxu0 %v2555
        %2648 = vmatpush.bf16.msra.mxu0 %v2551
        %2649 = vmatpush.bf16.msra.mxu0 %v2547
        %2650 = vmatpush.bf16.msra.mxu0 %v2543
        %2651 = vmatpush.bf16.msra.mxu0 %v2539
        %2652 = vmatpush.bf16.msra.mxu0 %v2535
        %2653 = vmatpush.bf16.msra.mxu0 %v2531
        %2654 = vmatmul.bf16.gmra.mxu0 %v2239
        %v2655 = vpop.f32.mrf.mxu0
        %v2656 = vadd.f32 %v2637, %v2655
        %v2657 = vpop.f32.mrf.mxu0
        %v2658 = vadd.f32 %v2639, %v2657
        %2659 = vmatmul.bf16.gmra.mxu0 %v2241
        %v2660 = vpop.f32.mrf.mxu0
        %v2661 = vadd.f32 %v2642, %v2660
        %v2662 = vpop.f32.mrf.mxu0
        %v2663 = vadd.f32 %v2644, %v2662
        %2664 = vdwg.mxu0
        %2665 = vmatpush.bf16.msra.mxu0 %v2528
        %2666 = vmatpush.bf16.msra.mxu0 %v2524
        %2667 = vmatpush.bf16.msra.mxu0 %v2520
        %2668 = vmatpush.bf16.msra.mxu0 %v2516
        %2669 = vmatpush.bf16.msra.mxu0 %v2512
        %2670 = vmatpush.bf16.msra.mxu0 %v2508
        %2671 = vmatpush.bf16.msra.mxu0 %v2504
        %2672 = vmatpush.bf16.msra.mxu0 %v2500
        %2673 = vmatmul.bf16.gmra.mxu0 %v2238
        %v2674 = vpop.f32.mrf.mxu0
        %v2675 = vadd.f32 0.0, %v2674
        %v2676 = vpop.f32.mrf.mxu0
        %v2677 = vadd.f32 0.0, %v2676
        %2678 = vmatmul.bf16.gmra.mxu0 %v2240
        %v2679 = vpop.f32.mrf.mxu0
        %v2680 = vadd.f32 0.0, %v2679
        %v2681 = vpop.f32.mrf.mxu0
        %v2682 = vadd.f32 0.0, %v2681
        %2683 = vdwg.mxu0
        %2684 = vmatpush.bf16.msra.mxu0 %v2560
        %2685 = vmatpush.bf16.msra.mxu0 %v2556
        %2686 = vmatpush.bf16.msra.mxu0 %v2552
        %2687 = vmatpush.bf16.msra.mxu0 %v2548
        %2688 = vmatpush.bf16.msra.mxu0 %v2544
        %2689 = vmatpush.bf16.msra.mxu0 %v2540
        %2690 = vmatpush.bf16.msra.mxu0 %v2536
        %2691 = vmatpush.bf16.msra.mxu0 %v2532
        %2692 = vmatmul.bf16.gmra.mxu0 %v2239
        %v2693 = vpop.f32.mrf.mxu0
        %v2694 = vadd.f32 %v2675, %v2693
        %v2695 = vpop.f32.mrf.mxu0
        %v2696 = vadd.f32 %v2677, %v2695
        %2697 = vmatmul.bf16.gmra.mxu0 %v2241
        %v2698 = vpop.f32.mrf.mxu0
        %v2699 = vadd.f32 %v2680, %v2698
        %v2700 = vpop.f32.mrf.mxu0
        %v2701 = vadd.f32 %v2682, %v2700
        %2702 = vdwg.mxu0
        %2703 = vmatpush.bf16.msra.mxu0 %v2529
        %2704 = vmatpush.bf16.msra.mxu0 %v2525
        %2705 = vmatpush.bf16.msra.mxu0 %v2521
        %2706 = vmatpush.bf16.msra.mxu0 %v2517
        %2707 = vmatpush.bf16.msra.mxu0 %v2513
        %2708 = vmatpush.bf16.msra.mxu0 %v2509
        %2709 = vmatpush.bf16.msra.mxu0 %v2505
        %2710 = vmatpush.bf16.msra.mxu0 %v2501
        %2711 = vmatmul.bf16.gmra.mxu0 %v2238
        %v2712 = vpop.f32.mrf.mxu0
        %v2713 = vadd.f32 0.0, %v2712
        %v2714 = vpop.f32.mrf.mxu0
        %v2715 = vadd.f32 0.0, %v2714
        %2716 = vmatmul.bf16.gmra.mxu0 %v2240
        %v2717 = vpop.f32.mrf.mxu0
        %v2718 = vadd.f32 0.0, %v2717
        %v2719 = vpop.f32.mrf.mxu0
        %v2720 = vadd.f32 0.0, %v2719
        %2721 = vdwg.mxu0
        %2722 = vmatpush.bf16.msra.mxu0 %v2561
        %2723 = vmatpush.bf16.msra.mxu0 %v2557
        %2724 = vmatpush.bf16.msra.mxu0 %v2553
        %2725 = vmatpush.bf16.msra.mxu0 %v2549
        %2726 = vmatpush.bf16.msra.mxu0 %v2545
        %2727 = vmatpush.bf16.msra.mxu0 %v2541
        %2728 = vmatpush.bf16.msra.mxu0 %v2537
        %2729 = vmatpush.bf16.msra.mxu0 %v2533
        %2730 = vmatmul.bf16.gmra.mxu0 %v2239
        %v2731 = vpop.f32.mrf.mxu0
        %v2732 = vadd.f32 %v2713, %v2731
        %v2733 = vpop.f32.mrf.mxu0
        %v2734 = vadd.f32 %v2715, %v2733
        %2735 = vmatmul.bf16.gmra.mxu0 %v2241
        %v2736 = vpop.f32.mrf.mxu0
        %v2737 = vadd.f32 %v2718, %v2736
        %v2738 = vpop.f32.mrf.mxu0
        %v2739 = vadd.f32 %v2720, %v2738
        %2740 = vdwg.mxu0
        %2741 = vmatpush.bf16.msra.mxu0 %v2530
        %2742 = vmatpush.bf16.msra.mxu0 %v2526
        %2743 = vmatpush.bf16.msra.mxu0 %v2522
        %2744 = vmatpush.bf16.msra.mxu0 %v2518
        %2745 = vmatpush.bf16.msra.mxu0 %v2514
        %2746 = vmatpush.bf16.msra.mxu0 %v2510
        %2747 = vmatpush.bf16.msra.mxu0 %v2506
        %2748 = vmatpush.bf16.msra.mxu0 %v2502
        %2749 = vmatmul.bf16.gmra.mxu0 %v2238
        %v2750 = vpop.f32.mrf.mxu0
        %v2751 = vadd.f32 0.0, %v2750
        %v2752 = vpop.f32.mrf.mxu0
        %v2753 = vadd.f32 0.0, %v2752
        %2754 = vmatmul.bf16.gmra.mxu0 %v2240
        %v2755 = vpop.f32.mrf.mxu0
        %v2756 = vadd.f32 0.0, %v2755
        %v2757 = vpop.f32.mrf.mxu0
        %v2758 = vadd.f32 0.0, %v2757
        %2759 = vdwg.mxu0
        %2760 = vmatpush.bf16.msra.mxu0 %v2562
        %2761 = vmatpush.bf16.msra.mxu0 %v2558
        %2762 = vmatpush.bf16.msra.mxu0 %v2554
        %2763 = vmatpush.bf16.msra.mxu0 %v2550
        %2764 = vmatpush.bf16.msra.mxu0 %v2546
        %2765 = vmatpush.bf16.msra.mxu0 %v2542
        %2766 = vmatpush.bf16.msra.mxu0 %v2538
        %2767 = vmatpush.bf16.msra.mxu0 %v2534
        %2768 = vmatmul.bf16.gmra.mxu0 %v2239
        %v2769 = vpop.f32.mrf.mxu0
        %v2770 = vadd.f32 %v2751, %v2769
        %v2771 = vpop.f32.mrf.mxu0
        %v2772 = vadd.f32 %v2753, %v2771
        %2773 = vmatmul.bf16.gmra.mxu0 %v2241
        %v2774 = vpop.f32.mrf.mxu0
        %v2775 = vadd.f32 %v2756, %v2774
        %v2776 = vpop.f32.mrf.mxu0
        %v2777 = vadd.f32 %v2758, %v2776
        %2778 = vdwg.mxu0
        %v2779 = vadd.f32 %v2078, %v2656
        %v2780 = vadd.f32 %v2116, %v2694
        %v2781 = vadd.f32 %v2154, %v2732
        %v2782 = vadd.f32 %v2192, %v2770
        %v2783 = vadd.f32 %v2080, %v2658
        %v2784 = vadd.f32 %v2118, %v2696
        %v2785 = vadd.f32 %v2156, %v2734
        %v2786 = vadd.f32 %v2194, %v2772
        %v2787 = vadd.f32 %v2083, %v2661
        %v2788 = vadd.f32 %v2121, %v2699
        %v2789 = vadd.f32 %v2159, %v2737
        %v2790 = vadd.f32 %v2197, %v2775
        %v2791 = vadd.f32 %v2085, %v2663
        %v2792 = vadd.f32 %v2123, %v2701
        %v2793 = vadd.f32 %v2161, %v2739
        %v2794 = vadd.f32 %v2199, %v2777
        %v2795 = vld [vmem:[%s4] sm:$0xf]
        %v2797 = vperm.slane %v2795, 0
        %v2798 = vperm.slane %v2795, 1
        %v2799 = vperm.slane %v2795, 2
        %v2800 = vperm.slane %v2795, 3
        %v2805 = vadd.f32 %v2779, %v2797
        %v2806 = vadd.f32 %v2780, %v2798
        %v2807 = vadd.f32 %v2781, %v2799
        %v2808 = vadd.f32 %v2782, %v2800
        %v2809 = vadd.f32 %v2783, %v2797
        %v2810 = vadd.f32 %v2784, %v2798
        %v2811 = vadd.f32 %v2785, %v2799
        %v2812 = vadd.f32 %v2786, %v2800
        %v2813 = vadd.f32 %v2787, %v2797
        %v2814 = vadd.f32 %v2788, %v2798
        %v2815 = vadd.f32 %v2789, %v2799
        %v2816 = vadd.f32 %v2790, %v2800
        %v2817 = vadd.f32 %v2791, %v2797
        %v2818 = vadd.f32 %v2792, %v2798
        %v2819 = vadd.f32 %v2793, %v2799
        %v2820 = vadd.f32 %v2794, %v2800
        %v2821 = vxor.u32 %v2805, 2147483648
        %v2822 = vxor.u32 %v2806, 2147483648
        %v2823 = vxor.u32 %v2807, 2147483648
        %v2824 = vxor.u32 %v2808, 2147483648
        %v2825 = vxor.u32 %v2809, 2147483648
        %v2826 = vxor.u32 %v2810, 2147483648
        %v2827 = vxor.u32 %v2811, 2147483648
        %v2828 = vxor.u32 %v2812, 2147483648
        %v2829 = vxor.u32 %v2813, 2147483648
        %v2830 = vxor.u32 %v2814, 2147483648
        %v2831 = vxor.u32 %v2815, 2147483648
        %v2832 = vxor.u32 %v2816, 2147483648
        %v2833 = vxor.u32 %v2817, 2147483648
        %v2834 = vxor.u32 %v2818, 2147483648
        %v2835 = vxor.u32 %v2819, 2147483648
        %v2836 = vxor.u32 %v2820, 2147483648
        %v2837 = vmul.f32 %v2821, 1.442695
        %v2838 = vpow.pop %v2837
        %v2839 = vmul.f32 %v2822, 1.442695
        %v2840 = vpow.pop %v2839
        %v2841 = vmul.f32 %v2823, 1.442695
        %v2842 = vpow.pop %v2841
        %v2843 = vmul.f32 %v2824, 1.442695
        %v2844 = vpow.pop %v2843
        %v2845 = vmul.f32 %v2825, 1.442695
        %v2846 = vpow.pop %v2845
        %v2847 = vmul.f32 %v2826, 1.442695
        %v2848 = vpow.pop %v2847
        %v2849 = vmul.f32 %v2827, 1.442695
        %v2850 = vpow.pop %v2849
        %v2851 = vmul.f32 %v2828, 1.442695
        %v2852 = vpow.pop %v2851
        %v2853 = vmul.f32 %v2829, 1.442695
        %v2854 = vpow.pop %v2853
        %v2855 = vmul.f32 %v2830, 1.442695
        %v2856 = vpow.pop %v2855
        %v2857 = vmul.f32 %v2831, 1.442695
        %v2858 = vpow.pop %v2857
        %v2859 = vmul.f32 %v2832, 1.442695
        %v2860 = vpow.pop %v2859
        %v2861 = vmul.f32 %v2833, 1.442695
        %v2862 = vpow.pop %v2861
        %v2863 = vmul.f32 %v2834, 1.442695
        %v2864 = vpow.pop %v2863
        %v2865 = vmul.f32 %v2835, 1.442695
        %v2866 = vpow.pop %v2865
        %v2867 = vmul.f32 %v2836, 1.442695
        %v2868 = vpow.pop %v2867
        %v2869 = vadd.f32 %v2838, 1.0
        %v2870 = vadd.f32 %v2840, 1.0
        %v2871 = vadd.f32 %v2842, 1.0
        %v2872 = vadd.f32 %v2844, 1.0
        %v2873 = vadd.f32 %v2846, 1.0
        %v2874 = vadd.f32 %v2848, 1.0
        %v2875 = vadd.f32 %v2850, 1.0
        %v2876 = vadd.f32 %v2852, 1.0
        %v2877 = vadd.f32 %v2854, 1.0
        %v2878 = vadd.f32 %v2856, 1.0
        %v2879 = vadd.f32 %v2858, 1.0
        %v2880 = vadd.f32 %v2860, 1.0
        %v2881 = vadd.f32 %v2862, 1.0
        %v2882 = vadd.f32 %v2864, 1.0
        %v2883 = vadd.f32 %v2866, 1.0
        %v2884 = vadd.f32 %v2868, 1.0
        %v2885 = vrcp.pop %v2869
        %v2886 = vmul.f32 %v2869, %v2885
        %v2887 = vsub.f32 1.0, %v2886
        %v2888 = vmul.f32 %v2885, %v2887
        %v2889 = vadd.f32 %v2885, %v2888
        %vm2890 = vweird.f32 %v2869
        %vm2891 = vweird.f32 %v2885
        %vm2892 = vmor %vm2890, %vm2891
        %v2893 = vsel %vm2892, %v2885, %v2889
        %v2894 = vand.u32 2147483647, %v2869
        %vm2895 = vcmp.eq.f32.partialorder %v2894, 8.507059e+37
        %v2896 = vand.u32 %v2869, 2147483648
        %v2897 = vor.u32 1.1754944e-38, %v2896
        %v2898 = vsel %vm2895, %v2897, %v2893
        %v2899 = vmul.f32 1.0, %v2898
        %v2900 = vrcp.pop %v2870
        %v2901 = vmul.f32 %v2870, %v2900
        %v2902 = vsub.f32 1.0, %v2901
        %v2903 = vmul.f32 %v2900, %v2902
        %v2904 = vadd.f32 %v2900, %v2903
        %vm2905 = vweird.f32 %v2870
        %vm2906 = vweird.f32 %v2900
        %vm2907 = vmor %vm2905, %vm2906
        %v2908 = vsel %vm2907, %v2900, %v2904
        %v2909 = vand.u32 2147483647, %v2870
        %vm2910 = vcmp.eq.f32.partialorder %v2909, 8.507059e+37
        %v2911 = vand.u32 %v2870, 2147483648
        %v2912 = vor.u32 1.1754944e-38, %v2911
        %v2913 = vsel %vm2910, %v2912, %v2908
        %v2914 = vmul.f32 1.0, %v2913
        %v2915 = vrcp.pop %v2871
        %v2916 = vmul.f32 %v2871, %v2915
        %v2917 = vsub.f32 1.0, %v2916
        %v2918 = vmul.f32 %v2915, %v2917
        %v2919 = vadd.f32 %v2915, %v2918
        %vm2920 = vweird.f32 %v2871
        %vm2921 = vweird.f32 %v2915
        %vm2922 = vmor %vm2920, %vm2921
        %v2923 = vsel %vm2922, %v2915, %v2919
        %v2924 = vand.u32 2147483647, %v2871
        %vm2925 = vcmp.eq.f32.partialorder %v2924, 8.507059e+37
        %v2926 = vand.u32 %v2871, 2147483648
        %v2927 = vor.u32 1.1754944e-38, %v2926
        %v2928 = vsel %vm2925, %v2927, %v2923
        %v2929 = vmul.f32 1.0, %v2928
        %v2930 = vrcp.pop %v2872
        %v2931 = vmul.f32 %v2872, %v2930
        %v2932 = vsub.f32 1.0, %v2931
        %v2933 = vmul.f32 %v2930, %v2932
        %v2934 = vadd.f32 %v2930, %v2933
        %vm2935 = vweird.f32 %v2872
        %vm2936 = vweird.f32 %v2930
        %vm2937 = vmor %vm2935, %vm2936
        %v2938 = vsel %vm2937, %v2930, %v2934
        %v2939 = vand.u32 2147483647, %v2872
        %vm2940 = vcmp.eq.f32.partialorder %v2939, 8.507059e+37
        %v2941 = vand.u32 %v2872, 2147483648
        %v2942 = vor.u32 1.1754944e-38, %v2941
        %v2943 = vsel %vm2940, %v2942, %v2938
        %v2944 = vmul.f32 1.0, %v2943
        %v2945 = vrcp.pop %v2873
        %v2946 = vmul.f32 %v2873, %v2945
        %v2947 = vsub.f32 1.0, %v2946
        %v2948 = vmul.f32 %v2945, %v2947
        %v2949 = vadd.f32 %v2945, %v2948
        %vm2950 = vweird.f32 %v2873
        %vm2951 = vweird.f32 %v2945
        %vm2952 = vmor %vm2950, %vm2951
        %v2953 = vsel %vm2952, %v2945, %v2949
        %v2954 = vand.u32 2147483647, %v2873
        %vm2955 = vcmp.eq.f32.partialorder %v2954, 8.507059e+37
        %v2956 = vand.u32 %v2873, 2147483648
        %v2957 = vor.u32 1.1754944e-38, %v2956
        %v2958 = vsel %vm2955, %v2957, %v2953
        %v2959 = vmul.f32 1.0, %v2958
        %v2960 = vrcp.pop %v2874
        %v2961 = vmul.f32 %v2874, %v2960
        %v2962 = vsub.f32 1.0, %v2961
        %v2963 = vmul.f32 %v2960, %v2962
        %v2964 = vadd.f32 %v2960, %v2963
        %vm2965 = vweird.f32 %v2874
        %vm2966 = vweird.f32 %v2960
        %vm2967 = vmor %vm2965, %vm2966
        %v2968 = vsel %vm2967, %v2960, %v2964
        %v2969 = vand.u32 2147483647, %v2874
        %vm2970 = vcmp.eq.f32.partialorder %v2969, 8.507059e+37
        %v2971 = vand.u32 %v2874, 2147483648
        %v2972 = vor.u32 1.1754944e-38, %v2971
        %v2973 = vsel %vm2970, %v2972, %v2968
        %v2974 = vmul.f32 1.0, %v2973
        %v2975 = vrcp.pop %v2875
        %v2976 = vmul.f32 %v2875, %v2975
        %v2977 = vsub.f32 1.0, %v2976
        %v2978 = vmul.f32 %v2975, %v2977
        %v2979 = vadd.f32 %v2975, %v2978
        %vm2980 = vweird.f32 %v2875
        %vm2981 = vweird.f32 %v2975
        %vm2982 = vmor %vm2980, %vm2981
        %v2983 = vsel %vm2982, %v2975, %v2979
        %v2984 = vand.u32 2147483647, %v2875
        %vm2985 = vcmp.eq.f32.partialorder %v2984, 8.507059e+37
        %v2986 = vand.u32 %v2875, 2147483648
        %v2987 = vor.u32 1.1754944e-38, %v2986
        %v2988 = vsel %vm2985, %v2987, %v2983
        %v2989 = vmul.f32 1.0, %v2988
        %v2990 = vrcp.pop %v2876
        %v2991 = vmul.f32 %v2876, %v2990
        %v2992 = vsub.f32 1.0, %v2991
        %v2993 = vmul.f32 %v2990, %v2992
        %v2994 = vadd.f32 %v2990, %v2993
        %vm2995 = vweird.f32 %v2876
        %vm2996 = vweird.f32 %v2990
        %vm2997 = vmor %vm2995, %vm2996
        %v2998 = vsel %vm2997, %v2990, %v2994
        %v2999 = vand.u32 2147483647, %v2876
        %vm3000 = vcmp.eq.f32.partialorder %v2999, 8.507059e+37
        %v3001 = vand.u32 %v2876, 2147483648
        %v3002 = vor.u32 1.1754944e-38, %v3001
        %v3003 = vsel %vm3000, %v3002, %v2998
        %v3004 = vmul.f32 1.0, %v3003
        %v3005 = vrcp.pop %v2877
        %v3006 = vmul.f32 %v2877, %v3005
        %v3007 = vsub.f32 1.0, %v3006
        %v3008 = vmul.f32 %v3005, %v3007
        %v3009 = vadd.f32 %v3005, %v3008
        %vm3010 = vweird.f32 %v2877
        %vm3011 = vweird.f32 %v3005
        %vm3012 = vmor %vm3010, %vm3011
        %v3013 = vsel %vm3012, %v3005, %v3009
        %v3014 = vand.u32 2147483647, %v2877
        %vm3015 = vcmp.eq.f32.partialorder %v3014, 8.507059e+37
        %v3016 = vand.u32 %v2877, 2147483648
        %v3017 = vor.u32 1.1754944e-38, %v3016
        %v3018 = vsel %vm3015, %v3017, %v3013
        %v3019 = vmul.f32 1.0, %v3018
        %v3020 = vrcp.pop %v2878
        %v3021 = vmul.f32 %v2878, %v3020
        %v3022 = vsub.f32 1.0, %v3021
        %v3023 = vmul.f32 %v3020, %v3022
        %v3024 = vadd.f32 %v3020, %v3023
        %vm3025 = vweird.f32 %v2878
        %vm3026 = vweird.f32 %v3020
        %vm3027 = vmor %vm3025, %vm3026
        %v3028 = vsel %vm3027, %v3020, %v3024
        %v3029 = vand.u32 2147483647, %v2878
        %vm3030 = vcmp.eq.f32.partialorder %v3029, 8.507059e+37
        %v3031 = vand.u32 %v2878, 2147483648
        %v3032 = vor.u32 1.1754944e-38, %v3031
        %v3033 = vsel %vm3030, %v3032, %v3028
        %v3034 = vmul.f32 1.0, %v3033
        %v3035 = vrcp.pop %v2879
        %v3036 = vmul.f32 %v2879, %v3035
        %v3037 = vsub.f32 1.0, %v3036
        %v3038 = vmul.f32 %v3035, %v3037
        %v3039 = vadd.f32 %v3035, %v3038
        %vm3040 = vweird.f32 %v2879
        %vm3041 = vweird.f32 %v3035
        %vm3042 = vmor %vm3040, %vm3041
        %v3043 = vsel %vm3042, %v3035, %v3039
        %v3044 = vand.u32 2147483647, %v2879
        %vm3045 = vcmp.eq.f32.partialorder %v3044, 8.507059e+37
        %v3046 = vand.u32 %v2879, 2147483648
        %v3047 = vor.u32 1.1754944e-38, %v3046
        %v3048 = vsel %vm3045, %v3047, %v3043
        %v3049 = vmul.f32 1.0, %v3048
        %v3050 = vrcp.pop %v2880
        %v3051 = vmul.f32 %v2880, %v3050
        %v3052 = vsub.f32 1.0, %v3051
        %v3053 = vmul.f32 %v3050, %v3052
        %v3054 = vadd.f32 %v3050, %v3053
        %vm3055 = vweird.f32 %v2880
        %vm3056 = vweird.f32 %v3050
        %vm3057 = vmor %vm3055, %vm3056
        %v3058 = vsel %vm3057, %v3050, %v3054
        %v3059 = vand.u32 2147483647, %v2880
        %vm3060 = vcmp.eq.f32.partialorder %v3059, 8.507059e+37
        %v3061 = vand.u32 %v2880, 2147483648
        %v3062 = vor.u32 1.1754944e-38, %v3061
        %v3063 = vsel %vm3060, %v3062, %v3058
        %v3064 = vmul.f32 1.0, %v3063
        %v3065 = vrcp.pop %v2881
        %v3066 = vmul.f32 %v2881, %v3065
        %v3067 = vsub.f32 1.0, %v3066
        %v3068 = vmul.f32 %v3065, %v3067
        %v3069 = vadd.f32 %v3065, %v3068
        %vm3070 = vweird.f32 %v2881
        %vm3071 = vweird.f32 %v3065
        %vm3072 = vmor %vm3070, %vm3071
        %v3073 = vsel %vm3072, %v3065, %v3069
        %v3074 = vand.u32 2147483647, %v2881
        %vm3075 = vcmp.eq.f32.partialorder %v3074, 8.507059e+37
        %v3076 = vand.u32 %v2881, 2147483648
        %v3077 = vor.u32 1.1754944e-38, %v3076
        %v3078 = vsel %vm3075, %v3077, %v3073
        %v3079 = vmul.f32 1.0, %v3078
        %v3080 = vrcp.pop %v2882
        %v3081 = vmul.f32 %v2882, %v3080
        %v3082 = vsub.f32 1.0, %v3081
        %v3083 = vmul.f32 %v3080, %v3082
        %v3084 = vadd.f32 %v3080, %v3083
        %vm3085 = vweird.f32 %v2882
        %vm3086 = vweird.f32 %v3080
        %vm3087 = vmor %vm3085, %vm3086
        %v3088 = vsel %vm3087, %v3080, %v3084
        %v3089 = vand.u32 2147483647, %v2882
        %vm3090 = vcmp.eq.f32.partialorder %v3089, 8.507059e+37
        %v3091 = vand.u32 %v2882, 2147483648
        %v3092 = vor.u32 1.1754944e-38, %v3091
        %v3093 = vsel %vm3090, %v3092, %v3088
        %v3094 = vmul.f32 1.0, %v3093
        %v3095 = vrcp.pop %v2883
        %v3096 = vmul.f32 %v2883, %v3095
        %v3097 = vsub.f32 1.0, %v3096
        %v3098 = vmul.f32 %v3095, %v3097
        %v3099 = vadd.f32 %v3095, %v3098
        %vm3100 = vweird.f32 %v2883
        %vm3101 = vweird.f32 %v3095
        %vm3102 = vmor %vm3100, %vm3101
        %v3103 = vsel %vm3102, %v3095, %v3099
        %v3104 = vand.u32 2147483647, %v2883
        %vm3105 = vcmp.eq.f32.partialorder %v3104, 8.507059e+37
        %v3106 = vand.u32 %v2883, 2147483648
        %v3107 = vor.u32 1.1754944e-38, %v3106
        %v3108 = vsel %vm3105, %v3107, %v3103
        %v3109 = vmul.f32 1.0, %v3108
        %v3110 = vrcp.pop %v2884
        %v3111 = vmul.f32 %v2884, %v3110
        %v3112 = vsub.f32 1.0, %v3111
        %v3113 = vmul.f32 %v3110, %v3112
        %v3114 = vadd.f32 %v3110, %v3113
        %vm3115 = vweird.f32 %v2884
        %vm3116 = vweird.f32 %v3110
        %vm3117 = vmor %vm3115, %vm3116
        %v3118 = vsel %vm3117, %v3110, %v3114
        %v3119 = vand.u32 2147483647, %v2884
        %vm3120 = vcmp.eq.f32.partialorder %v3119, 8.507059e+37
        %v3121 = vand.u32 %v2884, 2147483648
        %v3122 = vor.u32 1.1754944e-38, %v3121
        %v3123 = vsel %vm3120, %v3122, %v3118
        %v3124 = vmul.f32 1.0, %v3123
        %v3125 = vmul.f32 %v2805, %v2899
        %v3126 = vmul.f32 %v2806, %v2914
        %v3127 = vmul.f32 %v2807, %v2929
        %v3128 = vmul.f32 %v2808, %v2944
        %v3129 = vmul.f32 %v2809, %v2959
        %v3130 = vmul.f32 %v2810, %v2974
        %v3131 = vmul.f32 %v2811, %v2989
        %v3132 = vmul.f32 %v2812, %v3004
        %v3133 = vmul.f32 %v2813, %v3019
        %v3134 = vmul.f32 %v2814, %v3034
        %v3135 = vmul.f32 %v2815, %v3049
        %v3136 = vmul.f32 %v2816, %v3064
        %v3137 = vmul.f32 %v2817, %v3079
        %v3138 = vmul.f32 %v2818, %v3094
        %v3139 = vmul.f32 %v2819, %v3109
        %v3140 = vmul.f32 %v2820, %v3124
        %v3141 = vld [vmem:[%s5] sm:$0xff]
        %v3142 = vld [vmem:[%s6] sm:$0xff]
        %v3143 = vadd.f32 %v3125, %v3129
        %v3144 = vrot.slane %v3143, 4
        %v3145 = vadd.f32 %v3143, %v3144
        %v3146 = vrot.slane %v3145, 2
        %v3147 = vadd.f32 %v3145, %v3146
        %v3148 = vrot.slane %v3147, 1
        %v3149 = vadd.f32 %v3147, %v3148
        %v3150 = vadd.f32 %v3126, %v3130
        %v3151 = vrot.slane %v3150, 4
        %v3152 = vadd.f32 %v3150, %v3151
        %v3153 = vrot.slane %v3152, 2
        %v3154 = vadd.f32 %v3152, %v3153
        %v3155 = vrot.slane %v3154, 1
        %v3156 = vadd.f32 %v3154, %v3155
        %v3157 = vadd.f32 %v3127, %v3131
        %v3158 = vrot.slane %v3157, 4
        %v3159 = vadd.f32 %v3157, %v3158
        %v3160 = vrot.slane %v3159, 2
        %v3161 = vadd.f32 %v3159, %v3160
        %v3162 = vrot.slane %v3161, 1
        %v3163 = vadd.f32 %v3161, %v3162
        %v3164 = vadd.f32 %v3128, %v3132
        %v3165 = vrot.slane %v3164, 4
        %v3166 = vadd.f32 %v3164, %v3165
        %v3167 = vrot.slane %v3166, 2
        %v3168 = vadd.f32 %v3166, %v3167
        %v3169 = vrot.slane %v3168, 1
        %v3170 = vadd.f32 %v3168, %v3169
        %v3172 = vperm.slane %v3141, 0
        %v3173 = vperm.slane %v3141, 2
        %v3174 = vperm.slane %v3141, 4
        %v3175 = vperm.slane %v3141, 6
        %v3180 = vmul.f32 %v3149, %v3172
        %v3181 = vmul.f32 %v3156, %v3173
        %v3182 = vmul.f32 %v3163, %v3174
        %v3183 = vmul.f32 %v3170, %v3175
        %vm3184 = vcmask 1040384
        %v3185 = vsel %vm3184, %v3180, 0.0
        %v3186 = vsel %vm3184, %v3181, 0.0
        %v3187 = vadd.f32 %v3185, %v3186
        %v3188 = vsel %vm3184, %v3182, 0.0
        %v3189 = vadd.f32 %v3187, %v3188
        %v3190 = vsel %vm3184, %v3183, 0.0
        %v3191 = vadd.f32 %v3189, %v3190
        %3192 = vadd.xlane.f32.xlu0 %v3191
        %v3193 = vpop.xlane.xlu0 %3192
        %v3194 = vmax.f32 %v3193, 0.0
        %v3196 = vperm.slane %v3142, 0
        %v3197 = vperm.slane %v3142, 2
        %v3198 = vperm.slane %v3142, 4
        %v3199 = vperm.slane %v3142, 6
        %v3204 = vmul.f32 %v3194, %v3196
        %v3205 = vmul.f32 %v3194, %v3197
        %v3206 = vmul.f32 %v3194, %v3198
        %v3207 = vmul.f32 %v3194, %v3199
        %v3208 = vperm.slane %v3141, 1
        %v3209 = vperm.slane %v3141, 3
        %v3210 = vperm.slane %v3141, 5
        %v3211 = vperm.slane %v3141, 7
        %v3216 = vmul.f32 %v3149, %v3208
        %v3217 = vmul.f32 %v3156, %v3209
        %v3218 = vmul.f32 %v3163, %v3210
        %v3219 = vmul.f32 %v3170, %v3211
        %v3220 = vsel %vm3184, %v3216, 0.0
        %v3221 = vsel %vm3184, %v3217, 0.0
        %v3222 = vadd.f32 %v3220, %v3221
        %v3223 = vsel %vm3184, %v3218, 0.0
        %v3224 = vadd.f32 %v3222, %v3223
        %v3225 = vsel %vm3184, %v3219, 0.0
        %v3226 = vadd.f32 %v3224, %v3225
        %3227 = vadd.xlane.f32.xlu0 %v3226
        %v3228 = vpop.xlane.xlu0 %3227
        %v3229 = vmax.f32 %v3228, 0.0
        %v3230 = vperm.slane %v3142, 1
        %v3231 = vperm.slane %v3142, 3
        %v3232 = vperm.slane %v3142, 5
        %v3233 = vperm.slane %v3142, 7
        %v3238 = vmul.f32 %v3229, %v3230
        %v3239 = vmul.f32 %v3229, %v3231
        %v3240 = vmul.f32 %v3229, %v3232
        %v3241 = vmul.f32 %v3229, %v3233
        %v3242 = vadd.f32 %v3204, %v3238
        %v3243 = vadd.f32 %v3205, %v3239
        %v3244 = vadd.f32 %v3206, %v3240
        %v3245 = vadd.f32 %v3207, %v3241
        %v3246 = vxor.u32 %v3242, 2147483648
        %v3247 = vxor.u32 %v3243, 2147483648
        %v3248 = vxor.u32 %v3244, 2147483648
        %v3249 = vxor.u32 %v3245, 2147483648
        %v3250 = vmul.f32 %v3246, 1.442695
        %v3251 = vpow.pop %v3250
        %v3252 = vmul.f32 %v3247, 1.442695
        %v3253 = vpow.pop %v3252
        %v3254 = vmul.f32 %v3248, 1.442695
        %v3255 = vpow.pop %v3254
        %v3256 = vmul.f32 %v3249, 1.442695
        %v3257 = vpow.pop %v3256
        %v3258 = vadd.f32 %v3251, 1.0
        %v3259 = vadd.f32 %v3253, 1.0
        %v3260 = vadd.f32 %v3255, 1.0
        %v3261 = vadd.f32 %v3257, 1.0
        %v3262 = vrcp.pop %v3258
        %v3263 = vmul.f32 %v3258, %v3262
        %v3264 = vsub.f32 1.0, %v3263
        %v3265 = vmul.f32 %v3262, %v3264
        %v3266 = vadd.f32 %v3262, %v3265
        %vm3267 = vweird.f32 %v3258
        %vm3268 = vweird.f32 %v3262
        %vm3269 = vmor %vm3267, %vm3268
        %v3270 = vsel %vm3269, %v3262, %v3266
        %v3271 = vand.u32 2147483647, %v3258
        %vm3272 = vcmp.eq.f32.partialorder %v3271, 8.507059e+37
        %v3273 = vand.u32 %v3258, 2147483648
        %v3274 = vor.u32 1.1754944e-38, %v3273
        %v3275 = vsel %vm3272, %v3274, %v3270
        %v3276 = vmul.f32 1.0, %v3275
        %v3277 = vrcp.pop %v3259
        %v3278 = vmul.f32 %v3259, %v3277
        %v3279 = vsub.f32 1.0, %v3278
        %v3280 = vmul.f32 %v3277, %v3279
        %v3281 = vadd.f32 %v3277, %v3280
        %vm3282 = vweird.f32 %v3259
        %vm3283 = vweird.f32 %v3277
        %vm3284 = vmor %vm3282, %vm3283
        %v3285 = vsel %vm3284, %v3277, %v3281
        %v3286 = vand.u32 2147483647, %v3259
        %vm3287 = vcmp.eq.f32.partialorder %v3286, 8.507059e+37
        %v3288 = vand.u32 %v3259, 2147483648
        %v3289 = vor.u32 1.1754944e-38, %v3288
        %v3290 = vsel %vm3287, %v3289, %v3285
        %v3291 = vmul.f32 1.0, %v3290
        %v3292 = vrcp.pop %v3260
        %v3293 = vmul.f32 %v3260, %v3292
        %v3294 = vsub.f32 1.0, %v3293
        %v3295 = vmul.f32 %v3292, %v3294
        %v3296 = vadd.f32 %v3292, %v3295
        %vm3297 = vweird.f32 %v3260
        %vm3298 = vweird.f32 %v3292
        %vm3299 = vmor %vm3297, %vm3298
        %v3300 = vsel %vm3299, %v3292, %v3296
        %v3301 = vand.u32 2147483647, %v3260
        %vm3302 = vcmp.eq.f32.partialorder %v3301, 8.507059e+37
        %v3303 = vand.u32 %v3260, 2147483648
        %v3304 = vor.u32 1.1754944e-38, %v3303
        %v3305 = vsel %vm3302, %v3304, %v3300
        %v3306 = vmul.f32 1.0, %v3305
        %v3307 = vrcp.pop %v3261
        %v3308 = vmul.f32 %v3261, %v3307
        %v3309 = vsub.f32 1.0, %v3308
        %v3310 = vmul.f32 %v3307, %v3309
        %v3311 = vadd.f32 %v3307, %v3310
        %vm3312 = vweird.f32 %v3261
        %vm3313 = vweird.f32 %v3307
        %vm3314 = vmor %vm3312, %vm3313
        %v3315 = vsel %vm3314, %v3307, %v3311
        %v3316 = vand.u32 2147483647, %v3261
        %vm3317 = vcmp.eq.f32.partialorder %v3316, 8.507059e+37
        %v3318 = vand.u32 %v3261, 2147483648
        %v3319 = vor.u32 1.1754944e-38, %v3318
        %v3320 = vsel %vm3317, %v3319, %v3315
        %v3321 = vmul.f32 1.0, %v3320
        %v3322 = vperm.slane %v3276, 0
        %v3323 = vperm.slane %v3291, 0
        %v3324 = vperm.slane %v3306, 0
        %v3325 = vperm.slane %v3321, 0
        %v3326 = vmul.f32 %v3125, %v3322
        %v3327 = vmul.f32 %v3126, %v3323
        %v3328 = vmul.f32 %v3127, %v3324
        %v3329 = vmul.f32 %v3128, %v3325
        %v3330 = vmul.f32 %v3129, %v3322
        %v3331 = vmul.f32 %v3130, %v3323
        %v3332 = vmul.f32 %v3131, %v3324
        %v3333 = vmul.f32 %v3132, %v3325
        %v3334 = vadd.f32 %v3326, %v304
        %v3335 = vadd.f32 %v3327, %v305
        %v3336 = vadd.f32 %v3328, %v306
        %v3337 = vadd.f32 %v3329, %v307
        %v3338 = vadd.f32 %v3330, %v308
        %v3339 = vadd.f32 %v3331, %v309
        %v3340 = vadd.f32 %v3332, %v310
        %v3341 = vadd.f32 %v3333, %v311
        %3342 = vst [vmem:[%s302] sm:$0xff] %v3334
        %3343 = vst [vmem:[%s302 + $0x8] sm:$0xff] %v3335
        %3344 = vst [vmem:[%s302 + $0x10] sm:$0xff] %v3336
        %3345 = vst [vmem:[%s302 + $0x18] sm:$0xff] %v3337
        %3346 = vst [vmem:[%s302 + $0x20] sm:$0xff] %v3338
        %3347 = vst [vmem:[%s302 + $0x28] sm:$0xff] %v3339
        %3348 = vst [vmem:[%s302 + $0x30] sm:$0xff] %v3340
        %3349 = vst [vmem:[%s302 + $0x38] sm:$0xff] %v3341
        %v3350 = vadd.f32 %v3133, %v3137
        %v3351 = vrot.slane %v3350, 4
        %v3352 = vadd.f32 %v3350, %v3351
        %v3353 = vrot.slane %v3352, 2
        %v3354 = vadd.f32 %v3352, %v3353
        %v3355 = vrot.slane %v3354, 1
        %v3356 = vadd.f32 %v3354, %v3355
        %v3357 = vadd.f32 %v3134, %v3138
        %v3358 = vrot.slane %v3357, 4
        %v3359 = vadd.f32 %v3357, %v3358
        %v3360 = vrot.slane %v3359, 2
        %v3361 = vadd.f32 %v3359, %v3360
        %v3362 = vrot.slane %v3361, 1
        %v3363 = vadd.f32 %v3361, %v3362
        %v3364 = vadd.f32 %v3135, %v3139
        %v3365 = vrot.slane %v3364, 4
        %v3366 = vadd.f32 %v3364, %v3365
        %v3367 = vrot.slane %v3366, 2
        %v3368 = vadd.f32 %v3366, %v3367
        %v3369 = vrot.slane %v3368, 1
        %v3370 = vadd.f32 %v3368, %v3369
        %v3371 = vadd.f32 %v3136, %v3140
        %v3372 = vrot.slane %v3371, 4
        %v3373 = vadd.f32 %v3371, %v3372
        %v3374 = vrot.slane %v3373, 2
        %v3375 = vadd.f32 %v3373, %v3374
        %v3376 = vrot.slane %v3375, 1
        %v3377 = vadd.f32 %v3375, %v3376
        %v3378 = vmul.f32 %v3356, %v3172
        %v3379 = vmul.f32 %v3363, %v3173
        %v3380 = vmul.f32 %v3370, %v3174
        %v3381 = vmul.f32 %v3377, %v3175
        %v3382 = vsel %vm3184, %v3378, 0.0
        %v3383 = vsel %vm3184, %v3379, 0.0
        %v3384 = vadd.f32 %v3382, %v3383
        %v3385 = vsel %vm3184, %v3380, 0.0
        %v3386 = vadd.f32 %v3384, %v3385
        %v3387 = vsel %vm3184, %v3381, 0.0
        %v3388 = vadd.f32 %v3386, %v3387
        %3389 = vadd.xlane.f32.xlu0 %v3388
        %v3390 = vpop.xlane.xlu0 %3389
        %v3391 = vmax.f32 %v3390, 0.0
        %v3392 = vmul.f32 %v3391, %v3196
        %v3393 = vmul.f32 %v3391, %v3197
        %v3394 = vmul.f32 %v3391, %v3198
        %v3395 = vmul.f32 %v3391, %v3199
        %v3396 = vmul.f32 %v3356, %v3208
        %v3397 = vmul.f32 %v3363, %v3209
        %v3398 = vmul.f32 %v3370, %v3210
        %v3399 = vmul.f32 %v3377, %v3211
        %v3400 = vsel %vm3184, %v3396, 0.0
        %v3401 = vsel %vm3184, %v3397, 0.0
        %v3402 = vadd.f32 %v3400, %v3401
        %v3403 = vsel %vm3184, %v3398, 0.0
        %v3404 = vadd.f32 %v3402, %v3403
        %v3405 = vsel %vm3184, %v3399, 0.0
        %v3406 = vadd.f32 %v3404, %v3405
        %3407 = vadd.xlane.f32.xlu0 %v3406
        %v3408 = vpop.xlane.xlu0 %3407
        %v3409 = vmax.f32 %v3408, 0.0
        %v3410 = vmul.f32 %v3409, %v3230
        %v3411 = vmul.f32 %v3409, %v3231
        %v3412 = vmul.f32 %v3409, %v3232
        %v3413 = vmul.f32 %v3409, %v3233
        %v3414 = vadd.f32 %v3392, %v3410
        %v3415 = vadd.f32 %v3393, %v3411
        %v3416 = vadd.f32 %v3394, %v3412
        %v3417 = vadd.f32 %v3395, %v3413
        %v3418 = vxor.u32 %v3414, 2147483648
        %v3419 = vxor.u32 %v3415, 2147483648
        %v3420 = vxor.u32 %v3416, 2147483648
        %v3421 = vxor.u32 %v3417, 2147483648
        %v3422 = vmul.f32 %v3418, 1.442695
        %v3423 = vpow.pop %v3422
        %v3424 = vmul.f32 %v3419, 1.442695
        %v3425 = vpow.pop %v3424
        %v3426 = vmul.f32 %v3420, 1.442695
        %v3427 = vpow.pop %v3426
        %v3428 = vmul.f32 %v3421, 1.442695
        %v3429 = vpow.pop %v3428
        %v3430 = vadd.f32 %v3423, 1.0
        %v3431 = vadd.f32 %v3425, 1.0
        %v3432 = vadd.f32 %v3427, 1.0
        %v3433 = vadd.f32 %v3429, 1.0
        %v3434 = vrcp.pop %v3430
        %v3435 = vmul.f32 %v3430, %v3434
        %v3436 = vsub.f32 1.0, %v3435
        %v3437 = vmul.f32 %v3434, %v3436
        %v3438 = vadd.f32 %v3434, %v3437
        %vm3439 = vweird.f32 %v3430
        %vm3440 = vweird.f32 %v3434
        %vm3441 = vmor %vm3439, %vm3440
        %v3442 = vsel %vm3441, %v3434, %v3438
        %v3443 = vand.u32 2147483647, %v3430
        %vm3444 = vcmp.eq.f32.partialorder %v3443, 8.507059e+37
        %v3445 = vand.u32 %v3430, 2147483648
        %v3446 = vor.u32 1.1754944e-38, %v3445
        %v3447 = vsel %vm3444, %v3446, %v3442
        %v3448 = vmul.f32 1.0, %v3447
        %v3449 = vrcp.pop %v3431
        %v3450 = vmul.f32 %v3431, %v3449
        %v3451 = vsub.f32 1.0, %v3450
        %v3452 = vmul.f32 %v3449, %v3451
        %v3453 = vadd.f32 %v3449, %v3452
        %vm3454 = vweird.f32 %v3431
        %vm3455 = vweird.f32 %v3449
        %vm3456 = vmor %vm3454, %vm3455
        %v3457 = vsel %vm3456, %v3449, %v3453
        %v3458 = vand.u32 2147483647, %v3431
        %vm3459 = vcmp.eq.f32.partialorder %v3458, 8.507059e+37
        %v3460 = vand.u32 %v3431, 2147483648
        %v3461 = vor.u32 1.1754944e-38, %v3460
        %v3462 = vsel %vm3459, %v3461, %v3457
        %v3463 = vmul.f32 1.0, %v3462
        %v3464 = vrcp.pop %v3432
        %v3465 = vmul.f32 %v3432, %v3464
        %v3466 = vsub.f32 1.0, %v3465
        %v3467 = vmul.f32 %v3464, %v3466
        %v3468 = vadd.f32 %v3464, %v3467
        %vm3469 = vweird.f32 %v3432
        %vm3470 = vweird.f32 %v3464
        %vm3471 = vmor %vm3469, %vm3470
        %v3472 = vsel %vm3471, %v3464, %v3468
        %v3473 = vand.u32 2147483647, %v3432
        %vm3474 = vcmp.eq.f32.partialorder %v3473, 8.507059e+37
        %v3475 = vand.u32 %v3432, 2147483648
        %v3476 = vor.u32 1.1754944e-38, %v3475
        %v3477 = vsel %vm3474, %v3476, %v3472
        %v3478 = vmul.f32 1.0, %v3477
        %v3479 = vrcp.pop %v3433
        %v3480 = vmul.f32 %v3433, %v3479
        %v3481 = vsub.f32 1.0, %v3480
        %v3482 = vmul.f32 %v3479, %v3481
        %v3483 = vadd.f32 %v3479, %v3482
        %vm3484 = vweird.f32 %v3433
        %vm3485 = vweird.f32 %v3479
        %vm3486 = vmor %vm3484, %vm3485
        %v3487 = vsel %vm3486, %v3479, %v3483
        %v3488 = vand.u32 2147483647, %v3433
        %vm3489 = vcmp.eq.f32.partialorder %v3488, 8.507059e+37
        %v3490 = vand.u32 %v3433, 2147483648
        %v3491 = vor.u32 1.1754944e-38, %v3490
        %v3492 = vsel %vm3489, %v3491, %v3487
        %v3493 = vmul.f32 1.0, %v3492
        %v3494 = vperm.slane %v3448, 0
        %v3495 = vperm.slane %v3463, 0
        %v3496 = vperm.slane %v3478, 0
        %v3497 = vperm.slane %v3493, 0
        %v3498 = vmul.f32 %v3133, %v3494
        %v3499 = vmul.f32 %v3134, %v3495
        %v3500 = vmul.f32 %v3135, %v3496
        %v3501 = vmul.f32 %v3136, %v3497
        %v3502 = vmul.f32 %v3137, %v3494
        %v3503 = vmul.f32 %v3138, %v3495
        %v3504 = vmul.f32 %v3139, %v3496
        %v3505 = vmul.f32 %v3140, %v3497
        %v3506 = vadd.f32 %v3498, %v312
        %v3507 = vadd.f32 %v3499, %v313
        %v3508 = vadd.f32 %v3500, %v314
        %v3509 = vadd.f32 %v3501, %v315
        %v3510 = vadd.f32 %v3502, %v316
        %v3511 = vadd.f32 %v3503, %v317
        %v3512 = vadd.f32 %v3504, %v318
        %v3513 = vadd.f32 %v3505, %v319
        %3514 = vst [vmem:[%s302 + $0x40] sm:$0xff] %v3506
        %3515 = vst [vmem:[%s302 + $0x48] sm:$0xff] %v3507
        %3516 = vst [vmem:[%s302 + $0x50] sm:$0xff] %v3508
        %3517 = vst [vmem:[%s302 + $0x58] sm:$0xff] %v3509
        %3518 = vst [vmem:[%s302 + $0x60] sm:$0xff] %v3510
        %3519 = vst [vmem:[%s302 + $0x68] sm:$0xff] %v3511
        %3520 = vst [vmem:[%s302 + $0x70] sm:$0xff] %v3512
        %3521 = vst [vmem:[%s302 + $0x78] sm:$0xff] %v3513
        %s3522 = smul.u32 4, %s19
        %p3523 = scmp.lt.s32.totalorder %s3522, 7
        %s3524 = scalar_select %p3523, %s3522, 7
        %s3525 = smul.addr %s3524, 4
        %s3526 = smul.addr %s3525, 8
        %s3527 = scalar_lea.vmem %s7, %s3526
        // Predicated region
        $region53: #{se_bottleneck_forward.1} parent=47 // pred_check
          %p3528 = pneg %p189
        $region54: #{se_bottleneck_forward.1} parent=47 // pred_check_branch
          %3530 = sbr.rel (%p3528) target = $region56
        $region55: #{se_bottleneck_forward.1} parent=47 // pred_region
          %s3531 = smul.u32 4, %s19
        $region56: #{se_bottleneck_forward.1} parent=47 // pred_fallthru
          _
      $region48: #{se_bottleneck_forward.1} parent=5 // pred_fallthru
        _
      %p3532 = scmp.le.s32.totalorder 2, %s14
      // Predicated region
      $region57: #{se_bottleneck_forward.1} parent=5 // pred_check
        %p3533 = pneg %p3532
      $region58: #{se_bottleneck_forward.1} parent=5 // pred_check_branch
        %3535 = sbr.rel (%p3533) target = $region60
      $region59: #{se_bottleneck_forward.1} parent=5 // pred_region
        %s3536 = ssub.s32 %s14, 2
        // Predicated region
        $region61: #{se_bottleneck_forward.1} parent=59 // pred_check
          %p3537 = pneg %p195
        $region62: #{se_bottleneck_forward.1} parent=59 // pred_check_branch
          %3539 = sbr.rel (%p3537) target = $region64
        $region63: #{se_bottleneck_forward.1} parent=59 // pred_region
          %s3540 = smul.u32 4, %s20
          %p3541 = scmp.lt.s32.totalorder %s3540, 7
          %s3542 = scalar_select %p3541, %s3540, 7
          %s3543 = smul.addr %s3542, 4
          %s3544 = smul.addr %s3543, 8
          %s3545 = scalar_lea.vmem %s7, %s3544
        $region64: #{se_bottleneck_forward.1} parent=59 // pred_fallthru
          _
      $region60: #{se_bottleneck_forward.1} parent=5 // pred_fallthru
        _
    $region6: #{se_bottleneck_forward.1} parent=1 // loop_footer
      %s18 = sadd.s32 1, %s14
    $region7: #{se_bottleneck_forward.1} parent=1 // loop_footer_branch
      %13 = sbr.rel target = $region3
    $region8: #{se_bottleneck_forward.1} parent=1 // loop_exit
      _
    %3546 = vsyncpa [#allocation3], 1
    %s3547 = scalar_lea.sflag [#allocation3], 1
    %3548 = vsyncpa %s3547, 1

</llo_original>
